<compile_context>
chip_gen: v5e
topology: v5e:2x2
jax: 0.10.0
libtpu: 0.0.40
codegen_flags: <defaults>
</compile_context>

<pallas_src>
import math
import functools

import jax
import jax.numpy as jnp
from jax import lax
from jax.experimental import pallas as pl
from jax.experimental.pallas import tpu as pltpu


# Set to jnp.bfloat16 on v6e/v7x for ~2x MXU throughput and half the per-tile
# VMEM/DMA bytes (accumulation stays fp32).  Kept fp32 by default to match the
# PyTorch reference numerics exactly.
MXU_INPUT_DTYPE = jnp.float32

NORM_EPS = 1e-6
NEG_INF_FILL = -1e9


# ----------------------------------------------------------------------------
# Small helpers (used inside kernels)
# ----------------------------------------------------------------------------

def _mxu(x):
    return x.astype(MXU_INPUT_DTYPE)


def _mm(a, b):
    """(m, k) @ (k, n) on the MXU with fp32 accumulation."""
    return jnp.dot(_mxu(a), _mxu(b), preferred_element_type=jnp.float32)


def _mm_nt(a, b):
    """(m, d) x (n, d) -> (m, n): contract last dims (no explicit transpose)."""
    return lax.dot_general(_mxu(a), _mxu(b),
                           dimension_numbers=(((1,), (1,)), ((), ())),
                           preferred_element_type=jnp.float32)


def _norm_inline(x, alpha, beta, eps):
    """torch Norm: alpha * (x - mean) / (unbiased_std + eps) + beta."""
    d = x.shape[-1]
    mean = jnp.mean(x, axis=-1, keepdims=True)
    c = x - mean
    var = jnp.sum(c * c, axis=-1, keepdims=True) / (d - 1)   # torch.std (unbiased)
    std = jnp.sqrt(var)
    return alpha * (c / (std + eps)) + beta


def _pick_tile(dim, target, align):
    """Largest tile <= target that divides dim and is `align`-aligned, else full."""
    if dim <= target:
        return dim
    for t in range(min(target, dim), 0, -1):
        if dim % t == 0 and t % align == 0:
            return t
    return dim


def _cparams(dims):
    return pltpu.CompilerParams(dimension_semantics=dims,
                                vmem_limit_bytes=32 * 1024 * 1024)


# ----------------------------------------------------------------------------
# Pallas kernels
# ----------------------------------------------------------------------------

def _embed_pe_kernel(x_ref, w_ref, b_ref, pe_ref, o_ref, *, scale):
    # Linear0 + (x * sqrt(d_model) + positional encoding) fused epilogue.
    y = _mm(x_ref[...], w_ref[...]) + b_ref[...]
    o_ref[...] = (y * scale + pe_ref[...]).astype(o_ref.dtype)


def _qkv_kernel(x_ref, a_ref, be_ref, w_ref, b_ref, q_ref, k_ref, v_ref,
                *, heads, dk, eps):
    # Fused: norm_1 -> one (ts, 3D) QKV matmul -> per-head split (epilogue writes
    # directly into the (B, H, S, dk) layout used by the attention kernel).
    x2 = _norm_inline(x_ref[...], a_ref[...], be_ref[...], eps)
    y = _mm(x2, w_ref[...]) + b_ref[...]                       # (ts, 3D)
    d_model = heads * dk
    for h in range(heads):                                     # static unrolled loop
        q_ref[h, :, :] = y[:, h * dk:(h + 1) * dk].astype(q_ref.dtype)
        k_ref[h, :, :] = y[:, d_model + h * dk:d_model + (h + 1) * dk].astype(k_ref.dtype)
        v_ref[h, :, :] = y[:, 2 * d_model + h * dk:2 * d_model + (h + 1) * dk].astype(v_ref.dtype)


def _flash_attn_kernel(q_ref, k_ref, v_ref, mask_ref, o_ref, m_sc, l_sc, acc_sc,
                       *, scale):
    # Online-softmax attention over K/V tiles (never materializes (S, S) scores).
    kv = pl.program_id(3)

    @pl.when(kv == 0)
    def _():
        m_sc[...] = jnp.full_like(m_sc, -jnp.inf)
        l_sc[...] = jnp.zeros_like(l_sc)
        acc_sc[...] = jnp.zeros_like(acc_sc)

    s = _mm_nt(q_ref[...], k_ref[...]) * scale                 # (tq, tk)
    s = jnp.where(mask_ref[...] == 0, NEG_INF_FILL, s)         # key padding mask (int)
    m_prev = m_sc[...]
    m_new = jnp.maximum(m_prev, jnp.max(s, axis=-1, keepdims=True))
    corr = jnp.exp(m_prev - m_new)
    p = jnp.exp(s - m_new)
    l_sc[...] = corr * l_sc[...] + jnp.sum(p, axis=-1, keepdims=True)
    acc_sc[...] = corr * acc_sc[...] + _mm(p, v_ref[...])
    m_sc[...] = m_new

    @pl.when(kv == pl.num_programs(3) - 1)
    def _():
        o_ref[...] = (acc_sc[...] *
                      pl.reciprocal(l_sc[...], approx=True)).astype(o_ref.dtype)


def _attn_out_kernel(a_ref, x_ref, w_ref, b_ref, o_ref, *, heads):
    # Fused: head merge -> Wo matmul -> +bias -> +residual.
    concat = jnp.concatenate([a_ref[h] for h in range(heads)], axis=-1)  # (ts, D)
    y = _mm(concat, w_ref[...]) + b_ref[...]
    o_ref[...] = (x_ref[...] + y).astype(o_ref.dtype)


def _ffn_in_kernel(x_ref, a_ref, be_ref, w_ref, b_ref, o_ref, *, eps):
    # Fused: norm_2 -> W1 (N-tiled over d_ff) -> +bias -> ReLU.
    # (norm is recomputed per N-tile; cheap VPU work vs. the matmul)
    x2 = _norm_inline(x_ref[...], a_ref[...], be_ref[...], eps)
    y = _mm(x2, w_ref[...]) + b_ref[...]
    o_ref[...] = jnp.maximum(y, 0.0).astype(o_ref.dtype)


def _ffn_out_kernel(h_ref, w_ref, b_ref, res_ref, o_ref, acc_ref):
    # W2 with the d_ff contraction tiled on the innermost ("arbitrary") grid axis;
    # fp32 VMEM accumulator initialized with residual + bias (pl.when init/finalize).
    kt = pl.program_id(2)

    @pl.when(kt == 0)
    def _():
        acc_ref[...] = res_ref[...].astype(jnp.float32) + b_ref[...]

    acc_ref[...] += _mm(h_ref[...], w_ref[...])

    @pl.when(kt == pl.num_programs(2) - 1)
    def _():
        o_ref[...] = acc_ref[...].astype(o_ref.dtype)


def _norm_heads_kernel(x_ref, a_ref, be_ref, w_ref, b_ref, o_ref, *, eps):
    # Fused: final norm -> combined (D, 2) head matmul  (col 0 = cs, col 1 = log_sigma).
    x2 = _norm_inline(x_ref[...], a_ref[...], be_ref[...], eps)
    o_ref[...] = (_mm(x2, w_ref[...]) + b_ref[...]).astype(o_ref.dtype)


# ----------------------------------------------------------------------------
# pallas_call wrappers
# ----------------------------------------------------------------------------

def embed_pe(word_vec, w0, b0, pe, *, ts):
    B, S, V = word_vec.shape
    D = w0.shape[1]
    kernel = functools.partial(_embed_pe_kernel, scale=math.sqrt(D))
    return pl.pallas_call(
        kernel,
        out_shape=jax.ShapeDtypeStruct((B, S, D), jnp.float32),
        grid=(B, S // ts),
        in_specs=[
            pl.BlockSpec((pl.Squeezed(), ts, V), lambda b, s: (b, s, 0)),
            pl.BlockSpec((V, D), lambda b, s: (0, 0)),
            pl.BlockSpec((1, D), lambda b, s: (0, 0)),
            pl.BlockSpec((ts, D), lambda b, s: (s, 0)),       # PE broadcast over batch
        ],
        out_specs=pl.BlockSpec((pl.Squeezed(), ts, D), lambda b, s: (b, s, 0)),
        compiler_params=_cparams(("parallel", "parallel")),
    )(word_vec, w0, b0.reshape(1, D), pe)


def qkv_project(x, alpha, beta, wqkv, bqkv, *, heads, ts, eps=NORM_EPS):
    B, S, D = x.shape
    dk = D // heads
    kernel = functools.partial(_qkv_kernel, heads=heads, dk=dk, eps=eps)
    out_sds = jax.ShapeDtypeStruct((B, heads, S, dk), jnp.float32)
    o_spec = pl.BlockSpec((pl.Squeezed(), heads, ts, dk), lambda b, s: (b, 0, s, 0))
    return pl.pallas_call(
        kernel,
        out_shape=(out_sds, out_sds, out_sds),
        grid=(B, S // ts),
        in_specs=[
            pl.BlockSpec((pl.Squeezed(), ts, D), lambda b, s: (b, s, 0)),
            pl.BlockSpec((1, D), lambda b, s: (0, 0)),
            pl.BlockSpec((1, D), lambda b, s: (0, 0)),
            pl.BlockSpec((D, 3 * D), lambda b, s: (0, 0)),
            pl.BlockSpec((1, 3 * D), lambda b, s: (0, 0)),
        ],
        out_specs=(o_spec, o_spec, o_spec),
        compiler_params=_cparams(("parallel", "parallel")),
    )(x, alpha.reshape(1, D), beta.reshape(1, D), wqkv, bqkv.reshape(1, 3 * D))


def flash_attention(q, k, v, mask3, *, tq, tk):
    B, H, S, dk = q.shape
    kernel = functools.partial(_flash_attn_kernel, scale=1.0 / math.sqrt(dk))
    q_spec = pl.BlockSpec((pl.Squeezed(), pl.Squeezed(), tq, dk),
                          lambda b, h, qi, ki: (b, h, qi, 0))
    kv_spec = pl.BlockSpec((pl.Squeezed(), pl.Squeezed(), tk, dk),
                           lambda b, h, qi, ki: (b, h, ki, 0))
    m_spec = pl.BlockSpec((pl.Squeezed(), 1, tk), lambda b, h, qi, ki: (b, 0, ki))
    return pl.pallas_call(
        kernel,
        out_shape=jax.ShapeDtypeStruct((B, H, S, dk), jnp.float32),
        grid=(B, H, S // tq, S // tk),
        in_specs=[q_spec, kv_spec, kv_spec, m_spec],
        out_specs=q_spec,
        scratch_shapes=[pltpu.VMEM((tq, 1), jnp.float32),
                        pltpu.VMEM((tq, 1), jnp.float32),
                        pltpu.VMEM((tq, dk), jnp.float32)],
        compiler_params=_cparams(("parallel", "parallel", "parallel", "arbitrary")),
    )(q, k, v, mask3)


def attn_out(attn, x, wo, bo, *, ts):
    B, H, S, dk = attn.shape
    D = H * dk
    kernel = functools.partial(_attn_out_kernel, heads=H)
    return pl.pallas_call(
        kernel,
        out_shape=jax.ShapeDtypeStruct((B, S, D), jnp.float32),
        grid=(B, S // ts),
        in_specs=[
            pl.BlockSpec((pl.Squeezed(), H, ts, dk), lambda b, s: (b, 0, s, 0)),
            pl.BlockSpec((pl.Squeezed(), ts, D), lambda b, s: (b, s, 0)),
            pl.BlockSpec((D, D), lambda b, s: (0, 0)),
            pl.BlockSpec((1, D), lambda b, s: (0, 0)),
        ],
        out_specs=pl.BlockSpec((pl.Squeezed(), ts, D), lambda b, s: (b, s, 0)),
        compiler_params=_cparams(("parallel", "parallel")),
    )(attn, x, wo, bo.reshape(1, D))


def ffn_in(x, alpha, beta, w1, b1, *, ts, tn, eps=NORM_EPS):
    B, S, D = x.shape
    F = w1.shape[1]
    kernel = functools.partial(_ffn_in_kernel, eps=eps)
    return pl.pallas_call(
        kernel,
        out_shape=jax.ShapeDtypeStruct((B, S, F), jnp.float32),
        grid=(B, S // ts, F // tn),
        in_specs=[
            pl.BlockSpec((pl.Squeezed(), ts, D), lambda b, s, n: (b, s, 0)),
            pl.BlockSpec((1, D), lambda b, s, n: (0, 0)),
            pl.BlockSpec((1, D), lambda b, s, n: (0, 0)),
            pl.BlockSpec((D, tn), lambda b, s, n: (0, n)),
            pl.BlockSpec((1, tn), lambda b, s, n: (0, n)),
        ],
        out_specs=pl.BlockSpec((pl.Squeezed(), ts, tn), lambda b, s, n: (b, s, n)),
        compiler_params=_cparams(("parallel", "parallel", "parallel")),
    )(x, alpha.reshape(1, D), beta.reshape(1, D), w1, b1.reshape(1, F))


def ffn_out(h1, x_res, w2, b2, *, ts, tk):
    B, S, F = h1.shape
    D = w2.shape[1]
    return pl.pallas_call(
        _ffn_out_kernel,
        out_shape=jax.ShapeDtypeStruct((B, S, D), jnp.float32),
        grid=(B, S // ts, F // tk),
        in_specs=[
            pl.BlockSpec((pl.Squeezed(), ts, tk), lambda b, s, kt: (b, s, kt)),
            pl.BlockSpec((tk, D), lambda b, s, kt: (kt, 0)),
            pl.BlockSpec((1, D), lambda b, s, kt: (0, 0)),
            pl.BlockSpec((pl.Squeezed(), ts, D), lambda b, s, kt: (b, s, 0)),
        ],
        out_specs=pl.BlockSpec((pl.Squeezed(), ts, D), lambda b, s, kt: (b, s, 0)),
        scratch_shapes=[pltpu.VMEM((ts, D), jnp.float32)],
        compiler_params=_cparams(("parallel", "parallel", "arbitrary")),
    )(h1, w2, b2.reshape(1, D), x_res)


def norm_heads(x, alpha, beta, w, b, *, ts, eps=NORM_EPS):
    B, S, D = x.shape
    n_out = w.shape[1]
    kernel = functools.partial(_norm_heads_kernel, eps=eps)
    return pl.pallas_call(
        kernel,
        out_shape=jax.ShapeDtypeStruct((B, S, n_out), jnp.float32),
        grid=(B, S // ts),
        in_specs=[
            pl.BlockSpec((pl.Squeezed(), ts, D), lambda b, s: (b, s, 0)),
            pl.BlockSpec((1, D), lambda b, s: (0, 0)),
            pl.BlockSpec((1, D), lambda b, s: (0, 0)),
            pl.BlockSpec((D, n_out), lambda b, s: (0, 0)),
            pl.BlockSpec((1, n_out), lambda b, s: (0, 0)),
        ],
        out_specs=pl.BlockSpec((pl.Squeezed(), ts, n_out), lambda b, s: (b, s, 0)),
        compiler_params=_cparams(("parallel", "parallel")),
    )(x, alpha.reshape(1, D), beta.reshape(1, D), w, b.reshape(1, n_out))


# ----------------------------------------------------------------------------
# Model forward
# ----------------------------------------------------------------------------

def uncertainty_encoder_forward(word_vec, padding_mask, params, *, heads):
    B, S, V = word_vec.shape
    D = params['w0'].shape[1]
    d_ff = params['layers'][0]['w1'].shape[1]

    ts = _pick_tile(S, 256, 8)           # row (seq) tile
    tkv = _pick_tile(S, 512, 128)        # attention key/value tile
    tff = _pick_tile(d_ff, 512, 128)     # d_ff lane / contraction tile

    pe = params['pe'][:S]                # (S, D); broadcast over batch via index_map
    x = embed_pe(word_vec, params['w0'], params['b0'], pe, ts=ts)

    mask3 = padding_mask.reshape(B, 1, S).astype(jnp.int32)

    for lp in params['layers']:
        q, k, v = qkv_project(x, lp['norm1_alpha'], lp['norm1_bias'],
                              lp['wqkv'], lp['bqkv'], heads=heads, ts=ts)
        attn = flash_attention(q, k, v, mask3, tq=ts, tk=tkv)
        x = attn_out(attn, x, lp['wo'], lp['bo'], ts=ts)        # +residual fused
        h1 = ffn_in(x, lp['norm2_alpha'], lp['norm2_bias'],
                    lp['w1'], lp['b1'], ts=ts, tn=tff)
        x = ffn_out(h1, x, lp['w2'], lp['b2'], ts=ts, tk=tff)   # +residual fused

    out2 = norm_heads(x, params['norm_alpha'], params['norm_bias'],
                      params['w_heads'], params['b_heads'], ts=ts)
    cs = out2[..., 0:1]
    log_sigma = out2[..., 1:2]
    return cs, log_sigma


# ----------------------------------------------------------------------------
# Deterministic parameter init (synthetic weights, no checkpoint)
# ----------------------------------------------------------------------------

def make_pe_table(max_seq_len, d_model):
    # pe[pos, j] = sin(pos / 10000^(2j/d)) if j even else cos(pos / 10000^(2j/d))
    pos = jnp.arange(max_seq_len, dtype=jnp.float32)[:, None]
    j = jnp.arange(d_model, dtype=jnp.float32)[None, :]
    angle = pos / jnp.power(10000.0, 2.0 * j / d_model)
    even = (jnp.arange(d_model)[None, :] % 2) == 0
    return jnp.where(even, jnp.sin(angle), jnp.cos(angle)).astype(jnp.float32)


def init_params(key, vocab, d_model, n_layers, heads, d_ff=2048, max_seq_len=512):
    n_lin = 3 + 6 * n_layers
    keys = list(jax.random.split(key, n_lin))
    ki = iter(keys)

    def lin(fan_in, fan_out):
        w = jax.random.normal(next(ki), (fan_in, fan_out), jnp.float32) * 0.02
        b = jnp.zeros((fan_out,), jnp.float32)
        return w, b

    params = {'pe': make_pe_table(max_seq_len, d_model)}
    params['w0'], params['b0'] = lin(vocab, d_model)

    layers = []
    for _ in range(n_layers):
        lp = {}
        lp['norm1_alpha'] = jnp.ones((d_model,), jnp.float32)
        lp['norm1_bias'] = jnp.zeros((d_model,), jnp.float32)
        lp['norm2_alpha'] = jnp.ones((d_model,), jnp.float32)
        lp['norm2_bias'] = jnp.zeros((d_model,), jnp.float32)
        wq, bq = lin(d_model, d_model)
        wk, bk = lin(d_model, d_model)
        wv, bv = lin(d_model, d_model)
        # fused QKV projection: one wide matmul, one pass over the activation
        lp['wqkv'] = jnp.concatenate([wq, wk, wv], axis=1)
        lp['bqkv'] = jnp.concatenate([bq, bk, bv])
        lp['wo'], lp['bo'] = lin(d_model, d_model)
        lp['w1'], lp['b1'] = lin(d_model, d_ff)
        lp['w2'], lp['b2'] = lin(d_ff, d_model)
        layers.append(lp)
    params['layers'] = layers

    params['norm_alpha'] = jnp.ones((d_model,), jnp.float32)
    params['norm_bias'] = jnp.zeros((d_model,), jnp.float32)
    w_out, b_out = lin(d_model, 1)
    w_sigma, b_sigma = lin(d_model, 1)
    # fused scalar heads: one (D, 2) matmul, split outside the kernel
    params['w_heads'] = jnp.concatenate([w_out, w_sigma], axis=1)
    params['b_heads'] = jnp.concatenate([b_out, b_sigma])
    return params


# ----------------------------------------------------------------------------
# Demo
# ----------------------------------------------------------------------------

if __name__ == "__main__":
    VOCAB = 16      # word_vec feature dim
    D_MODEL = 32
    N_LAYERS = 2
    HEADS = 4
    BATCH = 2
    SEQ = 8

    root = jax.random.PRNGKey(0)
    k_params, k_x = jax.random.split(root)

    params = init_params(k_params, VOCAB, D_MODEL, N_LAYERS, HEADS)

    word_vec = jax.random.normal(k_x, (BATCH, SEQ, VOCAB), jnp.float32)
    padding_mask = jnp.array(
        [[1, 1, 1, 1, 1, 1, 1, 1],
         [1, 1, 1, 1, 1, 0, 0, 0]], dtype=jnp.int32)

    fwd = jax.jit(functools.partial(uncertainty_encoder_forward, heads=HEADS))
    cs, log_sigma = fwd(word_vec, padding_mask, params)
    jax.block_until_ready((cs, log_sigma))

    assert cs.shape == (BATCH, SEQ, 1) and log_sigma.shape == (BATCH, SEQ, 1)
    assert bool(jnp.all(jnp.isfinite(cs))) and bool(jnp.all(jnp.isfinite(log_sigma)))
    print("KERNEL_OK")
</pallas_src>

<mosaic_0001>
module attributes {stable_mosaic.version = 11 : i64} {
  func.func @_embed_pe_kernel(%arg0: i32, %arg1: i32, %arg2: memref<1x8x16xf32, #tpu.memory_space<vmem>>, %arg3: memref<16x32xf32, #tpu.memory_space<vmem>>, %arg4: memref<1x32xf32, #tpu.memory_space<vmem>>, %arg5: memref<8x32xf32, #tpu.memory_space<vmem>>, %arg6: memref<1x8x32xf32, #tpu.memory_space<vmem>>) attributes {dimension_semantics = [#tpu.dimension_semantics<parallel>, #tpu.dimension_semantics<parallel>], iteration_bounds = array<i64: 2, 1>, scalar_prefetch = 0 : i64, scratch_operands = 0 : i64, tpu.core_type = #tpu.core_type<tc>, window_params = [{transform_indices = @transform_0, window_bounds = array<i64: 1, 8, 16>}, {pipeline_mode = #tpu.pipeline_mode<synchronous>, transform_indices = @transform_1, window_bounds = array<i64: 16, 32>}, {pipeline_mode = #tpu.pipeline_mode<synchronous>, transform_indices = @transform_2, window_bounds = array<i64: 1, 32>}, {transform_indices = @transform_3, window_bounds = array<i64: 8, 32>}, {transform_indices = @transform_4, window_bounds = array<i64: 1, 8, 32>}]} {
    %c0 = arith.constant 0 : index
    %c0_0 = arith.constant 0 : index
    %c0_1 = arith.constant 0 : index
    %0 = vector.load %arg2[%c0, %c0_0, %c0_1] : memref<1x8x16xf32, #tpu.memory_space<vmem>>, vector<1x8x16xf32>
    %1 = vector.shape_cast %0 : vector<1x8x16xf32> to vector<8x16xf32>
    %c0_2 = arith.constant 0 : index
    %c0_3 = arith.constant 0 : index
    %2 = vector.load %arg3[%c0_2, %c0_3] : memref<16x32xf32, #tpu.memory_space<vmem>>, vector<16x32xf32>
    %cst = arith.constant dense<0.000000e+00> : vector<8x32xf32>
    %3 = tpu.matmul %1, %2, %cst {dimension_numbers = #tpu.dot_dimension_numbers<[1], [0], [0], [1], [0, 0, 1, 1], [], []>} : vector<8x16xf32>, vector<16x32xf32>, vector<8x32xf32> -> vector<8x32xf32>
    %c0_4 = arith.constant 0 : index
    %c0_5 = arith.constant 0 : index
    %4 = vector.load %arg4[%c0_4, %c0_5] : memref<1x32xf32, #tpu.memory_space<vmem>>, vector<1x32xf32>
    %5 = vector.broadcast %4 : vector<1x32xf32> to vector<8x32xf32>
    %6 = arith.addf %3, %5 : vector<8x32xf32>
    %cst_6 = arith.constant 5.65685415 : f32
    %7 = vector.broadcast %cst_6 : f32 to vector<8x32xf32>
    %8 = arith.mulf %6, %7 : vector<8x32xf32>
    %c0_7 = arith.constant 0 : index
    %c0_8 = arith.constant 0 : index
    %9 = vector.load %arg5[%c0_7, %c0_8] : memref<8x32xf32, #tpu.memory_space<vmem>>, vector<8x32xf32>
    %10 = arith.addf %8, %9 : vector<8x32xf32>
    %c0_9 = arith.constant 0 : index
    %c0_10 = arith.constant 0 : index
    %c0_11 = arith.constant 0 : index
    %11 = vector.load %arg6[%c0_9, %c0_10, %c0_11] : memref<1x8x32xf32, #tpu.memory_space<vmem>>, vector<1x8x32xf32>
    %12 = vector.shape_cast %11 : vector<1x8x32xf32> to vector<8x32xf32>
    %13 = vector.shape_cast %10 : vector<8x32xf32> to vector<1x8x32xf32>
    tpu.vector_store %arg6[%c0_9, %c0_10, %c0_11], %13 {strides = array<i32>} : memref<1x8x32xf32, #tpu.memory_space<vmem>>, vector<1x8x32xf32>,
    return
  }
  func.func @transform_0(%arg0: i32, %arg1: i32) -> (i32, i32, i32) {
    %c0_i32 = arith.constant 0 : i32
    %c0_i32_0 = arith.constant 0 : i32
    return %arg0, %arg1, %c0_i32 : i32, i32, i32
  }
  func.func @transform_1(%arg0: i32, %arg1: i32) -> (i32, i32) {
    %c0_i32 = arith.constant 0 : i32
    %c0_i32_0 = arith.constant 0 : i32
    %c0_i32_1 = arith.constant 0 : i32
    return %c0_i32, %c0_i32_0 : i32, i32
  }
  func.func @transform_2(%arg0: i32, %arg1: i32) -> (i32, i32) {
    %c0_i32 = arith.constant 0 : i32
    %c0_i32_0 = arith.constant 0 : i32
    %c0_i32_1 = arith.constant 0 : i32
    return %c0_i32, %c0_i32_0 : i32, i32
  }
  func.func @transform_3(%arg0: i32, %arg1: i32) -> (i32, i32) {
    %c0_i32 = arith.constant 0 : i32
    %c0_i32_0 = arith.constant 0 : i32
    return %arg1, %c0_i32 : i32, i32
  }
  func.func @transform_4(%arg0: i32, %arg1: i32) -> (i32, i32, i32) {
    %c0_i32 = arith.constant 0 : i32
    %c0_i32_0 = arith.constant 0 : i32
    return %arg0, %arg1, %c0_i32 : i32, i32, i32
  }
}

module attributes {stable_mosaic.version = 11 : i64} {
  func.func @_flash_attn_kernel(%arg0: i32, %arg1: i32, %arg2: i32, %arg3: i32, %arg4: memref<1x1x8x8xf32, #tpu.memory_space<vmem>>, %arg5: memref<1x1x8x8xf32, #tpu.memory_space<vmem>>, %arg6: memref<1x1x8x8xf32, #tpu.memory_space<vmem>>, %arg7: memref<1x1x8xi32, #tpu.memory_space<vmem>>, %arg8: memref<1x1x8x8xf32, #tpu.memory_space<vmem>>, %arg9: memref<8x1xf32, #tpu.memory_space<vmem>>, %arg10: memref<8x1xf32, #tpu.memory_space<vmem>>, %arg11: memref<8x8xf32, #tpu.memory_space<vmem>>) attributes {dimension_semantics = [#tpu.dimension_semantics<parallel>, #tpu.dimension_semantics<parallel>, #tpu.dimension_semantics<parallel>, #tpu.dimension_semantics<arbitrary>], iteration_bounds = array<i64: 2, 4, 1, 1>, scalar_prefetch = 0 : i64, scratch_operands = 3 : i64, tpu.core_type = #tpu.core_type<tc>, window_params = [{transform_indices = @transform_0, window_bounds = array<i64: 1, 1, 8, 8>}, {transform_indices = @transform_1, window_bounds = array<i64: 1, 1, 8, 8>}, {transform_indices = @transform_2, window_bounds = array<i64: 1, 1, 8, 8>}, {transform_indices = @transform_3, window_bounds = array<i64: 1, 1, 8>}, {transform_indices = @transform_4, window_bounds = array<i64: 1, 1, 8, 8>}]} {
    %c0_i32 = arith.constant 0 : i32
    %0 = arith.cmpi eq, %arg3, %c0_i32 : i32
    %1 = arith.extui %0 : i1 to i32
    %c0_i32_0 = arith.constant 0 : i32
    %2 = arith.cmpi ne, %1, %c0_i32_0 : i32
    scf.if %2 {
      %cst_35 = arith.constant 0xFF800000 : f32
      %45 = vector.broadcast %cst_35 : f32 to vector<8x1xf32>
      %c0_36 = arith.constant 0 : index
      %c0_37 = arith.constant 0 : index
      %46 = vector.load %arg9[%c0_36, %c0_37] : memref<8x1xf32, #tpu.memory_space<vmem>>, vector<8x1xf32>
      tpu.vector_store %arg9[%c0_36, %c0_37], %45 {strides = array<i32>} : memref<8x1xf32, #tpu.memory_space<vmem>>, vector<8x1xf32>,
      %cst_38 = arith.constant 0.000000e+00 : f32
      %47 = vector.broadcast %cst_38 : f32 to vector<8x1xf32>
      %c0_39 = arith.constant 0 : index
      %c0_40 = arith.constant 0 : index
      %48 = vector.load %arg10[%c0_39, %c0_40] : memref<8x1xf32, #tpu.memory_space<vmem>>, vector<8x1xf32>
      tpu.vector_store %arg10[%c0_39, %c0_40], %47 {strides = array<i32>} : memref<8x1xf32, #tpu.memory_space<vmem>>, vector<8x1xf32>,
      %cst_41 = arith.constant 0.000000e+00 : f32
      %49 = vector.broadcast %cst_41 : f32 to vector<8x8xf32>
      %c0_42 = arith.constant 0 : index
      %c0_43 = arith.constant 0 : index
      %50 = vector.load %arg11[%c0_42, %c0_43] : memref<8x8xf32, #tpu.memory_space<vmem>>, vector<8x8xf32>
      tpu.vector_store %arg11[%c0_42, %c0_43], %49 {strides = array<i32>} : memref<8x8xf32, #tpu.memory_space<vmem>>, vector<8x8xf32>,
    } else {
    }
    %c0 = arith.constant 0 : index
    %c0_1 = arith.constant 0 : index
    %c0_2 = arith.constant 0 : index
    %c0_3 = arith.constant 0 : index
    %3 = vector.load %arg4[%c0, %c0_1, %c0_2, %c0_3] : memref<1x1x8x8xf32, #tpu.memory_space<vmem>>, vector<1x1x8x8xf32>
    %4 = vector.shape_cast %3 : vector<1x1x8x8xf32> to vector<8x8xf32>
    %c0_4 = arith.constant 0 : index
    %c0_5 = arith.constant 0 : index
    %c0_6 = arith.constant 0 : index
    %c0_7 = arith.constant 0 : index
    %5 = vector.load %arg5[%c0_4, %c0_5, %c0_6, %c0_7] : memref<1x1x8x8xf32, #tpu.memory_space<vmem>>, vector<1x1x8x8xf32>
    %6 = vector.shape_cast %5 : vector<1x1x8x8xf32> to vector<8x8xf32>
    %cst = arith.constant dense<0.000000e+00> : vector<8x8xf32>
    %7 = tpu.matmul %4, %6, %cst {dimension_numbers = #tpu.dot_dimension_numbers<[1], [1], [0], [0], [0, 0, 1, 0], [], []>} : vector<8x8xf32>, vector<8x8xf32>, vector<8x8xf32> -> vector<8x8xf32>
    %cst_8 = arith.constant 0.353553385 : f32
    %8 = vector.broadcast %cst_8 : f32 to vector<8x8xf32>
    %9 = arith.mulf %7, %8 : vector<8x8xf32>
    %c0_9 = arith.constant 0 : index
    %c0_10 = arith.constant 0 : index
    %c0_11 = arith.constant 0 : index
    %10 = vector.load %arg7[%c0_9, %c0_10, %c0_11] : memref<1x1x8xi32, #tpu.memory_space<vmem>>, vector<1x1x8xi32>
    %11 = vector.shape_cast %10 : vector<1x1x8xi32> to vector<1x8xi32>
    %c0_i32_12 = arith.constant 0 : i32
    %12 = vector.broadcast %c0_i32_12 : i32 to vector<1x8xi32>
    %13 = arith.cmpi eq, %11, %12 : vector<1x8xi32>
    %cst_13 = arith.constant -1.000000e+09 : f32
    %14 = vector.shape_cast %13 : vector<1x8xi1> to vector<1x8xi1>
    %15 = vector.broadcast %14 : vector<1x8xi1> to vector<8x8xi1>
    %16 = vector.broadcast %cst_13 : f32 to vector<8x8xf32>
    %17 = arith.select %15, %16, %9 : vector<8x8xi1>, vector<8x8xf32>
    %c0_14 = arith.constant 0 : index
    %c0_15 = arith.constant 0 : index
    %18 = vector.load %arg9[%c0_14, %c0_15] : memref<8x1xf32, #tpu.memory_space<vmem>>, vector<8x1xf32>
    %cst_16 = arith.constant dense<0xFF800000> : vector<8xf32>
    %19 = vector.multi_reduction <maximumf>, %17, %cst_16 [1] : vector<8x8xf32> to vector<8xf32>
    %20 = vector.shape_cast %19 : vector<8xf32> to vector<8x1xf32>
    %21 = arith.maximumf %18, %20 : vector<8x1xf32>
    %22 = arith.subf %18, %21 : vector<8x1xf32>
    %23 = math.exp %22 : vector<8x1xf32>
    %24 = vector.broadcast %21 : vector<8x1xf32> to vector<8x8xf32>
    %25 = arith.subf %17, %24 : vector<8x8xf32>
    %26 = math.exp %25 : vector<8x8xf32>
    %c0_17 = arith.constant 0 : index
    %c0_18 = arith.constant 0 : index
    %27 = vector.load %arg10[%c0_17, %c0_18] : memref<8x1xf32, #tpu.memory_space<vmem>>, vector<8x1xf32>
    %28 = arith.mulf %23, %27 : vector<8x1xf32>
    %cst_19 = arith.constant dense<0.000000e+00> : vector<8xf32>
    %29 = vector.multi_reduction <add>, %26, %cst_19 [1] : vector<8x8xf32> to vector<8xf32>
    %30 = vector.shape_cast %29 : vector<8xf32> to vector<8x1xf32>
    %31 = arith.addf %28, %30 : vector<8x1xf32>
    %c0_20 = arith.constant 0 : index
    %c0_21 = arith.constant 0 : index
    %32 = vector.load %arg10[%c0_20, %c0_21] : memref<8x1xf32, #tpu.memory_space<vmem>>, vector<8x1xf32>
    tpu.vector_store %arg10[%c0_20, %c0_21], %31 {strides = array<i32>} : memref<8x1xf32, #tpu.memory_space<vmem>>, vector<8x1xf32>,
    %c0_22 = arith.constant 0 : index
    %c0_23 = arith.constant 0 : index
    %33 = vector.load %arg11[%c0_22, %c0_23] : memref<8x8xf32, #tpu.memory_space<vmem>>, vector<8x8xf32>
    %34 = vector.broadcast %23 : vector<8x1xf32> to vector<8x8xf32>
    %35 = arith.mulf %34, %33 : vector<8x8xf32>
    %c0_24 = arith.constant 0 : index
    %c0_25 = arith.constant 0 : index
    %c0_26 = arith.constant 0 : index
    %c0_27 = arith.constant 0 : index
    %36 = vector.load %arg6[%c0_24, %c0_25, %c0_26, %c0_27] : memref<1x1x8x8xf32, #tpu.memory_space<vmem>>, vector<1x1x8x8xf32>
    %37 = vector.shape_cast %36 : vector<1x1x8x8xf32> to vector<8x8xf32>
    %cst_28 = arith.constant dense<0.000000e+00> : vector<8x8xf32>
    %38 = tpu.matmul %26, %37, %cst_28 {dimension_numbers = #tpu.dot_dimension_numbers<[1], [0], [0], [1], [0, 0, 1, 1], [], []>} : vector<8x8xf32>, vector<8x8xf32>, vector<8x8xf32> -> vector<8x8xf32>
    %39 = arith.addf %35, %38 : vector<8x8xf32>
    %c0_29 = arith.constant 0 : index
    %c0_30 = arith.constant 0 : index
    %40 = vector.load %arg11[%c0_29, %c0_30] : memref<8x8xf32, #tpu.memory_space<vmem>>, vector<8x8xf32>
    tpu.vector_store %arg11[%c0_29, %c0_30], %39 {strides = array<i32>} : memref<8x8xf32, #tpu.memory_space<vmem>>, vector<8x8xf32>,
    %c0_31 = arith.constant 0 : index
    %c0_32 = arith.constant 0 : index
    %41 = vector.load %arg9[%c0_31, %c0_32] : memref<8x1xf32, #tpu.memory_space<vmem>>, vector<8x1xf32>
    tpu.vector_store %arg9[%c0_31, %c0_32], %21 {strides = array<i32>} : memref<8x1xf32, #tpu.memory_space<vmem>>, vector<8x1xf32>,
    %c0_i32_33 = arith.constant 0 : i32
    %42 = arith.cmpi eq, %arg3, %c0_i32_33 : i32
    %43 = arith.extui %42 : i1 to i32
    %c0_i32_34 = arith.constant 0 : i32
    %44 = arith.cmpi ne, %43, %c0_i32_34 : i32
    scf.if %44 {
      %c0_35 = arith.constant 0 : index
      %c0_36 = arith.constant 0 : index
      %45 = vector.load %arg11[%c0_35, %c0_36] : memref<8x8xf32, #tpu.memory_space<vmem>>, vector<8x8xf32>
      %c0_37 = arith.constant 0 : index
      %c0_38 = arith.constant 0 : index
      %46 = vector.load %arg10[%c0_37, %c0_38] : memref<8x1xf32, #tpu.memory_space<vmem>>, vector<8x1xf32>
      %47 = tpu.reciprocal %46 {approx = true} : vector<8x1xf32> -> vector<8x1xf32>
      %48 = vector.broadcast %47 : vector<8x1xf32> to vector<8x8xf32>
      %49 = arith.mulf %45, %48 : vector<8x8xf32>
      %c0_39 = arith.constant 0 : index
      %c0_40 = arith.constant 0 : index
      %c0_41 = arith.constant 0 : index
      %c0_42 = arith.constant 0 : index
      %50 = vector.load %arg8[%c0_39, %c0_40, %c0_41, %c0_42] : memref<1x1x8x8xf32, #tpu.memory_space<vmem>>, vector<1x1x8x8xf32>
      %51 = vector.shape_cast %50 : vector<1x1x8x8xf32> to vector<8x8xf32>
      %52 = vector.shape_cast %49 : vector<8x8xf32> to vector<1x1x8x8xf32>
      tpu.vector_store %arg8[%c0_39, %c0_40, %c0_41, %c0_42], %52 {strides = array<i32>} : memref<1x1x8x8xf32, #tpu.memory_space<vmem>>, vector<1x1x8x8xf32>,
    } else {
    }
    return
  }
  func.func @transform_0(%arg0: i32, %arg1: i32, %arg2: i32, %arg3: i32) -> (i32, i32, i32, i32) {
    %c0_i32 = arith.constant 0 : i32
    %c0_i32_0 = arith.constant 0 : i32
    return %arg0, %arg1, %arg2, %c0_i32 : i32, i32, i32, i32
  }
  func.func @transform_1(%arg0: i32, %arg1: i32, %arg2: i32, %arg3: i32) -> (i32, i32, i32, i32) {
    %c0_i32 = arith.constant 0 : i32
    %c0_i32_0 = arith.constant 0 : i32
    return %arg0, %arg1, %arg3, %c0_i32 : i32, i32, i32, i32
  }
  func.func @transform_2(%arg0: i32, %arg1: i32, %arg2: i32, %arg3: i32) -> (i32, i32, i32, i32) {
    %c0_i32 = arith.constant 0 : i32
    %c0_i32_0 = arith.constant 0 : i32
    return %arg0, %arg1, %arg3, %c0_i32 : i32, i32, i32, i32
  }
  func.func @transform_3(%arg0: i32, %arg1: i32, %arg2: i32, %arg3: i32) -> (i32, i32, i32) {
    %c0_i32 = arith.constant 0 : i32
    %c0_i32_0 = arith.constant 0 : i32
    return %arg0, %c0_i32, %arg3 : i32, i32, i32
  }
  func.func @transform_4(%arg0: i32, %arg1: i32, %arg2: i32, %arg3: i32) -> (i32, i32, i32, i32) {
    %c0_i32 = arith.constant 0 : i32
    %c0_i32_0 = arith.constant 0 : i32
    return %arg0, %arg1, %arg2, %c0_i32 : i32, i32, i32, i32
  }
}

module attributes {stable_mosaic.version = 11 : i64} {
  func.func @_qkv_kernel(%arg0: i32, %arg1: i32, %arg2: memref<1x8x32xf32, #tpu.memory_space<vmem>>, %arg3: memref<1x32xf32, #tpu.memory_space<vmem>>, %arg4: memref<1x32xf32, #tpu.memory_space<vmem>>, %arg5: memref<32x96xf32, #tpu.memory_space<vmem>>, %arg6: memref<1x96xf32, #tpu.memory_space<vmem>>, %arg7: memref<1x4x8x8xf32, #tpu.memory_space<vmem>>, %arg8: memref<1x4x8x8xf32, #tpu.memory_space<vmem>>, %arg9: memref<1x4x8x8xf32, #tpu.memory_space<vmem>>) attributes {dimension_semantics = [#tpu.dimension_semantics<parallel>, #tpu.dimension_semantics<parallel>], iteration_bounds = array<i64: 2, 1>, scalar_prefetch = 0 : i64, scratch_operands = 0 : i64, tpu.core_type = #tpu.core_type<tc>, window_params = [{transform_indices = @transform_0, window_bounds = array<i64: 1, 8, 32>}, {pipeline_mode = #tpu.pipeline_mode<synchronous>, transform_indices = @transform_1, window_bounds = array<i64: 1, 32>}, {pipeline_mode = #tpu.pipeline_mode<synchronous>, transform_indices = @transform_2, window_bounds = array<i64: 1, 32>}, {pipeline_mode = #tpu.pipeline_mode<synchronous>, transform_indices = @transform_3, window_bounds = array<i64: 32, 96>}, {pipeline_mode = #tpu.pipeline_mode<synchronous>, transform_indices = @transform_4, window_bounds = array<i64: 1, 96>}, {transform_indices = @transform_5, window_bounds = array<i64: 1, 4, 8, 8>}, {transform_indices = @transform_6, window_bounds = array<i64: 1, 4, 8, 8>}, {transform_indices = @transform_7, window_bounds = array<i64: 1, 4, 8, 8>}]} {
    %c0 = arith.constant 0 : index
    %c0_0 = arith.constant 0 : index
    %c0_1 = arith.constant 0 : index
    %0 = vector.load %arg2[%c0, %c0_0, %c0_1] : memref<1x8x32xf32, #tpu.memory_space<vmem>>, vector<1x8x32xf32>
    %1 = vector.shape_cast %0 : vector<1x8x32xf32> to vector<8x32xf32>
    %c0_2 = arith.constant 0 : index
    %c0_3 = arith.constant 0 : index
    %2 = vector.load %arg3[%c0_2, %c0_3] : memref<1x32xf32, #tpu.memory_space<vmem>>, vector<1x32xf32>
    %c0_4 = arith.constant 0 : index
    %c0_5 = arith.constant 0 : index
    %3 = vector.load %arg4[%c0_4, %c0_5] : memref<1x32xf32, #tpu.memory_space<vmem>>, vector<1x32xf32>
    %cst = arith.constant dense<0.000000e+00> : vector<8xf32>
    %4 = vector.multi_reduction <add>, %1, %cst [1] : vector<8x32xf32> to vector<8xf32>
    %5 = vector.shape_cast %4 : vector<8xf32> to vector<8x1xf32>
    %cst_6 = arith.constant 3.200000e+01 : f32
    %6 = vector.broadcast %cst_6 : f32 to vector<8x1xf32>
    %7 = arith.divf %5, %6 : vector<8x1xf32>
    %8 = vector.broadcast %7 : vector<8x1xf32> to vector<8x32xf32>
    %9 = arith.subf %1, %8 : vector<8x32xf32>
    %10 = arith.mulf %9, %9 : vector<8x32xf32>
    %cst_7 = arith.constant dense<0.000000e+00> : vector<8xf32>
    %11 = vector.multi_reduction <add>, %10, %cst_7 [1] : vector<8x32xf32> to vector<8xf32>
    %12 = vector.shape_cast %11 : vector<8xf32> to vector<8x1xf32>
    %cst_8 = arith.constant 3.100000e+01 : f32
    %13 = vector.broadcast %cst_8 : f32 to vector<8x1xf32>
    %14 = arith.divf %12, %13 : vector<8x1xf32>
    %15 = math.sqrt %14 : vector<8x1xf32>
    %cst_9 = arith.constant 9.99999997E-7 : f32
    %16 = vector.broadcast %cst_9 : f32 to vector<8x1xf32>
    %17 = arith.addf %15, %16 : vector<8x1xf32>
    %18 = vector.broadcast %17 : vector<8x1xf32> to vector<8x32xf32>
    %19 = arith.divf %9, %18 : vector<8x32xf32>
    %20 = vector.broadcast %2 : vector<1x32xf32> to vector<8x32xf32>
    %21 = arith.mulf %20, %19 : vector<8x32xf32>
    %22 = vector.broadcast %3 : vector<1x32xf32> to vector<8x32xf32>
    %23 = arith.addf %21, %22 : vector<8x32xf32>
    %c0_10 = arith.constant 0 : index
    %c0_11 = arith.constant 0 : index
    %24 = vector.load %arg5[%c0_10, %c0_11] : memref<32x96xf32, #tpu.memory_space<vmem>>, vector<32x96xf32>
    %cst_12 = arith.constant dense<0.000000e+00> : vector<8x96xf32>
    %25 = tpu.matmul %23, %24, %cst_12 {dimension_numbers = #tpu.dot_dimension_numbers<[1], [0], [0], [1], [0, 0, 1, 1], [], []>} : vector<8x32xf32>, vector<32x96xf32>, vector<8x96xf32> -> vector<8x96xf32>
    %c0_13 = arith.constant 0 : index
    %c0_14 = arith.constant 0 : index
    %26 = vector.load %arg6[%c0_13, %c0_14] : memref<1x96xf32, #tpu.memory_space<vmem>>, vector<1x96xf32>
    %27 = vector.broadcast %26 : vector<1x96xf32> to vector<8x96xf32>
    %28 = arith.addf %25, %27 : vector<8x96xf32>
    %29 = vector.extract_strided_slice %28 {offsets = [0, 0], sizes = [8, 8], strides = [1, 1]} : vector<8x96xf32> to vector<8x8xf32>
    %c0_15 = arith.constant 0 : index
    %c0_16 = arith.constant 0 : index
    %c0_17 = arith.constant 0 : index
    %c0_18 = arith.constant 0 : index
    %30 = vector.load %arg7[%c0_15, %c0_16, %c0_17, %c0_18] : memref<1x4x8x8xf32, #tpu.memory_space<vmem>>, vector<1x1x8x8xf32>
    %31 = vector.shape_cast %30 : vector<1x1x8x8xf32> to vector<8x8xf32>
    %32 = vector.shape_cast %29 : vector<8x8xf32> to vector<1x1x8x8xf32>
    tpu.vector_store %arg7[%c0_15, %c0_16, %c0_17, %c0_18], %32 {strides = array<i32>} : memref<1x4x8x8xf32, #tpu.memory_space<vmem>>, vector<1x1x8x8xf32>,
    %33 = vector.extract_strided_slice %28 {offsets = [0, 32], sizes = [8, 8], strides = [1, 1]} : vector<8x96xf32> to vector<8x8xf32>
    %c0_19 = arith.constant 0 : index
    %c0_20 = arith.constant 0 : index
    %c0_21 = arith.constant 0 : index
    %c0_22 = arith.constant 0 : index
    %34 = vector.load %arg8[%c0_19, %c0_20, %c0_21, %c0_22] : memref<1x4x8x8xf32, #tpu.memory_space<vmem>>, vector<1x1x8x8xf32>
    %35 = vector.shape_cast %34 : vector<1x1x8x8xf32> to vector<8x8xf32>
    %36 = vector.shape_cast %33 : vector<8x8xf32> to vector<1x1x8x8xf32>
    tpu.vector_store %arg8[%c0_19, %c0_20, %c0_21, %c0_22], %36 {strides = array<i32>} : memref<1x4x8x8xf32, #tpu.memory_space<vmem>>, vector<1x1x8x8xf32>,
    %37 = vector.extract_strided_slice %28 {offsets = [0, 64], sizes = [8, 8], strides = [1, 1]} : vector<8x96xf32> to vector<8x8xf32>
    %c0_23 = arith.constant 0 : index
    %c0_24 = arith.constant 0 : index
    %c0_25 = arith.constant 0 : index
    %c0_26 = arith.constant 0 : index
    %38 = vector.load %arg9[%c0_23, %c0_24, %c0_25, %c0_26] : memref<1x4x8x8xf32, #tpu.memory_space<vmem>>, vector<1x1x8x8xf32>
    %39 = vector.shape_cast %38 : vector<1x1x8x8xf32> to vector<8x8xf32>
    %40 = vector.shape_cast %37 : vector<8x8xf32> to vector<1x1x8x8xf32>
    tpu.vector_store %arg9[%c0_23, %c0_24, %c0_25, %c0_26], %40 {strides = array<i32>} : memref<1x4x8x8xf32, #tpu.memory_space<vmem>>, vector<1x1x8x8xf32>,
    %41 = vector.extract_strided_slice %28 {offsets = [0, 8], sizes = [8, 8], strides = [1, 1]} : vector<8x96xf32> to vector<8x8xf32>
    %c0_27 = arith.constant 0 : index
    %c1 = arith.constant 1 : index
    %c0_28 = arith.constant 0 : index
    %c0_29 = arith.constant 0 : index
    %42 = vector.load %arg7[%c0_27, %c1, %c0_28, %c0_29] : memref<1x4x8x8xf32, #tpu.memory_space<vmem>>, vector<1x1x8x8xf32>
    %43 = vector.shape_cast %42 : vector<1x1x8x8xf32> to vector<8x8xf32>
    %44 = vector.shape_cast %41 : vector<8x8xf32> to vector<1x1x8x8xf32>
    tpu.vector_store %arg7[%c0_27, %c1, %c0_28, %c0_29], %44 {strides = array<i32>} : memref<1x4x8x8xf32, #tpu.memory_space<vmem>>, vector<1x1x8x8xf32>,
    %45 = vector.extract_strided_slice %28 {offsets = [0, 40], sizes = [8, 8], strides = [1, 1]} : vector<8x96xf32> to vector<8x8xf32>
    %c0_30 = arith.constant 0 : index
    %c1_31 = arith.constant 1 : index
    %c0_32 = arith.constant 0 : index
    %c0_33 = arith.constant 0 : index
    %46 = vector.load %arg8[%c0_30, %c1_31, %c0_32, %c0_33] : memref<1x4x8x8xf32, #tpu.memory_space<vmem>>, vector<1x1x8x8xf32>
    %47 = vector.shape_cast %46 : vector<1x1x8x8xf32> to vector<8x8xf32>
    %48 = vector.shape_cast %45 : vector<8x8xf32> to vector<1x1x8x8xf32>
    tpu.vector_store %arg8[%c0_30, %c1_31, %c0_32, %c0_33], %48 {strides = array<i32>} : memref<1x4x8x8xf32, #tpu.memory_space<vmem>>, vector<1x1x8x8xf32>,
    %49 = vector.extract_strided_slice %28 {offsets = [0, 72], sizes = [8, 8], strides = [1, 1]} : vector<8x96xf32> to vector<8x8xf32>
    %c0_34 = arith.constant 0 : index
    %c1_35 = arith.constant 1 : index
    %c0_36 = arith.constant 0 : index
    %c0_37 = arith.constant 0 : index
    %50 = vector.load %arg9[%c0_34, %c1_35, %c0_36, %c0_37] : memref<1x4x8x8xf32, #tpu.memory_space<vmem>>, vector<1x1x8x8xf32>
    %51 = vector.shape_cast %50 : vector<1x1x8x8xf32> to vector<8x8xf32>
    %52 = vector.shape_cast %49 : vector<8x8xf32> to vector<1x1x8x8xf32>
    tpu.vector_store %arg9[%c0_34, %c1_35, %c0_36, %c0_37], %52 {strides = array<i32>} : memref<1x4x8x8xf32, #tpu.memory_space<vmem>>, vector<1x1x8x8xf32>,
    %53 = vector.extract_strided_slice %28 {offsets = [0, 16], sizes = [8, 8], strides = [1, 1]} : vector<8x96xf32> to vector<8x8xf32>
    %c0_38 = arith.constant 0 : index
    %c2 = arith.constant 2 : index
    %c0_39 = arith.constant 0 : index
    %c0_40 = arith.constant 0 : index
    %54 = vector.load %arg7[%c0_38, %c2, %c0_39, %c0_40] : memref<1x4x8x8xf32, #tpu.memory_space<vmem>>, vector<1x1x8x8xf32>
    %55 = vector.shape_cast %54 : vector<1x1x8x8xf32> to vector<8x8xf32>
    %56 = vector.shape_cast %53 : vector<8x8xf32> to vector<1x1x8x8xf32>
    tpu.vector_store %arg7[%c0_38, %c2, %c0_39, %c0_40], %56 {strides = array<i32>} : memref<1x4x8x8xf32, #tpu.memory_space<vmem>>, vector<1x1x8x8xf32>,
    %57 = vector.extract_strided_slice %28 {offsets = [0, 48], sizes = [8, 8], strides = [1, 1]} : vector<8x96xf32> to vector<8x8xf32>
    %c0_41 = arith.constant 0 : index
    %c2_42 = arith.constant 2 : index
    %c0_43 = arith.constant 0 : index
    %c0_44 = arith.constant 0 : index
    %58 = vector.load %arg8[%c0_41, %c2_42, %c0_43, %c0_44] : memref<1x4x8x8xf32, #tpu.memory_space<vmem>>, vector<1x1x8x8xf32>
    %59 = vector.shape_cast %58 : vector<1x1x8x8xf32> to vector<8x8xf32>
    %60 = vector.shape_cast %57 : vector<8x8xf32> to vector<1x1x8x8xf32>
    tpu.vector_store %arg8[%c0_41, %c2_42, %c0_43, %c0_44], %60 {strides = array<i32>} : memref<1x4x8x8xf32, #tpu.memory_space<vmem>>, vector<1x1x8x8xf32>,
    %61 = vector.extract_strided_slice %28 {offsets = [0, 80], sizes = [8, 8], strides = [1, 1]} : vector<8x96xf32> to vector<8x8xf32>
    %c0_45 = arith.constant 0 : index
    %c2_46 = arith.constant 2 : index
    %c0_47 = arith.constant 0 : index
    %c0_48 = arith.constant 0 : index
    %62 = vector.load %arg9[%c0_45, %c2_46, %c0_47, %c0_48] : memref<1x4x8x8xf32, #tpu.memory_space<vmem>>, vector<1x1x8x8xf32>
    %63 = vector.shape_cast %62 : vector<1x1x8x8xf32> to vector<8x8xf32>
    %64 = vector.shape_cast %61 : vector<8x8xf32> to vector<1x1x8x8xf32>
    tpu.vector_store %arg9[%c0_45, %c2_46, %c0_47, %c0_48], %64 {strides = array<i32>} : memref<1x4x8x8xf32, #tpu.memory_space<vmem>>, vector<1x1x8x8xf32>,
    %65 = vector.extract_strided_slice %28 {offsets = [0, 24], sizes = [8, 8], strides = [1, 1]} : vector<8x96xf32> to vector<8x8xf32>
    %c0_49 = arith.constant 0 : index
    %c3 = arith.constant 3 : index
    %c0_50 = arith.constant 0 : index
    %c0_51 = arith.constant 0 : index
    %66 = vector.load %arg7[%c0_49, %c3, %c0_50, %c0_51] : memref<1x4x8x8xf32, #tpu.memory_space<vmem>>, vector<1x1x8x8xf32>
    %67 = vector.shape_cast %66 : vector<1x1x8x8xf32> to vector<8x8xf32>
    %68 = vector.shape_cast %65 : vector<8x8xf32> to vector<1x1x8x8xf32>
    tpu.vector_store %arg7[%c0_49, %c3, %c0_50, %c0_51], %68 {strides = array<i32>} : memref<1x4x8x8xf32, #tpu.memory_space<vmem>>, vector<1x1x8x8xf32>,
    %69 = vector.extract_strided_slice %28 {offsets = [0, 56], sizes = [8, 8], strides = [1, 1]} : vector<8x96xf32> to vector<8x8xf32>
    %c0_52 = arith.constant 0 : index
    %c3_53 = arith.constant 3 : index
    %c0_54 = arith.constant 0 : index
    %c0_55 = arith.constant 0 : index
    %70 = vector.load %arg8[%c0_52, %c3_53, %c0_54, %c0_55] : memref<1x4x8x8xf32, #tpu.memory_space<vmem>>, vector<1x1x8x8xf32>
    %71 = vector.shape_cast %70 : vector<1x1x8x8xf32> to vector<8x8xf32>
    %72 = vector.shape_cast %69 : vector<8x8xf32> to vector<1x1x8x8xf32>
    tpu.vector_store %arg8[%c0_52, %c3_53, %c0_54, %c0_55], %72 {strides = array<i32>} : memref<1x4x8x8xf32, #tpu.memory_space<vmem>>, vector<1x1x8x8xf32>,
    %73 = vector.extract_strided_slice %28 {offsets = [0, 88], sizes = [8, 8], strides = [1, 1]} : vector<8x96xf32> to vector<8x8xf32>
    %c0_56 = arith.constant 0 : index
    %c3_57 = arith.constant 3 : index
    %c0_58 = arith.constant 0 : index
    %c0_59 = arith.constant 0 : index
    %74 = vector.load %arg9[%c0_56, %c3_57, %c0_58, %c0_59] : memref<1x4x8x8xf32, #tpu.memory_space<vmem>>, vector<1x1x8x8xf32>
    %75 = vector.shape_cast %74 : vector<1x1x8x8xf32> to vector<8x8xf32>
    %76 = vector.shape_cast %73 : vector<8x8xf32> to vector<1x1x8x8xf32>
    tpu.vector_store %arg9[%c0_56, %c3_57, %c0_58, %c0_59], %76 {strides = array<i32>} : memref<1x4x8x8xf32, #tpu.memory_space<vmem>>, vector<1x1x8x8xf32>,
    return
  }
  func.func @transform_0(%arg0: i32, %arg1: i32) -> (i32, i32, i32) {
    %c0_i32 = arith.constant 0 : i32
    %c0_i32_0 = arith.constant 0 : i32
    return %arg0, %arg1, %c0_i32 : i32, i32, i32
  }
  func.func @transform_1(%arg0: i32, %arg1: i32) -> (i32, i32) {
    %c0_i32 = arith.constant 0 : i32
    %c0_i32_0 = arith.constant 0 : i32
    %c0_i32_1 = arith.constant 0 : i32
    return %c0_i32, %c0_i32_0 : i32, i32
  }
  func.func @transform_2(%arg0: i32, %arg1: i32) -> (i32, i32) {
    %c0_i32 = arith.constant 0 : i32
    %c0_i32_0 = arith.constant 0 : i32
    %c0_i32_1 = arith.constant 0 : i32
    return %c0_i32, %c0_i32_0 : i32, i32
  }
  func.func @transform_3(%arg0: i32, %arg1: i32) -> (i32, i32) {
    %c0_i32 = arith.constant 0 : i32
    %c0_i32_0 = arith.constant 0 : i32
    %c0_i32_1 = arith.constant 0 : i32
    return %c0_i32, %c0_i32_0 : i32, i32
  }
  func.func @transform_4(%arg0: i32, %arg1: i32) -> (i32, i32) {
    %c0_i32 = arith.constant 0 : i32
    %c0_i32_0 = arith.constant 0 : i32
    %c0_i32_1 = arith.constant 0 : i32
    return %c0_i32, %c0_i32_0 : i32, i32
  }
  func.func @transform_5(%arg0: i32, %arg1: i32) -> (i32, i32, i32, i32) {
    %c0_i32 = arith.constant 0 : i32
    %c0_i32_0 = arith.constant 0 : i32
    %c0_i32_1 = arith.constant 0 : i32
    return %arg0, %c0_i32, %arg1, %c0_i32_0 : i32, i32, i32, i32
  }
  func.func @transform_6(%arg0: i32, %arg1: i32) -> (i32, i32, i32, i32) {
    %c0_i32 = arith.constant 0 : i32
    %c0_i32_0 = arith.constant 0 : i32
    %c0_i32_1 = arith.constant 0 : i32
    return %arg0, %c0_i32, %arg1, %c0_i32_0 : i32, i32, i32, i32
  }
  func.func @transform_7(%arg0: i32, %arg1: i32) -> (i32, i32, i32, i32) {
    %c0_i32 = arith.constant 0 : i32
    %c0_i32_0 = arith.constant 0 : i32
    %c0_i32_1 = arith.constant 0 : i32
    return %arg0, %c0_i32, %arg1, %c0_i32_0 : i32, i32, i32, i32
  }
}

module attributes {stable_mosaic.version = 11 : i64} {
  func.func @_attn_out_kernel(%arg0: i32, %arg1: i32, %arg2: memref<1x4x8x8xf32, #tpu.memory_space<vmem>>, %arg3: memref<1x8x32xf32, #tpu.memory_space<vmem>>, %arg4: memref<32x32xf32, #tpu.memory_space<vmem>>, %arg5: memref<1x32xf32, #tpu.memory_space<vmem>>, %arg6: memref<1x8x32xf32, #tpu.memory_space<vmem>>) attributes {dimension_semantics = [#tpu.dimension_semantics<parallel>, #tpu.dimension_semantics<parallel>], iteration_bounds = array<i64: 2, 1>, scalar_prefetch = 0 : i64, scratch_operands = 0 : i64, tpu.core_type = #tpu.core_type<tc>, window_params = [{transform_indices = @transform_0, window_bounds = array<i64: 1, 4, 8, 8>}, {transform_indices = @transform_1, window_bounds = array<i64: 1, 8, 32>}, {pipeline_mode = #tpu.pipeline_mode<synchronous>, transform_indices = @transform_2, window_bounds = array<i64: 32, 32>}, {pipeline_mode = #tpu.pipeline_mode<synchronous>, transform_indices = @transform_3, window_bounds = array<i64: 1, 32>}, {transform_indices = @transform_4, window_bounds = array<i64: 1, 8, 32>}]} {
    %c0 = arith.constant 0 : index
    %c0_0 = arith.constant 0 : index
    %c0_1 = arith.constant 0 : index
    %c0_2 = arith.constant 0 : index
    %0 = vector.load %arg2[%c0, %c0_0, %c0_1, %c0_2] : memref<1x4x8x8xf32, #tpu.memory_space<vmem>>, vector<1x1x8x8xf32>
    %1 = vector.shape_cast %0 : vector<1x1x8x8xf32> to vector<8x8xf32>
    %c0_3 = arith.constant 0 : index
    %c1 = arith.constant 1 : index
    %c0_4 = arith.constant 0 : index
    %c0_5 = arith.constant 0 : index
    %2 = vector.load %arg2[%c0_3, %c1, %c0_4, %c0_5] : memref<1x4x8x8xf32, #tpu.memory_space<vmem>>, vector<1x1x8x8xf32>
    %3 = vector.shape_cast %2 : vector<1x1x8x8xf32> to vector<8x8xf32>
    %c0_6 = arith.constant 0 : index
    %c2 = arith.constant 2 : index
    %c0_7 = arith.constant 0 : index
    %c0_8 = arith.constant 0 : index
    %4 = vector.load %arg2[%c0_6, %c2, %c0_7, %c0_8] : memref<1x4x8x8xf32, #tpu.memory_space<vmem>>, vector<1x1x8x8xf32>
    %5 = vector.shape_cast %4 : vector<1x1x8x8xf32> to vector<8x8xf32>
    %c0_9 = arith.constant 0 : index
    %c3 = arith.constant 3 : index
    %c0_10 = arith.constant 0 : index
    %c0_11 = arith.constant 0 : index
    %6 = vector.load %arg2[%c0_9, %c3, %c0_10, %c0_11] : memref<1x4x8x8xf32, #tpu.memory_space<vmem>>, vector<1x1x8x8xf32>
    %7 = vector.shape_cast %6 : vector<1x1x8x8xf32> to vector<8x8xf32>
    %8 = tpu.concatenate %1, %3, %5, %7 in 1 : vector<8x8xf32>, vector<8x8xf32>, vector<8x8xf32>, vector<8x8xf32> -> vector<8x32xf32>
    %c0_12 = arith.constant 0 : index
    %c0_13 = arith.constant 0 : index
    %9 = vector.load %arg4[%c0_12, %c0_13] : memref<32x32xf32, #tpu.memory_space<vmem>>, vector<32x32xf32>
    %cst = arith.constant dense<0.000000e+00> : vector<8x32xf32>
    %10 = tpu.matmul %8, %9, %cst {dimension_numbers = #tpu.dot_dimension_numbers<[1], [0], [0], [1], [0, 0, 1, 1], [], []>} : vector<8x32xf32>, vector<32x32xf32>, vector<8x32xf32> -> vector<8x32xf32>
    %c0_14 = arith.constant 0 : index
    %c0_15 = arith.constant 0 : index
    %11 = vector.load %arg5[%c0_14, %c0_15] : memref<1x32xf32, #tpu.memory_space<vmem>>, vector<1x32xf32>
    %12 = vector.broadcast %11 : vector<1x32xf32> to vector<8x32xf32>
    %13 = arith.addf %10, %12 : vector<8x32xf32>
    %c0_16 = arith.constant 0 : index
    %c0_17 = arith.constant 0 : index
    %c0_18 = arith.constant 0 : index
    %14 = vector.load %arg3[%c0_16, %c0_17, %c0_18] : memref<1x8x32xf32, #tpu.memory_space<vmem>>, vector<1x8x32xf32>
    %15 = vector.shape_cast %14 : vector<1x8x32xf32> to vector<8x32xf32>
    %16 = arith.addf %15, %13 : vector<8x32xf32>
    %c0_19 = arith.constant 0 : index
    %c0_20 = arith.constant 0 : index
    %c0_21 = arith.constant 0 : index
    %17 = vector.load %arg6[%c0_19, %c0_20, %c0_21] : memref<1x8x32xf32, #tpu.memory_space<vmem>>, vector<1x8x32xf32>
    %18 = vector.shape_cast %17 : vector<1x8x32xf32> to vector<8x32xf32>
    %19 = vector.shape_cast %16 : vector<8x32xf32> to vector<1x8x32xf32>
    tpu.vector_store %arg6[%c0_19, %c0_20, %c0_21], %19 {strides = array<i32>} : memref<1x8x32xf32, #tpu.memory_space<vmem>>, vector<1x8x32xf32>,
    return
  }
  func.func @transform_0(%arg0: i32, %arg1: i32) -> (i32, i32, i32, i32) {
    %c0_i32 = arith.constant 0 : i32
    %c0_i32_0 = arith.constant 0 : i32
    %c0_i32_1 = arith.constant 0 : i32
    return %arg0, %c0_i32, %arg1, %c0_i32_0 : i32, i32, i32, i32
  }
  func.func @transform_1(%arg0: i32, %arg1: i32) -> (i32, i32, i32) {
    %c0_i32 = arith.constant 0 : i32
    %c0_i32_0 = arith.constant 0 : i32
    return %arg0, %arg1, %c0_i32 : i32, i32, i32
  }
  func.func @transform_2(%arg0: i32, %arg1: i32) -> (i32, i32) {
    %c0_i32 = arith.constant 0 : i32
    %c0_i32_0 = arith.constant 0 : i32
    %c0_i32_1 = arith.constant 0 : i32
    return %c0_i32, %c0_i32_0 : i32, i32
  }
  func.func @transform_3(%arg0: i32, %arg1: i32) -> (i32, i32) {
    %c0_i32 = arith.constant 0 : i32
    %c0_i32_0 = arith.constant 0 : i32
    %c0_i32_1 = arith.constant 0 : i32
    return %c0_i32, %c0_i32_0 : i32, i32
  }
  func.func @transform_4(%arg0: i32, %arg1: i32) -> (i32, i32, i32) {
    %c0_i32 = arith.constant 0 : i32
    %c0_i32_0 = arith.constant 0 : i32
    return %arg0, %arg1, %c0_i32 : i32, i32, i32
  }
}

module attributes {stable_mosaic.version = 11 : i64} {
  func.func @_ffn_in_kernel(%arg0: i32, %arg1: i32, %arg2: i32, %arg3: memref<1x8x32xf32, #tpu.memory_space<vmem>>, %arg4: memref<1x32xf32, #tpu.memory_space<vmem>>, %arg5: memref<1x32xf32, #tpu.memory_space<vmem>>, %arg6: memref<32x512xf32, #tpu.memory_space<vmem>>, %arg7: memref<1x512xf32, #tpu.memory_space<vmem>>, %arg8: memref<1x8x512xf32, #tpu.memory_space<vmem>>) attributes {dimension_semantics = [#tpu.dimension_semantics<parallel>, #tpu.dimension_semantics<parallel>, #tpu.dimension_semantics<parallel>], iteration_bounds = array<i64: 2, 1, 4>, scalar_prefetch = 0 : i64, scratch_operands = 0 : i64, tpu.core_type = #tpu.core_type<tc>, window_params = [{transform_indices = @transform_0, window_bounds = array<i64: 1, 8, 32>}, {pipeline_mode = #tpu.pipeline_mode<synchronous>, transform_indices = @transform_1, window_bounds = array<i64: 1, 32>}, {pipeline_mode = #tpu.pipeline_mode<synchronous>, transform_indices = @transform_2, window_bounds = array<i64: 1, 32>}, {transform_indices = @transform_3, window_bounds = array<i64: 32, 512>}, {transform_indices = @transform_4, window_bounds = array<i64: 1, 512>}, {transform_indices = @transform_5, window_bounds = array<i64: 1, 8, 512>}]} {
    %c0 = arith.constant 0 : index
    %c0_0 = arith.constant 0 : index
    %c0_1 = arith.constant 0 : index
    %0 = vector.load %arg3[%c0, %c0_0, %c0_1] : memref<1x8x32xf32, #tpu.memory_space<vmem>>, vector<1x8x32xf32>
    %1 = vector.shape_cast %0 : vector<1x8x32xf32> to vector<8x32xf32>
    %c0_2 = arith.constant 0 : index
    %c0_3 = arith.constant 0 : index
    %2 = vector.load %arg4[%c0_2, %c0_3] : memref<1x32xf32, #tpu.memory_space<vmem>>, vector<1x32xf32>
    %c0_4 = arith.constant 0 : index
    %c0_5 = arith.constant 0 : index
    %3 = vector.load %arg5[%c0_4, %c0_5] : memref<1x32xf32, #tpu.memory_space<vmem>>, vector<1x32xf32>
    %cst = arith.constant dense<0.000000e+00> : vector<8xf32>
    %4 = vector.multi_reduction <add>, %1, %cst [1] : vector<8x32xf32> to vector<8xf32>
    %5 = vector.shape_cast %4 : vector<8xf32> to vector<8x1xf32>
    %cst_6 = arith.constant 3.200000e+01 : f32
    %6 = vector.broadcast %cst_6 : f32 to vector<8x1xf32>
    %7 = arith.divf %5, %6 : vector<8x1xf32>
    %8 = vector.broadcast %7 : vector<8x1xf32> to vector<8x32xf32>
    %9 = arith.subf %1, %8 : vector<8x32xf32>
    %10 = arith.mulf %9, %9 : vector<8x32xf32>
    %cst_7 = arith.constant dense<0.000000e+00> : vector<8xf32>
    %11 = vector.multi_reduction <add>, %10, %cst_7 [1] : vector<8x32xf32> to vector<8xf32>
    %12 = vector.shape_cast %11 : vector<8xf32> to vector<8x1xf32>
    %cst_8 = arith.constant 3.100000e+01 : f32
    %13 = vector.broadcast %cst_8 : f32 to vector<8x1xf32>
    %14 = arith.divf %12, %13 : vector<8x1xf32>
    %15 = math.sqrt %14 : vector<8x1xf32>
    %cst_9 = arith.constant 9.99999997E-7 : f32
    %16 = vector.broadcast %cst_9 : f32 to vector<8x1xf32>
    %17 = arith.addf %15, %16 : vector<8x1xf32>
    %18 = vector.broadcast %17 : vector<8x1xf32> to vector<8x32xf32>
    %19 = arith.divf %9, %18 : vector<8x32xf32>
    %20 = vector.broadcast %2 : vector<1x32xf32> to vector<8x32xf32>
    %21 = arith.mulf %20, %19 : vector<8x32xf32>
    %22 = vector.broadcast %3 : vector<1x32xf32> to vector<8x32xf32>
    %23 = arith.addf %21, %22 : vector<8x32xf32>
    %c0_10 = arith.constant 0 : index
    %c0_11 = arith.constant 0 : index
    %24 = vector.load %arg6[%c0_10, %c0_11] : memref<32x512xf32, #tpu.memory_space<vmem>>, vector<32x512xf32>
    %cst_12 = arith.constant dense<0.000000e+00> : vector<8x512xf32>
    %25 = tpu.matmul %23, %24, %cst_12 {dimension_numbers = #tpu.dot_dimension_numbers<[1], [0], [0], [1], [0, 0, 1, 1], [], []>} : vector<8x32xf32>, vector<32x512xf32>, vector<8x512xf32> -> vector<8x512xf32>
    %c0_13 = arith.constant 0 : index
    %c0_14 = arith.constant 0 : index
    %26 = vector.load %arg7[%c0_13, %c0_14] : memref<1x512xf32, #tpu.memory_space<vmem>>, vector<1x512xf32>
    %27 = vector.broadcast %26 : vector<1x512xf32> to vector<8x512xf32>
    %28 = arith.addf %25, %27 : vector<8x512xf32>
    %cst_15 = arith.constant 0.000000e+00 : f32
    %29 = vector.broadcast %cst_15 : f32 to vector<8x512xf32>
    %30 = arith.maximumf %28, %29 : vector<8x512xf32>
    %c0_16 = arith.constant 0 : index
    %c0_17 = arith.constant 0 : index
    %c0_18 = arith.constant 0 : index
    %31 = vector.load %arg8[%c0_16, %c0_17, %c0_18] : memref<1x8x512xf32, #tpu.memory_space<vmem>>, vector<1x8x512xf32>
    %32 = vector.shape_cast %31 : vector<1x8x512xf32> to vector<8x512xf32>
    %33 = vector.shape_cast %30 : vector<8x512xf32> to vector<1x8x512xf32>
    tpu.vector_store %arg8[%c0_16, %c0_17, %c0_18], %33 {strides = array<i32>} : memref<1x8x512xf32, #tpu.memory_space<vmem>>, vector<1x8x512xf32>,
    return
  }
  func.func @transform_0(%arg0: i32, %arg1: i32, %arg2: i32) -> (i32, i32, i32) {
    %c0_i32 = arith.constant 0 : i32
    %c0_i32_0 = arith.constant 0 : i32
    return %arg0, %arg1, %c0_i32 : i32, i32, i32
  }
  func.func @transform_1(%arg0: i32, %arg1: i32, %arg2: i32) -> (i32, i32) {
    %c0_i32 = arith.constant 0 : i32
    %c0_i32_0 = arith.constant 0 : i32
    %c0_i32_1 = arith.constant 0 : i32
    return %c0_i32, %c0_i32_0 : i32, i32
  }
  func.func @transform_2(%arg0: i32, %arg1: i32, %arg2: i32) -> (i32, i32) {
    %c0_i32 = arith.constant 0 : i32
    %c0_i32_0 = arith.constant 0 : i32
    %c0_i32_1 = arith.constant 0 : i32
    return %c0_i32, %c0_i32_0 : i32, i32
  }
  func.func @transform_3(%arg0: i32, %arg1: i32, %arg2: i32) -> (i32, i32) {
    %c0_i32 = arith.constant 0 : i32
    %c0_i32_0 = arith.constant 0 : i32
    return %c0_i32, %arg2 : i32, i32
  }
  func.func @transform_4(%arg0: i32, %arg1: i32, %arg2: i32) -> (i32, i32) {
    %c0_i32 = arith.constant 0 : i32
    %c0_i32_0 = arith.constant 0 : i32
    return %c0_i32, %arg2 : i32, i32
  }
  func.func @transform_5(%arg0: i32, %arg1: i32, %arg2: i32) -> (i32, i32, i32) {
    %c0_i32 = arith.constant 0 : i32
    return %arg0, %arg1, %arg2 : i32, i32, i32
  }
}

module attributes {stable_mosaic.version = 11 : i64} {
  func.func @_ffn_out_kernel(%arg0: i32, %arg1: i32, %arg2: i32, %arg3: memref<1x8x512xf32, #tpu.memory_space<vmem>>, %arg4: memref<512x32xf32, #tpu.memory_space<vmem>>, %arg5: memref<1x32xf32, #tpu.memory_space<vmem>>, %arg6: memref<1x8x32xf32, #tpu.memory_space<vmem>>, %arg7: memref<1x8x32xf32, #tpu.memory_space<vmem>>, %arg8: memref<8x32xf32, #tpu.memory_space<vmem>>) attributes {dimension_semantics = [#tpu.dimension_semantics<parallel>, #tpu.dimension_semantics<parallel>, #tpu.dimension_semantics<arbitrary>], iteration_bounds = array<i64: 2, 1, 4>, scalar_prefetch = 0 : i64, scratch_operands = 1 : i64, tpu.core_type = #tpu.core_type<tc>, window_params = [{transform_indices = @transform_0, window_bounds = array<i64: 1, 8, 512>}, {transform_indices = @transform_1, window_bounds = array<i64: 512, 32>}, {pipeline_mode = #tpu.pipeline_mode<synchronous>, transform_indices = @transform_2, window_bounds = array<i64: 1, 32>}, {transform_indices = @transform_3, window_bounds = array<i64: 1, 8, 32>}, {transform_indices = @transform_4, window_bounds = array<i64: 1, 8, 32>}]} {
    %c0_i32 = arith.constant 0 : i32
    %0 = arith.cmpi eq, %arg2, %c0_i32 : i32
    %1 = arith.extui %0 : i1 to i32
    %c0_i32_0 = arith.constant 0 : i32
    %2 = arith.cmpi ne, %1, %c0_i32_0 : i32
    scf.if %2 {
      %c0_10 = arith.constant 0 : index
      %c0_11 = arith.constant 0 : index
      %c0_12 = arith.constant 0 : index
      %13 = vector.load %arg6[%c0_10, %c0_11, %c0_12] : memref<1x8x32xf32, #tpu.memory_space<vmem>>, vector<1x8x32xf32>
      %14 = vector.shape_cast %13 : vector<1x8x32xf32> to vector<8x32xf32>
      %c0_13 = arith.constant 0 : index
      %c0_14 = arith.constant 0 : index
      %15 = vector.load %arg5[%c0_13, %c0_14] : memref<1x32xf32, #tpu.memory_space<vmem>>, vector<1x32xf32>
      %16 = vector.broadcast %15 : vector<1x32xf32> to vector<8x32xf32>
      %17 = arith.addf %14, %16 : vector<8x32xf32>
      %c0_15 = arith.constant 0 : index
      %c0_16 = arith.constant 0 : index
      %18 = vector.load %arg8[%c0_15, %c0_16] : memref<8x32xf32, #tpu.memory_space<vmem>>, vector<8x32xf32>
      tpu.vector_store %arg8[%c0_15, %c0_16], %17 {strides = array<i32>} : memref<8x32xf32, #tpu.memory_space<vmem>>, vector<8x32xf32>,
    } else {
    }
    %c0 = arith.constant 0 : index
    %c0_1 = arith.constant 0 : index
    %3 = vector.load %arg8[%c0, %c0_1] : memref<8x32xf32, #tpu.memory_space<vmem>>, vector<8x32xf32>
    %c0_2 = arith.constant 0 : index
    %c0_3 = arith.constant 0 : index
    %c0_4 = arith.constant 0 : index
    %4 = vector.load %arg3[%c0_2, %c0_3, %c0_4] : memref<1x8x512xf32, #tpu.memory_space<vmem>>, vector<1x8x512xf32>
    %5 = vector.shape_cast %4 : vector<1x8x512xf32> to vector<8x512xf32>
    %c0_5 = arith.constant 0 : index
    %c0_6 = arith.constant 0 : index
    %6 = vector.load %arg4[%c0_5, %c0_6] : memref<512x32xf32, #tpu.memory_space<vmem>>, vector<512x32xf32>
    %cst = arith.constant dense<0.000000e+00> : vector<8x32xf32>
    %7 = tpu.matmul %5, %6, %cst {dimension_numbers = #tpu.dot_dimension_numbers<[1], [0], [0], [1], [0, 0, 1, 1], [], []>} : vector<8x512xf32>, vector<512x32xf32>, vector<8x32xf32> -> vector<8x32xf32>
    %8 = arith.addf %3, %7 : vector<8x32xf32>
    %c0_7 = arith.constant 0 : index
    %c0_8 = arith.constant 0 : index
    %9 = vector.load %arg8[%c0_7, %c0_8] : memref<8x32xf32, #tpu.memory_space<vmem>>, vector<8x32xf32>
    tpu.vector_store %arg8[%c0_7, %c0_8], %8 {strides = array<i32>} : memref<8x32xf32, #tpu.memory_space<vmem>>, vector<8x32xf32>,
    %c3_i32 = arith.constant 3 : i32
    %10 = arith.cmpi eq, %arg2, %c3_i32 : i32
    %11 = arith.extui %10 : i1 to i32
    %c0_i32_9 = arith.constant 0 : i32
    %12 = arith.cmpi ne, %11, %c0_i32_9 : i32
    scf.if %12 {
      %c0_10 = arith.constant 0 : index
      %c0_11 = arith.constant 0 : index
      %13 = vector.load %arg8[%c0_10, %c0_11] : memref<8x32xf32, #tpu.memory_space<vmem>>, vector<8x32xf32>
      %c0_12 = arith.constant 0 : index
      %c0_13 = arith.constant 0 : index
      %c0_14 = arith.constant 0 : index
      %14 = vector.load %arg7[%c0_12, %c0_13, %c0_14] : memref<1x8x32xf32, #tpu.memory_space<vmem>>, vector<1x8x32xf32>
      %15 = vector.shape_cast %14 : vector<1x8x32xf32> to vector<8x32xf32>
      %16 = vector.shape_cast %13 : vector<8x32xf32> to vector<1x8x32xf32>
      tpu.vector_store %arg7[%c0_12, %c0_13, %c0_14], %16 {strides = array<i32>} : memref<1x8x32xf32, #tpu.memory_space<vmem>>, vector<1x8x32xf32>,
    } else {
    }
    return
  }
  func.func @transform_0(%arg0: i32, %arg1: i32, %arg2: i32) -> (i32, i32, i32) {
    %c0_i32 = arith.constant 0 : i32
    return %arg0, %arg1, %arg2 : i32, i32, i32
  }
  func.func @transform_1(%arg0: i32, %arg1: i32, %arg2: i32) -> (i32, i32) {
    %c0_i32 = arith.constant 0 : i32
    %c0_i32_0 = arith.constant 0 : i32
    return %arg2, %c0_i32 : i32, i32
  }
  func.func @transform_2(%arg0: i32, %arg1: i32, %arg2: i32) -> (i32, i32) {
    %c0_i32 = arith.constant 0 : i32
    %c0_i32_0 = arith.constant 0 : i32
    %c0_i32_1 = arith.constant 0 : i32
    return %c0_i32, %c0_i32_0 : i32, i32
  }
  func.func @transform_3(%arg0: i32, %arg1: i32, %arg2: i32) -> (i32, i32, i32) {
    %c0_i32 = arith.constant 0 : i32
    %c0_i32_0 = arith.constant 0 : i32
    return %arg0, %arg1, %c0_i32 : i32, i32, i32
  }
  func.func @transform_4(%arg0: i32, %arg1: i32, %arg2: i32) -> (i32, i32, i32) {
    %c0_i32 = arith.constant 0 : i32
    %c0_i32_0 = arith.constant 0 : i32
    return %arg0, %arg1, %c0_i32 : i32, i32, i32
  }
}

module attributes {stable_mosaic.version = 11 : i64} {
  func.func @_ffn_in_kernel(%arg0: i32, %arg1: i32, %arg2: i32, %arg3: memref<1x8x32xf32, #tpu.memory_space<vmem>>, %arg4: memref<1x32xf32, #tpu.memory_space<vmem>>, %arg5: memref<1x32xf32, #tpu.memory_space<vmem>>, %arg6: memref<32x512xf32, #tpu.memory_space<vmem>>, %arg7: memref<1x512xf32, #tpu.memory_space<vmem>>, %arg8: memref<1x8x512xf32, #tpu.memory_space<vmem>>) attributes {dimension_semantics = [#tpu.dimension_semantics<parallel>, #tpu.dimension_semantics<parallel>, #tpu.dimension_semantics<parallel>], iteration_bounds = array<i64: 2, 1, 4>, scalar_prefetch = 0 : i64, scratch_operands = 0 : i64, tpu.core_type = #tpu.core_type<tc>, window_params = [{transform_indices = @transform_0, window_bounds = array<i64: 1, 8, 32>}, {pipeline_mode = #tpu.pipeline_mode<synchronous>, transform_indices = @transform_1, window_bounds = array<i64: 1, 32>}, {pipeline_mode = #tpu.pipeline_mode<synchronous>, transform_indices = @transform_2, window_bounds = array<i64: 1, 32>}, {transform_indices = @transform_3, window_bounds = array<i64: 32, 512>}, {transform_indices = @transform_4, window_bounds = array<i64: 1, 512>}, {transform_indices = @transform_5, window_bounds = array<i64: 1, 8, 512>}]} {
    %c0 = arith.constant 0 : index
    %c0_0 = arith.constant 0 : index
    %c0_1 = arith.constant 0 : index
    %0 = vector.load %arg3[%c0, %c0_0, %c0_1] : memref<1x8x32xf32, #tpu.memory_space<vmem>>, vector<1x8x32xf32>
    %1 = vector.shape_cast %0 : vector<1x8x32xf32> to vector<8x32xf32>
    %c0_2 = arith.constant 0 : index
    %c0_3 = arith.constant 0 : index
    %2 = vector.load %arg4[%c0_2, %c0_3] : memref<1x32xf32, #tpu.memory_space<vmem>>, vector<1x32xf32>
    %c0_4 = arith.constant 0 : index
    %c0_5 = arith.constant 0 : index
    %3 = vector.load %arg5[%c0_4, %c0_5] : memref<1x32xf32, #tpu.memory_space<vmem>>, vector<1x32xf32>
    %cst = arith.constant dense<0.000000e+00> : vector<8xf32>
    %4 = vector.multi_reduction <add>, %1, %cst [1] : vector<8x32xf32> to vector<8xf32>
    %5 = vector.shape_cast %4 : vector<8xf32> to vector<8x1xf32>
    %cst_6 = arith.constant 3.200000e+01 : f32
    %6 = vector.broadcast %cst_6 : f32 to vector<8x1xf32>
    %7 = arith.divf %5, %6 : vector<8x1xf32>
    %8 = vector.broadcast %7 : vector<8x1xf32> to vector<8x32xf32>
    %9 = arith.subf %1, %8 : vector<8x32xf32>
    %10 = arith.mulf %9, %9 : vector<8x32xf32>
    %cst_7 = arith.constant dense<0.000000e+00> : vector<8xf32>
    %11 = vector.multi_reduction <add>, %10, %cst_7 [1] : vector<8x32xf32> to vector<8xf32>
    %12 = vector.shape_cast %11 : vector<8xf32> to vector<8x1xf32>
    %cst_8 = arith.constant 3.100000e+01 : f32
    %13 = vector.broadcast %cst_8 : f32 to vector<8x1xf32>
    %14 = arith.divf %12, %13 : vector<8x1xf32>
    %15 = math.sqrt %14 : vector<8x1xf32>
    %cst_9 = arith.constant 9.99999997E-7 : f32
    %16 = vector.broadcast %cst_9 : f32 to vector<8x1xf32>
    %17 = arith.addf %15, %16 : vector<8x1xf32>
    %18 = vector.broadcast %17 : vector<8x1xf32> to vector<8x32xf32>
    %19 = arith.divf %9, %18 : vector<8x32xf32>
    %20 = vector.broadcast %2 : vector<1x32xf32> to vector<8x32xf32>
    %21 = arith.mulf %20, %19 : vector<8x32xf32>
    %22 = vector.broadcast %3 : vector<1x32xf32> to vector<8x32xf32>
    %23 = arith.addf %21, %22 : vector<8x32xf32>
    %c0_10 = arith.constant 0 : index
    %c0_11 = arith.constant 0 : index
    %24 = vector.load %arg6[%c0_10, %c0_11] : memref<32x512xf32, #tpu.memory_space<vmem>>, vector<32x512xf32>
    %cst_12 = arith.constant dense<0.000000e+00> : vector<8x512xf32>
    %25 = tpu.matmul %23, %24, %cst_12 {dimension_numbers = #tpu.dot_dimension_numbers<[1], [0], [0], [1], [0, 0, 1, 1], [], []>} : vector<8x32xf32>, vector<32x512xf32>, vector<8x512xf32> -> vector<8x512xf32>
    %c0_13 = arith.constant 0 : index
    %c0_14 = arith.constant 0 : index
    %26 = vector.load %arg7[%c0_13, %c0_14] : memref<1x512xf32, #tpu.memory_space<vmem>>, vector<1x512xf32>
    %27 = vector.broadcast %26 : vector<1x512xf32> to vector<8x512xf32>
    %28 = arith.addf %25, %27 : vector<8x512xf32>
    %cst_15 = arith.constant 0.000000e+00 : f32
    %29 = vector.broadcast %cst_15 : f32 to vector<8x512xf32>
    %30 = arith.maximumf %28, %29 : vector<8x512xf32>
    %c0_16 = arith.constant 0 : index
    %c0_17 = arith.constant 0 : index
    %c0_18 = arith.constant 0 : index
    %31 = vector.load %arg8[%c0_16, %c0_17, %c0_18] : memref<1x8x512xf32, #tpu.memory_space<vmem>>, vector<1x8x512xf32>
    %32 = vector.shape_cast %31 : vector<1x8x512xf32> to vector<8x512xf32>
    %33 = vector.shape_cast %30 : vector<8x512xf32> to vector<1x8x512xf32>
    tpu.vector_store %arg8[%c0_16, %c0_17, %c0_18], %33 {strides = array<i32>} : memref<1x8x512xf32, #tpu.memory_space<vmem>>, vector<1x8x512xf32>,
    return
  }
  func.func @transform_0(%arg0: i32, %arg1: i32, %arg2: i32) -> (i32, i32, i32) {
    %c0_i32 = arith.constant 0 : i32
    %c0_i32_0 = arith.constant 0 : i32
    return %arg0, %arg1, %c0_i32 : i32, i32, i32
  }
  func.func @transform_1(%arg0: i32, %arg1: i32, %arg2: i32) -> (i32, i32) {
    %c0_i32 = arith.constant 0 : i32
    %c0_i32_0 = arith.constant 0 : i32
    %c0_i32_1 = arith.constant 0 : i32
    return %c0_i32, %c0_i32_0 : i32, i32
  }
  func.func @transform_2(%arg0: i32, %arg1: i32, %arg2: i32) -> (i32, i32) {
    %c0_i32 = arith.constant 0 : i32
    %c0_i32_0 = arith.constant 0 : i32
    %c0_i32_1 = arith.constant 0 : i32
    return %c0_i32, %c0_i32_0 : i32, i32
  }
  func.func @transform_3(%arg0: i32, %arg1: i32, %arg2: i32) -> (i32, i32) {
    %c0_i32 = arith.constant 0 : i32
    %c0_i32_0 = arith.constant 0 : i32
    return %c0_i32, %arg2 : i32, i32
  }
  func.func @transform_4(%arg0: i32, %arg1: i32, %arg2: i32) -> (i32, i32) {
    %c0_i32 = arith.constant 0 : i32
    %c0_i32_0 = arith.constant 0 : i32
    return %c0_i32, %arg2 : i32, i32
  }
  func.func @transform_5(%arg0: i32, %arg1: i32, %arg2: i32) -> (i32, i32, i32) {
    %c0_i32 = arith.constant 0 : i32
    return %arg0, %arg1, %arg2 : i32, i32, i32
  }
}

module attributes {stable_mosaic.version = 11 : i64} {
  func.func @_norm_heads_kernel(%arg0: i32, %arg1: i32, %arg2: memref<1x8x32xf32, #tpu.memory_space<vmem>>, %arg3: memref<1x32xf32, #tpu.memory_space<vmem>>, %arg4: memref<1x32xf32, #tpu.memory_space<vmem>>, %arg5: memref<32x2xf32, #tpu.memory_space<vmem>>, %arg6: memref<1x2xf32, #tpu.memory_space<vmem>>, %arg7: memref<1x8x2xf32, #tpu.memory_space<vmem>>) attributes {dimension_semantics = [#tpu.dimension_semantics<parallel>, #tpu.dimension_semantics<parallel>], iteration_bounds = array<i64: 2, 1>, scalar_prefetch = 0 : i64, scratch_operands = 0 : i64, tpu.core_type = #tpu.core_type<tc>, window_params = [{transform_indices = @transform_0, window_bounds = array<i64: 1, 8, 32>}, {pipeline_mode = #tpu.pipeline_mode<synchronous>, transform_indices = @transform_1, window_bounds = array<i64: 1, 32>}, {pipeline_mode = #tpu.pipeline_mode<synchronous>, transform_indices = @transform_2, window_bounds = array<i64: 1, 32>}, {pipeline_mode = #tpu.pipeline_mode<synchronous>, transform_indices = @transform_3, window_bounds = array<i64: 32, 2>}, {pipeline_mode = #tpu.pipeline_mode<synchronous>, transform_indices = @transform_4, window_bounds = array<i64: 1, 2>}, {transform_indices = @transform_5, window_bounds = array<i64: 1, 8, 2>}]} {
    %c0 = arith.constant 0 : index
    %c0_0 = arith.constant 0 : index
    %c0_1 = arith.constant 0 : index
    %0 = vector.load %arg2[%c0, %c0_0, %c0_1] : memref<1x8x32xf32, #tpu.memory_space<vmem>>, vector<1x8x32xf32>
    %1 = vector.shape_cast %0 : vector<1x8x32xf32> to vector<8x32xf32>
    %c0_2 = arith.constant 0 : index
    %c0_3 = arith.constant 0 : index
    %2 = vector.load %arg3[%c0_2, %c0_3] : memref<1x32xf32, #tpu.memory_space<vmem>>, vector<1x32xf32>
    %c0_4 = arith.constant 0 : index
    %c0_5 = arith.constant 0 : index
    %3 = vector.load %arg4[%c0_4, %c0_5] : memref<1x32xf32, #tpu.memory_space<vmem>>, vector<1x32xf32>
    %cst = arith.constant dense<0.000000e+00> : vector<8xf32>
    %4 = vector.multi_reduction <add>, %1, %cst [1] : vector<8x32xf32> to vector<8xf32>
    %5 = vector.shape_cast %4 : vector<8xf32> to vector<8x1xf32>
    %cst_6 = arith.constant 3.200000e+01 : f32
    %6 = vector.broadcast %cst_6 : f32 to vector<8x1xf32>
    %7 = arith.divf %5, %6 : vector<8x1xf32>
    %8 = vector.broadcast %7 : vector<8x1xf32> to vector<8x32xf32>
    %9 = arith.subf %1, %8 : vector<8x32xf32>
    %10 = arith.mulf %9, %9 : vector<8x32xf32>
    %cst_7 = arith.constant dense<0.000000e+00> : vector<8xf32>
    %11 = vector.multi_reduction <add>, %10, %cst_7 [1] : vector<8x32xf32> to vector<8xf32>
    %12 = vector.shape_cast %11 : vector<8xf32> to vector<8x1xf32>
    %cst_8 = arith.constant 3.100000e+01 : f32
    %13 = vector.broadcast %cst_8 : f32 to vector<8x1xf32>
    %14 = arith.divf %12, %13 : vector<8x1xf32>
    %15 = math.sqrt %14 : vector<8x1xf32>
    %cst_9 = arith.constant 9.99999997E-7 : f32
    %16 = vector.broadcast %cst_9 : f32 to vector<8x1xf32>
    %17 = arith.addf %15, %16 : vector<8x1xf32>
    %18 = vector.broadcast %17 : vector<8x1xf32> to vector<8x32xf32>
    %19 = arith.divf %9, %18 : vector<8x32xf32>
    %20 = vector.broadcast %2 : vector<1x32xf32> to vector<8x32xf32>
    %21 = arith.mulf %20, %19 : vector<8x32xf32>
    %22 = vector.broadcast %3 : vector<1x32xf32> to vector<8x32xf32>
    %23 = arith.addf %21, %22 : vector<8x32xf32>
    %c0_10 = arith.constant 0 : index
    %c0_11 = arith.constant 0 : index
    %24 = vector.load %arg5[%c0_10, %c0_11] : memref<32x2xf32, #tpu.memory_space<vmem>>, vector<32x2xf32>
    %cst_12 = arith.constant dense<0.000000e+00> : vector<8x2xf32>
    %25 = tpu.matmul %23, %24, %cst_12 {dimension_numbers = #tpu.dot_dimension_numbers<[1], [0], [0], [1], [0, 0, 1, 1], [], []>} : vector<8x32xf32>, vector<32x2xf32>, vector<8x2xf32> -> vector<8x2xf32>
    %c0_13 = arith.constant 0 : index
    %c0_14 = arith.constant 0 : index
    %26 = vector.load %arg6[%c0_13, %c0_14] : memref<1x2xf32, #tpu.memory_space<vmem>>, vector<1x2xf32>
    %27 = vector.broadcast %26 : vector<1x2xf32> to vector<8x2xf32>
    %28 = arith.addf %25, %27 : vector<8x2xf32>
    %c0_15 = arith.constant 0 : index
    %c0_16 = arith.constant 0 : index
    %c0_17 = arith.constant 0 : index
    %29 = vector.load %arg7[%c0_15, %c0_16, %c0_17] : memref<1x8x2xf32, #tpu.memory_space<vmem>>, vector<1x8x2xf32>
    %30 = vector.shape_cast %29 : vector<1x8x2xf32> to vector<8x2xf32>
    %31 = vector.shape_cast %28 : vector<8x2xf32> to vector<1x8x2xf32>
    tpu.vector_store %arg7[%c0_15, %c0_16, %c0_17], %31 {strides = array<i32>} : memref<1x8x2xf32, #tpu.memory_space<vmem>>, vector<1x8x2xf32>,
    return
  }
  func.func @transform_0(%arg0: i32, %arg1: i32) -> (i32, i32, i32) {
    %c0_i32 = arith.constant 0 : i32
    %c0_i32_0 = arith.constant 0 : i32
    return %arg0, %arg1, %c0_i32 : i32, i32, i32
  }
  func.func @transform_1(%arg0: i32, %arg1: i32) -> (i32, i32) {
    %c0_i32 = arith.constant 0 : i32
    %c0_i32_0 = arith.constant 0 : i32
    %c0_i32_1 = arith.constant 0 : i32
    return %c0_i32, %c0_i32_0 : i32, i32
  }
  func.func @transform_2(%arg0: i32, %arg1: i32) -> (i32, i32) {
    %c0_i32 = arith.constant 0 : i32
    %c0_i32_0 = arith.constant 0 : i32
    %c0_i32_1 = arith.constant 0 : i32
    return %c0_i32, %c0_i32_0 : i32, i32
  }
  func.func @transform_3(%arg0: i32, %arg1: i32) -> (i32, i32) {
    %c0_i32 = arith.constant 0 : i32
    %c0_i32_0 = arith.constant 0 : i32
    %c0_i32_1 = arith.constant 0 : i32
    return %c0_i32, %c0_i32_0 : i32, i32
  }
  func.func @transform_4(%arg0: i32, %arg1: i32) -> (i32, i32) {
    %c0_i32 = arith.constant 0 : i32
    %c0_i32_0 = arith.constant 0 : i32
    %c0_i32_1 = arith.constant 0 : i32
    return %c0_i32, %c0_i32_0 : i32, i32
  }
  func.func @transform_5(%arg0: i32, %arg1: i32) -> (i32, i32, i32) {
    %c0_i32 = arith.constant 0 : i32
    %c0_i32_0 = arith.constant 0 : i32
    return %arg0, %arg1, %c0_i32 : i32, i32, i32
  }
}

</mosaic_0001>

<llo_original>
// kernel: uncertainty_encoder_forward.12
$region0: #{uncertainty_encoder_forward.12}
  #allocation0 [shape = 'u32[]', space=smem, size = 0x4, offset = 0x4, fixed_abs, tag = 'smem constant byte address 0x4 - core index']
  #allocation1 [shape = 'u32[72,128]{1,0:T(1,128)}', space=vmem, size = 0x9000, scoped, tag = 'internal scratch']
  %s0 = inlined_call_operand.vmem [shape: f32[2,8,16], index: 0, kind: input, shape index: {}]
  %s1 = inlined_call_operand.vmem [shape: f32[16,32], index: 1, kind: input, shape index: {}]
  %s2 = inlined_call_operand.vmem [shape: f32[1,32], index: 2, kind: input, shape index: {}]
  %s3 = inlined_call_operand.vmem [shape: f32[8,32], index: 3, kind: input, shape index: {}]
  %s4 = inlined_call_operand.vmem [shape: f32[2,8,32], index: 4, kind: output, shape index: {}]
  %s5 = sld [smem:[#allocation0]]
  $region49: #{uncertainty_encoder_forward.12} parent=0
    _
  %s7 = ssub.s32 1, %s5
  %s8 = scalar_select 0, %s7, %s5
  loop: start=0, step=1, limit=4
  $region2: #{uncertainty_encoder_forward.12} parent=0 // loop_pre_header
    _
  $region3: #{uncertainty_encoder_forward.12} parent=0 // loop_header
    %s10 = sphi 0, %s14
    %p11 = scmp.ge.s32.totalorder %s10, 4
    %s17 = sphi 0, %s29
    %s18 = sphi 0, %s25
    %s19 = sphi 0, %s17
    %s20 = sphi 0, %s18
    %s21 = sphi 0, %s19
    %s22 = sphi 0, %s20
    %s34 = sphi 0, %s36
    %s37 = sphi 0, %s34
    %s38 = sphi 0, %s37
    %s54 = sphi 0, %s38
    %s58 = sphi 0, %s58
    %s60 = sphi 0, %s58
    %s61 = sphi 0, %s60
    %s75 = sphi 0, %s61
    %s79 = sphi 0, %s79
    %s81 = sphi 0, %s79
    %s82 = sphi 0, %s81
    %s96 = sphi 0, %s82
    %s102 = sphi 0, %s104
    %s105 = sphi 0, %s102
    %s106 = sphi 0, %s105
    %s122 = sphi 0, %s106
    %s130 = sphi 0, %s132
    %s133 = sphi 0, %s130
    %s134 = sphi 0, %s133
    %s150 = sphi 0, %s134
  $region4: #{uncertainty_encoder_forward.12} parent=0 // loop_header_branch
    %13 = sbr.rel (%p11) target = $region8
  $region5: #{uncertainty_encoder_forward.12} parent=0 // loop_body
    %s15 = ssub.s32 %s10, 1
    %s16 = ssub.s32 %s10, 2
    %s23 = sadd.s32 1, %s18
    %p24 = scmp.ge.s32.totalorder %s23, 1
    %s25 = scalar_select %p24, 0, %s23
    %s26 = sadd.s32 1, %s17
    %s27 = scalar_select %p24, %s26, %s17
    %p28 = scmp.ge.s32.totalorder %s27, 2
    %s29 = scalar_select %p28, 0, %s27
    %s30 = ssub.s32 %s17, %s29
    %s31 = ssub.s32 %s18, %s25
    %s32 = sor.u32 %s30, %s31
    %p33 = scmp.eq.s32.totalorder %s32, 0
    %s35 = sadd.s32 %s34, 1
    %s36 = scalar_select %p33, %s34, %s35
    %p39 = pneg %p33
    %p40 = scmp.eq.s32.totalorder %s10, 1
    %p41 = por %p39, %p40
    %p42 = scmp.ne.s32.totalorder %s34, %s37
    %p43 = scmp.eq.s32.totalorder %s10, 0
    %p44 = por %p42, %p43
    %p45 = scmp.ne.s32.totalorder %s34, %s37
    %p46 = scmp.eq.s32.totalorder %s15, 1
    %p47 = por %p45, %p46
    %p48 = scmp.ne.s32.totalorder %s37, %s38
    %p49 = scmp.eq.s32.totalorder %s15, 0
    %p50 = por %p48, %p49
    %p51 = scmp.ne.s32.totalorder %s37, %s38
    %p52 = scmp.eq.s32.totalorder %s16, 1
    %p53 = por %p51, %p52
    %p55 = scmp.ne.s32.totalorder %s38, %s54
    %p56 = scmp.eq.s32.totalorder %s16, 0
    %p57 = por %p55, %p56
    %s59 = sadd.s32 %s58, 1
    %p62 = scmp.eq.s32.totalorder %s10, 1
    %p63 = scmp.ne.s32.totalorder %s58, %s60
    %p64 = scmp.eq.s32.totalorder %s10, 0
    %p65 = por %p63, %p64
    %p66 = scmp.ne.s32.totalorder %s58, %s60
    %p67 = scmp.eq.s32.totalorder %s15, 1
    %p68 = por %p66, %p67
    %p69 = scmp.ne.s32.totalorder %s60, %s61
    %p70 = scmp.eq.s32.totalorder %s15, 0
    %p71 = por %p69, %p70
    %p72 = scmp.ne.s32.totalorder %s60, %s61
    %p73 = scmp.eq.s32.totalorder %s16, 1
    %p74 = por %p72, %p73
    %p76 = scmp.ne.s32.totalorder %s61, %s75
    %p77 = scmp.eq.s32.totalorder %s16, 0
    %p78 = por %p76, %p77
    %s80 = sadd.s32 %s79, 1
    %p83 = scmp.eq.s32.totalorder %s10, 1
    %p84 = scmp.ne.s32.totalorder %s79, %s81
    %p85 = scmp.eq.s32.totalorder %s10, 0
    %p86 = por %p84, %p85
    %p87 = scmp.ne.s32.totalorder %s79, %s81
    %p88 = scmp.eq.s32.totalorder %s15, 1
    %p89 = por %p87, %p88
    %p90 = scmp.ne.s32.totalorder %s81, %s82
    %p91 = scmp.eq.s32.totalorder %s15, 0
    %p92 = por %p90, %p91
    %p93 = scmp.ne.s32.totalorder %s81, %s82
    %p94 = scmp.eq.s32.totalorder %s16, 1
    %p95 = por %p93, %p94
    %p97 = scmp.ne.s32.totalorder %s82, %s96
    %p98 = scmp.eq.s32.totalorder %s16, 0
    %p99 = por %p97, %p98
    %s100 = ssub.s32 %s18, %s25
    %p101 = scmp.eq.s32.totalorder %s100, 0
    %s103 = sadd.s32 %s102, 1
    %s104 = scalar_select %p101, %s102, %s103
    %p107 = pneg %p101
    %p108 = scmp.eq.s32.totalorder %s10, 1
    %p109 = por %p107, %p108
    %p110 = scmp.ne.s32.totalorder %s102, %s105
    %p111 = scmp.eq.s32.totalorder %s10, 0
    %p112 = por %p110, %p111
    %p113 = scmp.ne.s32.totalorder %s102, %s105
    %p114 = scmp.eq.s32.totalorder %s15, 1
    %p115 = por %p113, %p114
    %p116 = scmp.ne.s32.totalorder %s105, %s106
    %p117 = scmp.eq.s32.totalorder %s15, 0
    %p118 = por %p116, %p117
    %p119 = scmp.ne.s32.totalorder %s105, %s106
    %p120 = scmp.eq.s32.totalorder %s16, 1
    %p121 = por %p119, %p120
    %p123 = scmp.ne.s32.totalorder %s106, %s122
    %p124 = scmp.eq.s32.totalorder %s16, 0
    %p125 = por %p123, %p124
    %s126 = ssub.s32 %s17, %s29
    %s127 = ssub.s32 %s18, %s25
    %s128 = sor.u32 %s126, %s127
    %p129 = scmp.eq.s32.totalorder %s128, 0
    %s131 = sadd.s32 %s130, 1
    %s132 = scalar_select %p129, %s130, %s131
    %p135 = pneg %p129
    %p136 = scmp.eq.s32.totalorder %s10, 1
    %p137 = por %p135, %p136
    %p138 = scmp.ne.s32.totalorder %s130, %s133
    %p139 = scmp.eq.s32.totalorder %s10, 0
    %p140 = por %p138, %p139
    %p141 = scmp.ne.s32.totalorder %s130, %s133
    %p142 = scmp.eq.s32.totalorder %s15, 1
    %p143 = por %p141, %p142
    %p144 = scmp.ne.s32.totalorder %s133, %s134
    %p145 = scmp.eq.s32.totalorder %s15, 0
    %p146 = por %p144, %p145
    %p147 = scmp.ne.s32.totalorder %s133, %s134
    %p148 = scmp.eq.s32.totalorder %s16, 1
    %p149 = por %p147, %p148
    %p151 = scmp.ne.s32.totalorder %s134, %s150
    %p152 = scmp.eq.s32.totalorder %s16, 0
    %p153 = por %p151, %p152
    %p154 = scmp.le.s32.totalorder 1, %s10
    %p155 = scmp.lt.s32.totalorder %s10, 3
    %p156 = pnand %p154, %p155
    %p157 = pneg %p156
    // Predicated region
    $region9: #{uncertainty_encoder_forward.12} parent=5 // pred_check
      _
    $region10: #{uncertainty_encoder_forward.12} parent=5 // pred_check_branch
      %159 = sbr.rel (%p156) target = $region12
    $region11: #{uncertainty_encoder_forward.12} parent=5 // pred_region
      %s160 = ssub.s32 %s10, 1
      // Predicated region
      $region13: #{uncertainty_encoder_forward.12} parent=11 // pred_check
        %p161 = pneg %p71
      $region14: #{uncertainty_encoder_forward.12} parent=11 // pred_check_branch
        %163 = sbr.rel (%p161) target = $region16
      $region15: #{uncertainty_encoder_forward.12} parent=11 // pred_region
        _
      $region16: #{uncertainty_encoder_forward.12} parent=11 // pred_fallthru
        _
      // Predicated region
      $region17: #{uncertainty_encoder_forward.12} parent=11 // pred_check
        %p164 = pneg %p92
      $region18: #{uncertainty_encoder_forward.12} parent=11 // pred_check_branch
        %166 = sbr.rel (%p164) target = $region20
      $region19: #{uncertainty_encoder_forward.12} parent=11 // pred_region
        _
      $region20: #{uncertainty_encoder_forward.12} parent=11 // pred_fallthru
        _
      // Predicated region
      $region21: #{uncertainty_encoder_forward.12} parent=11 // pred_check
        %p167 = pneg %p118
      $region22: #{uncertainty_encoder_forward.12} parent=11 // pred_check_branch
        %169 = sbr.rel (%p167) target = $region24
      $region23: #{uncertainty_encoder_forward.12} parent=11 // pred_region
        %p170 = scmp.lt.s32.totalorder %s20, 0
        %s171 = scalar_select %p170, %s20, 0
        %s172 = smul.addr %s171, 8
        %s173 = scalar_lea.vmem %s3, %s172
      $region24: #{uncertainty_encoder_forward.12} parent=11 // pred_fallthru
        _
    $region12: #{uncertainty_encoder_forward.12} parent=5 // pred_fallthru
      _
    %p174 = scmp.lt.s32.totalorder %s10, 2
    // Predicated region
    $region25: #{uncertainty_encoder_forward.12} parent=5 // pred_check
      %p175 = pneg %p174
    $region26: #{uncertainty_encoder_forward.12} parent=5 // pred_check_branch
      %177 = sbr.rel (%p175) target = $region28
    $region27: #{uncertainty_encoder_forward.12} parent=5 // pred_region
      // Predicated region
      $region29: #{uncertainty_encoder_forward.12} parent=27 // pred_check
        %p178 = pneg %p44
      $region30: #{uncertainty_encoder_forward.12} parent=27 // pred_check_branch
        %180 = sbr.rel (%p178) target = $region32
      $region31: #{uncertainty_encoder_forward.12} parent=27 // pred_region
        %p181 = scmp.lt.s32.totalorder %s17, 1
        %s182 = scalar_select %p181, %s17, 1
        %p183 = scmp.lt.s32.totalorder %s18, 0
        %s184 = scalar_select %p183, %s18, 0
        %s185 = sadd.s32 %s184, %s182
        %s186 = smul.addr %s185, 8
        %s187 = scalar_lea.vmem %s0, %s186
      $region32: #{uncertainty_encoder_forward.12} parent=27 // pred_fallthru
        _
    $region28: #{uncertainty_encoder_forward.12} parent=5 // pred_fallthru
      _
    %p188 = scmp.le.s32.totalorder 1, %s10
    %p189 = scmp.lt.s32.totalorder %s10, 3
    %p190 = pnand %p188, %p189
    %p191 = pneg %p190
    // Predicated region
    $region33: #{uncertainty_encoder_forward.12} parent=5 // pred_check
      _
    $region34: #{uncertainty_encoder_forward.12} parent=5 // pred_check_branch
      %193 = sbr.rel (%p190) target = $region36
    $region35: #{uncertainty_encoder_forward.12} parent=5 // pred_region
      %s194 = ssub.s32 %s10, 1
      %p195 = scmp.lt.s32.totalorder %s19, 1
      %s196 = scalar_select %p195, %s19, 1
      %p197 = scmp.lt.s32.totalorder %s20, 0
      %s198 = scalar_select %p197, %s20, 0
      %s199 = sadd.s32 %s198, %s196
      %s200 = smul.addr %s199, 8
      %s201 = scalar_lea.vmem %s0, %s200
      %p202 = pneg %p50
      %p203 = pneg %p47
      %p204 = pneg %p71
      %p205 = pneg %p68
      %p206 = pneg %p92
      %p207 = pneg %p89
      %p208 = scmp.lt.s32.totalorder %s20, 0
      %s209 = scalar_select %p208, %s20, 0
      %s210 = smul.addr %s209, 8
      %s211 = scalar_lea.vmem %s3, %s210
      %p212 = pneg %p118
      %p213 = pneg %p115
      %p214 = pneg %p146
      %p215 = pneg %p143
      %p216 = scmp.lt.s32.totalorder %s19, 1
      %s217 = scalar_select %p216, %s19, 1
      %p218 = scmp.lt.s32.totalorder %s20, 0
      %s219 = scalar_select %p218, %s20, 0
      %s220 = sadd.s32 %s219, %s217
      %s221 = smul.addr %s220, 8
      %s222 = scalar_lea.vmem %s4, %s221
      %p223 = scmp.lt.s32.totalorder %s19, 1
      %s224 = scalar_select %p223, %s19, 1
      %p225 = scmp.lt.s32.totalorder %s20, 0
      %s226 = scalar_select %p225, %s20, 0
      %s227 = sadd.s32 %s226, %s224
      %s228 = smul.addr %s227, 8
      %s229 = scalar_lea.vmem %s0, %s228
      %p230 = scmp.lt.s32.totalorder %s20, 0
      %s231 = scalar_select %p230, %s20, 0
      %s232 = smul.addr %s231, 8
      %s233 = scalar_lea.vmem %s3, %s232
      %p234 = scmp.lt.s32.totalorder %s19, 1
      %s235 = scalar_select %p234, %s19, 1
      %p236 = scmp.lt.s32.totalorder %s20, 0
      %s237 = scalar_select %p236, %s20, 0
      %s238 = sadd.s32 %s237, %s235
      %s239 = smul.addr %s238, 8
      %s240 = scalar_lea.vmem %s4, %s239
      %v241 = vld [vmem:[%s229] sm:$0xff]
      %v242 = vld [vmem:[%s1] sm:$0xff]
      %v243 = vld [vmem:[%s1 + $0x8] sm:$0xff]
      %v244 = vld [vmem:[%s2] sm:$0x1]
      %v246 = vperm.slane %v244, 0
      %vm248 = vcmask 130048
      %v250 = vsel %vm248, %v241, 0
      %252 = vmatpush.msra.mxu0 0.0
      %253 = vmatpush.msra.mxu0 0.0
      %254 = vmatpush.msra.mxu0 0.0
      %255 = vmatpush.msra.mxu0 0.0
      %256 = vmatpush.msra.mxu0 0.0
      %257 = vmatpush.msra.mxu0 0.0
      %258 = vmatpush.msra.mxu0 0.0
      %259 = vmatpush.msra.mxu0 0.0
      %260 = vmatpush.msra.mxu0 0.0
      %261 = vmatpush.msra.mxu0 0.0
      %262 = vmatpush.msra.mxu0 0.0
      %263 = vmatpush.msra.mxu0 0.0
      %264 = vmatpush.msra.mxu0 0.0
      %265 = vmatpush.msra.mxu0 0.0
      %266 = vmatpush.msra.mxu0 %v243
      %267 = vmatpush.msra.mxu0 %v242
      %268 = vmatmul.f32.gmra.mxu0 %v250
      %v269 = vpop.f32.mrf.mxu0
      %v270 = vadd.f32 %v246, %v269
      %271 = vdwg.mxu0
      %v272 = vmul.f32 %v270, 5.656854
      %v273 = vld [vmem:[%s233] sm:$0xff]
      %v274 = vadd.f32 %v272, %v273
      %vm275 = vcmask 261120
      %276 = vst.msk [vmem:[%s240] sm:$0xff] %vm275, %v274
      %p277 = scmp.lt.s32.totalorder %s19, 1
      %s278 = scalar_select %p277, %s19, 1
      %p279 = scmp.lt.s32.totalorder %s20, 0
      %s280 = scalar_select %p279, %s20, 0
      %s281 = sadd.s32 %s280, %s278
      %s282 = smul.addr %s281, 8
      %s283 = scalar_lea.vmem %s4, %s282
      // Predicated region
      $region37: #{uncertainty_encoder_forward.12} parent=35 // pred_check
        %p284 = pneg %p143
      $region38: #{uncertainty_encoder_forward.12} parent=35 // pred_check_branch
        %286 = sbr.rel (%p284) target = $region40
      $region39: #{uncertainty_encoder_forward.12} parent=35 // pred_region
        _
      $region40: #{uncertainty_encoder_forward.12} parent=35 // pred_fallthru
        _
    $region36: #{uncertainty_encoder_forward.12} parent=5 // pred_fallthru
      _
    %p287 = scmp.le.s32.totalorder 2, %s10
    // Predicated region
    $region41: #{uncertainty_encoder_forward.12} parent=5 // pred_check
      %p288 = pneg %p287
    $region42: #{uncertainty_encoder_forward.12} parent=5 // pred_check_branch
      %290 = sbr.rel (%p288) target = $region44
    $region43: #{uncertainty_encoder_forward.12} parent=5 // pred_region
      %s291 = ssub.s32 %s10, 2
      // Predicated region
      $region45: #{uncertainty_encoder_forward.12} parent=43 // pred_check
        %p292 = pneg %p149
      $region46: #{uncertainty_encoder_forward.12} parent=43 // pred_check_branch
        %294 = sbr.rel (%p292) target = $region48
      $region47: #{uncertainty_encoder_forward.12} parent=43 // pred_region
        %p295 = scmp.lt.s32.totalorder %s21, 1
        %s296 = scalar_select %p295, %s21, 1
        %p297 = scmp.lt.s32.totalorder %s22, 0
        %s298 = scalar_select %p297, %s22, 0
        %s299 = sadd.s32 %s298, %s296
        %s300 = smul.addr %s299, 8
        %s301 = scalar_lea.vmem %s4, %s300
      $region48: #{uncertainty_encoder_forward.12} parent=43 // pred_fallthru
        _
    $region44: #{uncertainty_encoder_forward.12} parent=5 // pred_fallthru
      _
  $region6: #{uncertainty_encoder_forward.12} parent=0 // loop_footer
    %s14 = sadd.s32 1, %s10
  $region7: #{uncertainty_encoder_forward.12} parent=0 // loop_footer_branch
    %9 = sbr.rel target = $region3
  $region8: #{uncertainty_encoder_forward.12} parent=0 // loop_exit
    _

// kernel: uncertainty_encoder_forward.14
$region0: #{uncertainty_encoder_forward.14}
  #allocation0 [shape = 'u32[]', space=smem, size = 0x4, offset = 0x4, fixed_abs, tag = 'smem constant byte address 0x4 - core index']
  #allocation1 [shape = 'u32[72,128]{1,0:T(1,128)}', space=vmem, size = 0x9000, scoped, tag = 'internal scratch']
  #allocation2 [shape = 'f32[8,1]{1,0:T(8,128)}', space=vmem, size = 0x1000, scoped, tag = 'scratch operand']
  #allocation3 [shape = 'f32[8,1]{1,0:T(8,128)}', space=vmem, size = 0x1000, scoped, tag = 'scratch operand']
  #allocation4 [shape = 'f32[8,8]{1,0:T(8,128)}', space=vmem, size = 0x1000, scoped, tag = 'scratch operand']
  %s0 = inlined_call_operand.vmem [shape: f32[2,4,8,8], index: 0, kind: input, shape index: {}]
  %s1 = inlined_call_operand.vmem [shape: f32[2,4,8,8], index: 1, kind: input, shape index: {}]
  %s2 = inlined_call_operand.vmem [shape: f32[2,4,8,8], index: 2, kind: input, shape index: {}]
  %s3 = inlined_call_operand.vmem [shape: s32[2,1,8], index: 3, kind: input, shape index: {}]
  %s4 = inlined_call_operand.vmem [shape: f32[2,4,8,8], index: 4, kind: output, shape index: {}]
  %s5 = sld [smem:[#allocation0]]
  $region57: #{uncertainty_encoder_forward.14} parent=0
    _
  %s7 = ssub.s32 1, %s5
  %s8 = scalar_select 0, %s7, %s5
  loop: start=0, step=1, limit=10
  $region2: #{uncertainty_encoder_forward.14} parent=0 // loop_pre_header
    _
  $region3: #{uncertainty_encoder_forward.14} parent=0 // loop_header
    %s10 = sphi 0, %s14
    %p11 = scmp.ge.s32.totalorder %s10, 10
    %s17 = sphi 0, %s43
    %s18 = sphi 0, %s39
    %s19 = sphi 0, %s35
    %s20 = sphi 0, %s31
    %s21 = sphi 0, %s17
    %s22 = sphi 0, %s18
    %s23 = sphi 0, %s19
    %s24 = sphi 0, %s20
    %s25 = sphi 0, %s21
    %s26 = sphi 0, %s22
    %s27 = sphi 0, %s23
    %s28 = sphi 0, %s24
    %s50 = sphi 0, %s52
    %s53 = sphi 0, %s50
    %s54 = sphi 0, %s53
    %s70 = sphi 0, %s54
    %s80 = sphi 0, %s82
    %s83 = sphi 0, %s80
    %s84 = sphi 0, %s83
    %s100 = sphi 0, %s84
    %s110 = sphi 0, %s112
    %s113 = sphi 0, %s110
    %s114 = sphi 0, %s113
    %s130 = sphi 0, %s114
    %s138 = sphi 0, %s140
    %s141 = sphi 0, %s138
    %s142 = sphi 0, %s141
    %s158 = sphi 0, %s142
    %s168 = sphi 0, %s170
    %s171 = sphi 0, %s168
    %s172 = sphi 0, %s171
    %s188 = sphi 0, %s172
  $region4: #{uncertainty_encoder_forward.14} parent=0 // loop_header_branch
    %13 = sbr.rel (%p11) target = $region8
  $region5: #{uncertainty_encoder_forward.14} parent=0 // loop_body
    %s15 = ssub.s32 %s10, 1
    %s16 = ssub.s32 %s10, 2
    %s29 = sadd.s32 1, %s20
    %p30 = scmp.ge.s32.totalorder %s29, 1
    %s31 = scalar_select %p30, 0, %s29
    %s32 = sadd.s32 1, %s19
    %s33 = scalar_select %p30, %s32, %s19
    %p34 = scmp.ge.s32.totalorder %s33, 1
    %s35 = scalar_select %p34, 0, %s33
    %s36 = sadd.s32 1, %s18
    %s37 = scalar_select %p34, %s36, %s18
    %p38 = scmp.ge.s32.totalorder %s37, 4
    %s39 = scalar_select %p38, 0, %s37
    %s40 = sadd.s32 1, %s17
    %s41 = scalar_select %p38, %s40, %s17
    %p42 = scmp.ge.s32.totalorder %s41, 2
    %s43 = scalar_select %p42, 0, %s41
    %s44 = ssub.s32 %s17, %s43
    %s45 = ssub.s32 %s18, %s39
    %s46 = sor.u32 %s44, %s45
    %s47 = ssub.s32 %s19, %s35
    %s48 = sor.u32 %s46, %s47
    %p49 = scmp.eq.s32.totalorder %s48, 0
    %s51 = sadd.s32 %s50, 1
    %s52 = scalar_select %p49, %s50, %s51
    %p55 = pneg %p49
    %p56 = scmp.eq.s32.totalorder %s10, 7
    %p57 = por %p55, %p56
    %p58 = scmp.ne.s32.totalorder %s50, %s53
    %p59 = scmp.eq.s32.totalorder %s10, 0
    %p60 = por %p58, %p59
    %p61 = scmp.ne.s32.totalorder %s50, %s53
    %p62 = scmp.eq.s32.totalorder %s15, 7
    %p63 = por %p61, %p62
    %p64 = scmp.ne.s32.totalorder %s53, %s54
    %p65 = scmp.eq.s32.totalorder %s15, 0
    %p66 = por %p64, %p65
    %p67 = scmp.ne.s32.totalorder %s53, %s54
    %p68 = scmp.eq.s32.totalorder %s16, 7
    %p69 = por %p67, %p68
    %p71 = scmp.ne.s32.totalorder %s54, %s70
    %p72 = scmp.eq.s32.totalorder %s16, 0
    %p73 = por %p71, %p72
    %s74 = ssub.s32 %s17, %s43
    %s75 = ssub.s32 %s18, %s39
    %s76 = sor.u32 %s74, %s75
    %s77 = ssub.s32 %s20, %s31
    %s78 = sor.u32 %s76, %s77
    %p79 = scmp.eq.s32.totalorder %s78, 0
    %s81 = sadd.s32 %s80, 1
    %s82 = scalar_select %p79, %s80, %s81
    %p85 = pneg %p79
    %p86 = scmp.eq.s32.totalorder %s10, 7
    %p87 = por %p85, %p86
    %p88 = scmp.ne.s32.totalorder %s80, %s83
    %p89 = scmp.eq.s32.totalorder %s10, 0
    %p90 = por %p88, %p89
    %p91 = scmp.ne.s32.totalorder %s80, %s83
    %p92 = scmp.eq.s32.totalorder %s15, 7
    %p93 = por %p91, %p92
    %p94 = scmp.ne.s32.totalorder %s83, %s84
    %p95 = scmp.eq.s32.totalorder %s15, 0
    %p96 = por %p94, %p95
    %p97 = scmp.ne.s32.totalorder %s83, %s84
    %p98 = scmp.eq.s32.totalorder %s16, 7
    %p99 = por %p97, %p98
    %p101 = scmp.ne.s32.totalorder %s84, %s100
    %p102 = scmp.eq.s32.totalorder %s16, 0
    %p103 = por %p101, %p102
    %s104 = ssub.s32 %s17, %s43
    %s105 = ssub.s32 %s18, %s39
    %s106 = sor.u32 %s104, %s105
    %s107 = ssub.s32 %s20, %s31
    %s108 = sor.u32 %s106, %s107
    %p109 = scmp.eq.s32.totalorder %s108, 0
    %s111 = sadd.s32 %s110, 1
    %s112 = scalar_select %p109, %s110, %s111
    %p115 = pneg %p109
    %p116 = scmp.eq.s32.totalorder %s10, 7
    %p117 = por %p115, %p116
    %p118 = scmp.ne.s32.totalorder %s110, %s113
    %p119 = scmp.eq.s32.totalorder %s10, 0
    %p120 = por %p118, %p119
    %p121 = scmp.ne.s32.totalorder %s110, %s113
    %p122 = scmp.eq.s32.totalorder %s15, 7
    %p123 = por %p121, %p122
    %p124 = scmp.ne.s32.totalorder %s113, %s114
    %p125 = scmp.eq.s32.totalorder %s15, 0
    %p126 = por %p124, %p125
    %p127 = scmp.ne.s32.totalorder %s113, %s114
    %p128 = scmp.eq.s32.totalorder %s16, 7
    %p129 = por %p127, %p128
    %p131 = scmp.ne.s32.totalorder %s114, %s130
    %p132 = scmp.eq.s32.totalorder %s16, 0
    %p133 = por %p131, %p132
    %s134 = ssub.s32 %s17, %s43
    %s135 = ssub.s32 %s20, %s31
    %s136 = sor.u32 %s134, %s135
    %p137 = scmp.eq.s32.totalorder %s136, 0
    %s139 = sadd.s32 %s138, 1
    %s140 = scalar_select %p137, %s138, %s139
    %p143 = pneg %p137
    %p144 = scmp.eq.s32.totalorder %s10, 7
    %p145 = por %p143, %p144
    %p146 = scmp.ne.s32.totalorder %s138, %s141
    %p147 = scmp.eq.s32.totalorder %s10, 0
    %p148 = por %p146, %p147
    %p149 = scmp.ne.s32.totalorder %s138, %s141
    %p150 = scmp.eq.s32.totalorder %s15, 7
    %p151 = por %p149, %p150
    %p152 = scmp.ne.s32.totalorder %s141, %s142
    %p153 = scmp.eq.s32.totalorder %s15, 0
    %p154 = por %p152, %p153
    %p155 = scmp.ne.s32.totalorder %s141, %s142
    %p156 = scmp.eq.s32.totalorder %s16, 7
    %p157 = por %p155, %p156
    %p159 = scmp.ne.s32.totalorder %s142, %s158
    %p160 = scmp.eq.s32.totalorder %s16, 0
    %p161 = por %p159, %p160
    %s162 = ssub.s32 %s17, %s43
    %s163 = ssub.s32 %s18, %s39
    %s164 = sor.u32 %s162, %s163
    %s165 = ssub.s32 %s19, %s35
    %s166 = sor.u32 %s164, %s165
    %p167 = scmp.eq.s32.totalorder %s166, 0
    %s169 = sadd.s32 %s168, 1
    %s170 = scalar_select %p167, %s168, %s169
    %p173 = pneg %p167
    %p174 = scmp.eq.s32.totalorder %s10, 7
    %p175 = por %p173, %p174
    %p176 = scmp.ne.s32.totalorder %s168, %s171
    %p177 = scmp.eq.s32.totalorder %s10, 0
    %p178 = por %p176, %p177
    %p179 = scmp.ne.s32.totalorder %s168, %s171
    %p180 = scmp.eq.s32.totalorder %s15, 7
    %p181 = por %p179, %p180
    %p182 = scmp.ne.s32.totalorder %s171, %s172
    %p183 = scmp.eq.s32.totalorder %s15, 0
    %p184 = por %p182, %p183
    %p185 = scmp.ne.s32.totalorder %s171, %s172
    %p186 = scmp.eq.s32.totalorder %s16, 7
    %p187 = por %p185, %p186
    %p189 = scmp.ne.s32.totalorder %s172, %s188
    %p190 = scmp.eq.s32.totalorder %s16, 0
    %p191 = por %p189, %p190
    %p192 = scmp.le.s32.totalorder 1, %s10
    %p193 = scmp.lt.s32.totalorder %s10, 9
    %p194 = pnand %p192, %p193
    %p195 = pneg %p194
    // Predicated region
    $region9: #{uncertainty_encoder_forward.14} parent=5 // pred_check
      _
    $region10: #{uncertainty_encoder_forward.14} parent=5 // pred_check_branch
      %197 = sbr.rel (%p194) target = $region12
    $region11: #{uncertainty_encoder_forward.14} parent=5 // pred_region
      %s198 = ssub.s32 %s10, 1
    $region12: #{uncertainty_encoder_forward.14} parent=5 // pred_fallthru
      _
    %p199 = scmp.lt.s32.totalorder %s10, 8
    // Predicated region
    $region13: #{uncertainty_encoder_forward.14} parent=5 // pred_check
      %p200 = pneg %p199
    $region14: #{uncertainty_encoder_forward.14} parent=5 // pred_check_branch
      %202 = sbr.rel (%p200) target = $region16
    $region15: #{uncertainty_encoder_forward.14} parent=5 // pred_region
      // Predicated region
      $region17: #{uncertainty_encoder_forward.14} parent=15 // pred_check
        %p203 = pneg %p60
      $region18: #{uncertainty_encoder_forward.14} parent=15 // pred_check_branch
        %205 = sbr.rel (%p203) target = $region20
      $region19: #{uncertainty_encoder_forward.14} parent=15 // pred_region
        %p206 = scmp.lt.s32.totalorder %s17, 1
        %s207 = scalar_select %p206, %s17, 1
        %p208 = scmp.lt.s32.totalorder %s18, 3
        %s209 = scalar_select %p208, %s18, 3
        %p210 = scmp.lt.s32.totalorder %s19, 0
        %s211 = scalar_select %p210, %s19, 0
        %s212 = sadd.s32 %s211, %s209
        %s213 = smul.addr %s207, 4
        %s214 = sadd.s32 %s212, %s213
        %s215 = smul.addr %s214, 8
        %s216 = scalar_lea.vmem %s0, %s215
      $region20: #{uncertainty_encoder_forward.14} parent=15 // pred_fallthru
        _
      // Predicated region
      $region21: #{uncertainty_encoder_forward.14} parent=15 // pred_check
        %p217 = pneg %p90
      $region22: #{uncertainty_encoder_forward.14} parent=15 // pred_check_branch
        %219 = sbr.rel (%p217) target = $region24
      $region23: #{uncertainty_encoder_forward.14} parent=15 // pred_region
        %p220 = scmp.lt.s32.totalorder %s17, 1
        %s221 = scalar_select %p220, %s17, 1
        %p222 = scmp.lt.s32.totalorder %s18, 3
        %s223 = scalar_select %p222, %s18, 3
        %p224 = scmp.lt.s32.totalorder %s20, 0
        %s225 = scalar_select %p224, %s20, 0
        %s226 = sadd.s32 %s225, %s223
        %s227 = smul.addr %s221, 4
        %s228 = sadd.s32 %s226, %s227
        %s229 = smul.addr %s228, 8
        %s230 = scalar_lea.vmem %s1, %s229
      $region24: #{uncertainty_encoder_forward.14} parent=15 // pred_fallthru
        _
      // Predicated region
      $region25: #{uncertainty_encoder_forward.14} parent=15 // pred_check
        %p231 = pneg %p120
      $region26: #{uncertainty_encoder_forward.14} parent=15 // pred_check_branch
        %233 = sbr.rel (%p231) target = $region28
      $region27: #{uncertainty_encoder_forward.14} parent=15 // pred_region
        %p234 = scmp.lt.s32.totalorder %s17, 1
        %s235 = scalar_select %p234, %s17, 1
        %p236 = scmp.lt.s32.totalorder %s18, 3
        %s237 = scalar_select %p236, %s18, 3
        %p238 = scmp.lt.s32.totalorder %s20, 0
        %s239 = scalar_select %p238, %s20, 0
        %s240 = sadd.s32 %s239, %s237
        %s241 = smul.addr %s235, 4
        %s242 = sadd.s32 %s240, %s241
        %s243 = smul.addr %s242, 8
        %s244 = scalar_lea.vmem %s2, %s243
      $region28: #{uncertainty_encoder_forward.14} parent=15 // pred_fallthru
        _
      // Predicated region
      $region29: #{uncertainty_encoder_forward.14} parent=15 // pred_check
        %p245 = pneg %p148
      $region30: #{uncertainty_encoder_forward.14} parent=15 // pred_check_branch
        %247 = sbr.rel (%p245) target = $region32
      $region31: #{uncertainty_encoder_forward.14} parent=15 // pred_region
        %p248 = scmp.lt.s32.totalorder %s17, 1
        %s249 = scalar_select %p248, %s17, 1
        %p250 = scmp.lt.s32.totalorder %s20, 0
        %s251 = scalar_select %p250, %s20, 0
        %s252 = sadd.s32 %s251, %s249
        %s253 = scalar_lea.vmem %s3, %s252
      $region32: #{uncertainty_encoder_forward.14} parent=15 // pred_fallthru
        _
    $region16: #{uncertainty_encoder_forward.14} parent=5 // pred_fallthru
      _
    %p254 = scmp.le.s32.totalorder 1, %s10
    %p255 = scmp.lt.s32.totalorder %s10, 9
    %p256 = pnand %p254, %p255
    %p257 = pneg %p256
    // Predicated region
    $region33: #{uncertainty_encoder_forward.14} parent=5 // pred_check
      _
    $region34: #{uncertainty_encoder_forward.14} parent=5 // pred_check_branch
      %259 = sbr.rel (%p256) target = $region36
    $region35: #{uncertainty_encoder_forward.14} parent=5 // pred_region
      %s260 = ssub.s32 %s10, 1
      %p261 = scmp.lt.s32.totalorder %s21, 1
      %s262 = scalar_select %p261, %s21, 1
      %p263 = scmp.lt.s32.totalorder %s22, 3
      %s264 = scalar_select %p263, %s22, 3
      %p265 = scmp.lt.s32.totalorder %s23, 0
      %s266 = scalar_select %p265, %s23, 0
      %s267 = sadd.s32 %s266, %s264
      %s268 = smul.addr %s262, 4
      %s269 = sadd.s32 %s267, %s268
      %s270 = smul.addr %s269, 8
      %s271 = scalar_lea.vmem %s0, %s270
      %p272 = pneg %p66
      %p273 = pneg %p63
      %p274 = scmp.lt.s32.totalorder %s21, 1
      %s275 = scalar_select %p274, %s21, 1
      %p276 = scmp.lt.s32.totalorder %s22, 3
      %s277 = scalar_select %p276, %s22, 3
      %p278 = scmp.lt.s32.totalorder %s24, 0
      %s279 = scalar_select %p278, %s24, 0
      %s280 = sadd.s32 %s279, %s277
      %s281 = smul.addr %s275, 4
      %s282 = sadd.s32 %s280, %s281
      %s283 = smul.addr %s282, 8
      %s284 = scalar_lea.vmem %s1, %s283
      %p285 = pneg %p96
      %p286 = pneg %p93
      %p287 = scmp.lt.s32.totalorder %s21, 1
      %s288 = scalar_select %p287, %s21, 1
      %p289 = scmp.lt.s32.totalorder %s22, 3
      %s290 = scalar_select %p289, %s22, 3
      %p291 = scmp.lt.s32.totalorder %s24, 0
      %s292 = scalar_select %p291, %s24, 0
      %s293 = sadd.s32 %s292, %s290
      %s294 = smul.addr %s288, 4
      %s295 = sadd.s32 %s293, %s294
      %s296 = smul.addr %s295, 8
      %s297 = scalar_lea.vmem %s2, %s296
      %p298 = pneg %p126
      %p299 = pneg %p123
      %p300 = scmp.lt.s32.totalorder %s21, 1
      %s301 = scalar_select %p300, %s21, 1
      %p302 = scmp.lt.s32.totalorder %s24, 0
      %s303 = scalar_select %p302, %s24, 0
      %s304 = sadd.s32 %s303, %s301
      %s305 = scalar_lea.vmem %s3, %s304
      %p306 = pneg %p154
      %p307 = pneg %p151
      %p308 = pneg %p184
      %p309 = pneg %p181
      %p310 = scmp.lt.s32.totalorder %s21, 1
      %s311 = scalar_select %p310, %s21, 1
      %p312 = scmp.lt.s32.totalorder %s22, 3
      %s313 = scalar_select %p312, %s22, 3
      %p314 = scmp.lt.s32.totalorder %s23, 0
      %s315 = scalar_select %p314, %s23, 0
      %s316 = sadd.s32 %s315, %s313
      %s317 = smul.addr %s311, 4
      %s318 = sadd.s32 %s316, %s317
      %s319 = smul.addr %s318, 8
      %s320 = scalar_lea.vmem %s4, %s319
      %p321 = scmp.lt.s32.totalorder %s21, 1
      %s322 = scalar_select %p321, %s21, 1
      %p323 = scmp.lt.s32.totalorder %s22, 3
      %s324 = scalar_select %p323, %s22, 3
      %p325 = scmp.lt.s32.totalorder %s23, 0
      %s326 = scalar_select %p325, %s23, 0
      %s327 = sadd.s32 %s326, %s324
      %s328 = smul.addr %s322, 4
      %s329 = sadd.s32 %s327, %s328
      %s330 = smul.addr %s329, 8
      %s331 = scalar_lea.vmem %s0, %s330
      %p332 = scmp.lt.s32.totalorder %s21, 1
      %s333 = scalar_select %p332, %s21, 1
      %p334 = scmp.lt.s32.totalorder %s22, 3
      %s335 = scalar_select %p334, %s22, 3
      %p336 = scmp.lt.s32.totalorder %s24, 0
      %s337 = scalar_select %p336, %s24, 0
      %s338 = sadd.s32 %s337, %s335
      %s339 = smul.addr %s333, 4
      %s340 = sadd.s32 %s338, %s339
      %s341 = smul.addr %s340, 8
      %s342 = scalar_lea.vmem %s1, %s341
      %p343 = scmp.lt.s32.totalorder %s21, 1
      %s344 = scalar_select %p343, %s21, 1
      %p345 = scmp.lt.s32.totalorder %s22, 3
      %s346 = scalar_select %p345, %s22, 3
      %p347 = scmp.lt.s32.totalorder %s24, 0
      %s348 = scalar_select %p347, %s24, 0
      %s349 = sadd.s32 %s348, %s346
      %s350 = smul.addr %s344, 4
      %s351 = sadd.s32 %s349, %s350
      %s352 = smul.addr %s351, 8
      %s353 = scalar_lea.vmem %s2, %s352
      %p354 = scmp.lt.s32.totalorder %s21, 1
      %s355 = scalar_select %p354, %s21, 1
      %p356 = scmp.lt.s32.totalorder %s24, 0
      %s357 = scalar_select %p356, %s24, 0
      %s358 = sadd.s32 %s357, %s355
      %s359 = scalar_lea.vmem %s3, %s358
      %p360 = scmp.lt.s32.totalorder %s21, 1
      %s361 = scalar_select %p360, %s21, 1
      %p362 = scmp.lt.s32.totalorder %s22, 3
      %s363 = scalar_select %p362, %s22, 3
      %p364 = scmp.lt.s32.totalorder %s23, 0
      %s365 = scalar_select %p364, %s23, 0
      %s366 = sadd.s32 %s365, %s363
      %s367 = smul.addr %s361, 4
      %s368 = sadd.s32 %s366, %s367
      %s369 = smul.addr %s368, 8
      %s370 = scalar_lea.vmem %s4, %s369
      %p371 = scmp.eq.s32.totalorder %s24, 0
      // Predicated region
      $region37: #{uncertainty_encoder_forward.14} parent=35 // pred_check
        %p372 = pneg %p371
      $region38: #{uncertainty_encoder_forward.14} parent=35 // pred_check_branch
        %374 = sbr.rel (%p372) target = $region40
      $region39: #{uncertainty_encoder_forward.14} parent=35 // pred_region
        %vm375 = vcmask 7168
        %376 = vst.msk [vmem:[#allocation2] sm:$0xff] %vm375, -inf
        %377 = vst.msk [vmem:[#allocation3] sm:$0xff] %vm375, 0.0
        %vm378 = vcmask 64512
        %379 = vst.msk [vmem:[#allocation4] sm:$0xff] %vm378, 0.0
      $region40: #{uncertainty_encoder_forward.14} parent=35 // pred_fallthru
        _
      %v380 = vld [vmem:[%s331] sm:$0xff]
      %v381 = vld [vmem:[%s342] sm:$0xff]
      %vm382 = vcmask 64512
      %v384 = vsel %vm382, %v380, 0
      %v387 = vsel %vm382, %v381, 0
      %389 = vmatpush.xpose.msra.mxu0 0.0
      %390 = vmatpush.xpose.msra.mxu0 0.0
      %391 = vmatpush.xpose.msra.mxu0 0.0
      %392 = vmatpush.xpose.msra.mxu0 0.0
      %393 = vmatpush.xpose.msra.mxu0 0.0
      %394 = vmatpush.xpose.msra.mxu0 0.0
      %395 = vmatpush.xpose.msra.mxu0 0.0
      %396 = vmatpush.xpose.msra.mxu0 0.0
      %397 = vmatpush.xpose.msra.mxu0 0.0
      %398 = vmatpush.xpose.msra.mxu0 0.0
      %399 = vmatpush.xpose.msra.mxu0 0.0
      %400 = vmatpush.xpose.msra.mxu0 0.0
      %401 = vmatpush.xpose.msra.mxu0 0.0
      %402 = vmatpush.xpose.msra.mxu0 0.0
      %403 = vmatpush.xpose.msra.mxu0 0.0
      %404 = vmatpush.xpose.msra.mxu0 %v387
      %405 = vmatmul.f32.gmra.mxu0 %v384
      %v406 = vpop.f32.mrf.mxu0
      %v407 = vadd.f32 0.0, %v406
      %408 = vdwg.mxu0
      %v409 = vmul.f32 %v407, 0.35355338
      %v410 = vld [vmem:[%s359] sm:$0x1]
      %vm411 = vcmp.eq.s32.totalorder %v410, 0
      %v412 = vsel %vm411, 1, 0
      %v413 = vperm.slane %v412, 0
      %vm414 = vcmp.eq.s32.totalorder %v413, 1
      %v415 = vsel %vm414, -1e+09, %v409
      %v416 = vld [vmem:[#allocation2] sm:$0xff]
      %v417 = vsel %vm382, %v415, -inf
      %418 = vmax.xlane.f32.xlu0 %v417
      %v419 = vpop.xlane.xlu0 %418
      %v420 = vmax.f32 %v416, %v419
      %v421 = vsub.f32 %v416, %v420
      %v422 = vmul.f32 %v421, 1.442695
      %v423 = vpow.pop %v422
      %425 = vset.pattern.permute.xlu0 0
      %426 = vperm.xlu0 %425, %v420
      %v427 = vpop.permute.xlu0 %426
      %v429 = vsub.f32 %v415, %v427
      %v430 = vmul.f32 %v429, 1.442695
      %v431 = vpow.pop %v430
      %v432 = vld [vmem:[#allocation3] sm:$0xff]
      %v433 = vmul.f32 %v423, %v432
      %v434 = vsel %vm382, %v431, 0.0
      %435 = vadd.xlane.f32.xlu0 %v434
      %v436 = vpop.xlane.xlu0 %435
      %v437 = vadd.f32 %v433, %v436
      %vm438 = vcmask 7168
      %439 = vst.msk [vmem:[#allocation3] sm:$0xff] %vm438, %v437
      %v440 = vld [vmem:[#allocation4] sm:$0xff]
      %442 = vset.pattern.permute.xlu0 0
      %443 = vperm.xlu0 %442, %v423
      %v444 = vpop.permute.xlu0 %443
      %v446 = vmul.f32 %v444, %v440
      %v447 = vld [vmem:[%s353] sm:$0xff]
      %v449 = vsel %vm382, %v431, 0
      %451 = vmatpush.msra.mxu0 0.0
      %452 = vmatpush.msra.mxu0 0.0
      %453 = vmatpush.msra.mxu0 0.0
      %454 = vmatpush.msra.mxu0 0.0
      %455 = vmatpush.msra.mxu0 0.0
      %456 = vmatpush.msra.mxu0 0.0
      %457 = vmatpush.msra.mxu0 0.0
      %458 = vmatpush.msra.mxu0 0.0
      %459 = vmatpush.msra.mxu0 0.0
      %460 = vmatpush.msra.mxu0 0.0
      %461 = vmatpush.msra.mxu0 0.0
      %462 = vmatpush.msra.mxu0 0.0
      %463 = vmatpush.msra.mxu0 0.0
      %464 = vmatpush.msra.mxu0 0.0
      %465 = vmatpush.msra.mxu0 0.0
      %466 = vmatpush.msra.mxu0 %v447
      %467 = vmatmul.f32.gmra.mxu0 %v449
      %v468 = vpop.f32.mrf.mxu0
      %v469 = vadd.f32 0.0, %v468
      %470 = vdwg.mxu0
      %v471 = vadd.f32 %v446, %v469
      %472 = vst.msk [vmem:[#allocation4] sm:$0xff] %vm382, %v471
      %473 = vst.msk [vmem:[#allocation2] sm:$0xff] %vm438, %v420
      // Predicated region
      $region41: #{uncertainty_encoder_forward.14} parent=35 // pred_check
        %p474 = pneg %p371
      $region42: #{uncertainty_encoder_forward.14} parent=35 // pred_check_branch
        %476 = sbr.rel (%p474) target = $region44
      $region43: #{uncertainty_encoder_forward.14} parent=35 // pred_region
        %v477 = vld [vmem:[#allocation4] sm:$0xff]
        %v478 = vld [vmem:[#allocation3] sm:$0xff]
        %v479 = vrcp.pop %v478
        %481 = vset.pattern.permute.xlu0 0
        %482 = vperm.xlu0 %481, %v479
        %v483 = vpop.permute.xlu0 %482
        %v485 = vmul.f32 %v477, %v483
        %486 = vst.msk [vmem:[%s370] sm:$0xff] %vm382, %v485
      $region44: #{uncertainty_encoder_forward.14} parent=35 // pred_fallthru
        _
      %p487 = scmp.lt.s32.totalorder %s21, 1
      %s488 = scalar_select %p487, %s21, 1
      %p489 = scmp.lt.s32.totalorder %s22, 3
      %s490 = scalar_select %p489, %s22, 3
      %p491 = scmp.lt.s32.totalorder %s23, 0
      %s492 = scalar_select %p491, %s23, 0
      %s493 = sadd.s32 %s492, %s490
      %s494 = smul.addr %s488, 4
      %s495 = sadd.s32 %s493, %s494
      %s496 = smul.addr %s495, 8
      %s497 = scalar_lea.vmem %s4, %s496
      // Predicated region
      $region45: #{uncertainty_encoder_forward.14} parent=35 // pred_check
        %p498 = pneg %p181
      $region46: #{uncertainty_encoder_forward.14} parent=35 // pred_check_branch
        %500 = sbr.rel (%p498) target = $region48
      $region47: #{uncertainty_encoder_forward.14} parent=35 // pred_region
        _
      $region48: #{uncertainty_encoder_forward.14} parent=35 // pred_fallthru
        _
    $region36: #{uncertainty_encoder_forward.14} parent=5 // pred_fallthru
      _
    %p501 = scmp.le.s32.totalorder 2, %s10
    // Predicated region
    $region49: #{uncertainty_encoder_forward.14} parent=5 // pred_check
      %p502 = pneg %p501
    $region50: #{uncertainty_encoder_forward.14} parent=5 // pred_check_branch
      %504 = sbr.rel (%p502) target = $region52
    $region51: #{uncertainty_encoder_forward.14} parent=5 // pred_region
      %s505 = ssub.s32 %s10, 2
      // Predicated region
      $region53: #{uncertainty_encoder_forward.14} parent=51 // pred_check
        %p506 = pneg %p187
      $region54: #{uncertainty_encoder_forward.14} parent=51 // pred_check_branch
        %508 = sbr.rel (%p506) target = $region56
      $region55: #{uncertainty_encoder_forward.14} parent=51 // pred_region
        %p509 = scmp.lt.s32.totalorder %s25, 1
        %s510 = scalar_select %p509, %s25, 1
        %p511 = scmp.lt.s32.totalorder %s26, 3
        %s512 = scalar_select %p511, %s26, 3
        %p513 = scmp.lt.s32.totalorder %s27, 0
        %s514 = scalar_select %p513, %s27, 0
        %s515 = sadd.s32 %s514, %s512
        %s516 = smul.addr %s510, 4
        %s517 = sadd.s32 %s515, %s516
        %s518 = smul.addr %s517, 8
        %s519 = scalar_lea.vmem %s4, %s518
      $region56: #{uncertainty_encoder_forward.14} parent=51 // pred_fallthru
        _
    $region52: #{uncertainty_encoder_forward.14} parent=5 // pred_fallthru
      _
  $region6: #{uncertainty_encoder_forward.14} parent=0 // loop_footer
    %s14 = sadd.s32 1, %s10
  $region7: #{uncertainty_encoder_forward.14} parent=0 // loop_footer_branch
    %9 = sbr.rel target = $region3
  $region8: #{uncertainty_encoder_forward.14} parent=0 // loop_exit
    _

// kernel: uncertainty_encoder_forward.13
$region0: #{uncertainty_encoder_forward.13}
  #allocation0 [shape = 'u32[]', space=smem, size = 0x4, offset = 0x4, fixed_abs, tag = 'smem constant byte address 0x4 - core index']
  #allocation1 [shape = 'u32[72,128]{1,0:T(1,128)}', space=vmem, size = 0x9000, scoped, tag = 'internal scratch']
  %s0 = inlined_call_operand.vmem [shape: f32[2,8,32], index: 0, kind: input, shape index: {}]
  %s1 = inlined_call_operand.vmem [shape: f32[1,32], index: 1, kind: input, shape index: {}]
  %s2 = inlined_call_operand.vmem [shape: f32[1,32], index: 2, kind: input, shape index: {}]
  %s3 = inlined_call_operand.vmem [shape: f32[32,96], index: 3, kind: input, shape index: {}]
  %s4 = inlined_call_operand.vmem [shape: f32[1,96], index: 4, kind: input, shape index: {}]
  %s5 = inlined_call_operand.vmem [shape: f32[2,4,8,8], index: 5, kind: output, shape index: {0}]
  %s6 = inlined_call_operand.vmem [shape: f32[2,4,8,8], index: 6, kind: output, shape index: {1}]
  %s7 = inlined_call_operand.vmem [shape: f32[2,4,8,8], index: 7, kind: output, shape index: {2}]
  %8 = xla_tuple %s5, %s6, %s7
  %s9 = sld [smem:[#allocation0]]
  $region69: #{uncertainty_encoder_forward.13} parent=0
    _
  %s11 = ssub.s32 1, %s9
  %s12 = scalar_select 0, %s11, %s9
  loop: start=0, step=1, limit=4
  $region2: #{uncertainty_encoder_forward.13} parent=0 // loop_pre_header
    _
  $region3: #{uncertainty_encoder_forward.13} parent=0 // loop_header
    %s14 = sphi 0, %s18
    %p15 = scmp.ge.s32.totalorder %s14, 4
    %s21 = sphi 0, %s33
    %s22 = sphi 0, %s29
    %s23 = sphi 0, %s21
    %s24 = sphi 0, %s22
    %s25 = sphi 0, %s23
    %s26 = sphi 0, %s24
    %s38 = sphi 0, %s40
    %s41 = sphi 0, %s38
    %s42 = sphi 0, %s41
    %s58 = sphi 0, %s42
    %s62 = sphi 0, %s62
    %s64 = sphi 0, %s62
    %s65 = sphi 0, %s64
    %s79 = sphi 0, %s65
    %s83 = sphi 0, %s83
    %s85 = sphi 0, %s83
    %s86 = sphi 0, %s85
    %s100 = sphi 0, %s86
    %s104 = sphi 0, %s104
    %s106 = sphi 0, %s104
    %s107 = sphi 0, %s106
    %s121 = sphi 0, %s107
    %s125 = sphi 0, %s125
    %s127 = sphi 0, %s125
    %s128 = sphi 0, %s127
    %s142 = sphi 0, %s128
    %s150 = sphi 0, %s152
    %s153 = sphi 0, %s150
    %s154 = sphi 0, %s153
    %s170 = sphi 0, %s154
    %s178 = sphi 0, %s180
    %s181 = sphi 0, %s178
    %s182 = sphi 0, %s181
    %s198 = sphi 0, %s182
    %s206 = sphi 0, %s208
    %s209 = sphi 0, %s206
    %s210 = sphi 0, %s209
    %s226 = sphi 0, %s210
  $region4: #{uncertainty_encoder_forward.13} parent=0 // loop_header_branch
    %17 = sbr.rel (%p15) target = $region8
  $region5: #{uncertainty_encoder_forward.13} parent=0 // loop_body
    %s19 = ssub.s32 %s14, 1
    %s20 = ssub.s32 %s14, 2
    %s27 = sadd.s32 1, %s22
    %p28 = scmp.ge.s32.totalorder %s27, 1
    %s29 = scalar_select %p28, 0, %s27
    %s30 = sadd.s32 1, %s21
    %s31 = scalar_select %p28, %s30, %s21
    %p32 = scmp.ge.s32.totalorder %s31, 2
    %s33 = scalar_select %p32, 0, %s31
    %s34 = ssub.s32 %s21, %s33
    %s35 = ssub.s32 %s22, %s29
    %s36 = sor.u32 %s34, %s35
    %p37 = scmp.eq.s32.totalorder %s36, 0
    %s39 = sadd.s32 %s38, 1
    %s40 = scalar_select %p37, %s38, %s39
    %p43 = pneg %p37
    %p44 = scmp.eq.s32.totalorder %s14, 1
    %p45 = por %p43, %p44
    %p46 = scmp.ne.s32.totalorder %s38, %s41
    %p47 = scmp.eq.s32.totalorder %s14, 0
    %p48 = por %p46, %p47
    %p49 = scmp.ne.s32.totalorder %s38, %s41
    %p50 = scmp.eq.s32.totalorder %s19, 1
    %p51 = por %p49, %p50
    %p52 = scmp.ne.s32.totalorder %s41, %s42
    %p53 = scmp.eq.s32.totalorder %s19, 0
    %p54 = por %p52, %p53
    %p55 = scmp.ne.s32.totalorder %s41, %s42
    %p56 = scmp.eq.s32.totalorder %s20, 1
    %p57 = por %p55, %p56
    %p59 = scmp.ne.s32.totalorder %s42, %s58
    %p60 = scmp.eq.s32.totalorder %s20, 0
    %p61 = por %p59, %p60
    %s63 = sadd.s32 %s62, 1
    %p66 = scmp.eq.s32.totalorder %s14, 1
    %p67 = scmp.ne.s32.totalorder %s62, %s64
    %p68 = scmp.eq.s32.totalorder %s14, 0
    %p69 = por %p67, %p68
    %p70 = scmp.ne.s32.totalorder %s62, %s64
    %p71 = scmp.eq.s32.totalorder %s19, 1
    %p72 = por %p70, %p71
    %p73 = scmp.ne.s32.totalorder %s64, %s65
    %p74 = scmp.eq.s32.totalorder %s19, 0
    %p75 = por %p73, %p74
    %p76 = scmp.ne.s32.totalorder %s64, %s65
    %p77 = scmp.eq.s32.totalorder %s20, 1
    %p78 = por %p76, %p77
    %p80 = scmp.ne.s32.totalorder %s65, %s79
    %p81 = scmp.eq.s32.totalorder %s20, 0
    %p82 = por %p80, %p81
    %s84 = sadd.s32 %s83, 1
    %p87 = scmp.eq.s32.totalorder %s14, 1
    %p88 = scmp.ne.s32.totalorder %s83, %s85
    %p89 = scmp.eq.s32.totalorder %s14, 0
    %p90 = por %p88, %p89
    %p91 = scmp.ne.s32.totalorder %s83, %s85
    %p92 = scmp.eq.s32.totalorder %s19, 1
    %p93 = por %p91, %p92
    %p94 = scmp.ne.s32.totalorder %s85, %s86
    %p95 = scmp.eq.s32.totalorder %s19, 0
    %p96 = por %p94, %p95
    %p97 = scmp.ne.s32.totalorder %s85, %s86
    %p98 = scmp.eq.s32.totalorder %s20, 1
    %p99 = por %p97, %p98
    %p101 = scmp.ne.s32.totalorder %s86, %s100
    %p102 = scmp.eq.s32.totalorder %s20, 0
    %p103 = por %p101, %p102
    %s105 = sadd.s32 %s104, 1
    %p108 = scmp.eq.s32.totalorder %s14, 1
    %p109 = scmp.ne.s32.totalorder %s104, %s106
    %p110 = scmp.eq.s32.totalorder %s14, 0
    %p111 = por %p109, %p110
    %p112 = scmp.ne.s32.totalorder %s104, %s106
    %p113 = scmp.eq.s32.totalorder %s19, 1
    %p114 = por %p112, %p113
    %p115 = scmp.ne.s32.totalorder %s106, %s107
    %p116 = scmp.eq.s32.totalorder %s19, 0
    %p117 = por %p115, %p116
    %p118 = scmp.ne.s32.totalorder %s106, %s107
    %p119 = scmp.eq.s32.totalorder %s20, 1
    %p120 = por %p118, %p119
    %p122 = scmp.ne.s32.totalorder %s107, %s121
    %p123 = scmp.eq.s32.totalorder %s20, 0
    %p124 = por %p122, %p123
    %s126 = sadd.s32 %s125, 1
    %p129 = scmp.eq.s32.totalorder %s14, 1
    %p130 = scmp.ne.s32.totalorder %s125, %s127
    %p131 = scmp.eq.s32.totalorder %s14, 0
    %p132 = por %p130, %p131
    %p133 = scmp.ne.s32.totalorder %s125, %s127
    %p134 = scmp.eq.s32.totalorder %s19, 1
    %p135 = por %p133, %p134
    %p136 = scmp.ne.s32.totalorder %s127, %s128
    %p137 = scmp.eq.s32.totalorder %s19, 0
    %p138 = por %p136, %p137
    %p139 = scmp.ne.s32.totalorder %s127, %s128
    %p140 = scmp.eq.s32.totalorder %s20, 1
    %p141 = por %p139, %p140
    %p143 = scmp.ne.s32.totalorder %s128, %s142
    %p144 = scmp.eq.s32.totalorder %s20, 0
    %p145 = por %p143, %p144
    %s146 = ssub.s32 %s21, %s33
    %s147 = ssub.s32 %s22, %s29
    %s148 = sor.u32 %s146, %s147
    %p149 = scmp.eq.s32.totalorder %s148, 0
    %s151 = sadd.s32 %s150, 1
    %s152 = scalar_select %p149, %s150, %s151
    %p155 = pneg %p149
    %p156 = scmp.eq.s32.totalorder %s14, 1
    %p157 = por %p155, %p156
    %p158 = scmp.ne.s32.totalorder %s150, %s153
    %p159 = scmp.eq.s32.totalorder %s14, 0
    %p160 = por %p158, %p159
    %p161 = scmp.ne.s32.totalorder %s150, %s153
    %p162 = scmp.eq.s32.totalorder %s19, 1
    %p163 = por %p161, %p162
    %p164 = scmp.ne.s32.totalorder %s153, %s154
    %p165 = scmp.eq.s32.totalorder %s19, 0
    %p166 = por %p164, %p165
    %p167 = scmp.ne.s32.totalorder %s153, %s154
    %p168 = scmp.eq.s32.totalorder %s20, 1
    %p169 = por %p167, %p168
    %p171 = scmp.ne.s32.totalorder %s154, %s170
    %p172 = scmp.eq.s32.totalorder %s20, 0
    %p173 = por %p171, %p172
    %s174 = ssub.s32 %s21, %s33
    %s175 = ssub.s32 %s22, %s29
    %s176 = sor.u32 %s174, %s175
    %p177 = scmp.eq.s32.totalorder %s176, 0
    %s179 = sadd.s32 %s178, 1
    %s180 = scalar_select %p177, %s178, %s179
    %p183 = pneg %p177
    %p184 = scmp.eq.s32.totalorder %s14, 1
    %p185 = por %p183, %p184
    %p186 = scmp.ne.s32.totalorder %s178, %s181
    %p187 = scmp.eq.s32.totalorder %s14, 0
    %p188 = por %p186, %p187
    %p189 = scmp.ne.s32.totalorder %s178, %s181
    %p190 = scmp.eq.s32.totalorder %s19, 1
    %p191 = por %p189, %p190
    %p192 = scmp.ne.s32.totalorder %s181, %s182
    %p193 = scmp.eq.s32.totalorder %s19, 0
    %p194 = por %p192, %p193
    %p195 = scmp.ne.s32.totalorder %s181, %s182
    %p196 = scmp.eq.s32.totalorder %s20, 1
    %p197 = por %p195, %p196
    %p199 = scmp.ne.s32.totalorder %s182, %s198
    %p200 = scmp.eq.s32.totalorder %s20, 0
    %p201 = por %p199, %p200
    %s202 = ssub.s32 %s21, %s33
    %s203 = ssub.s32 %s22, %s29
    %s204 = sor.u32 %s202, %s203
    %p205 = scmp.eq.s32.totalorder %s204, 0
    %s207 = sadd.s32 %s206, 1
    %s208 = scalar_select %p205, %s206, %s207
    %p211 = pneg %p205
    %p212 = scmp.eq.s32.totalorder %s14, 1
    %p213 = por %p211, %p212
    %p214 = scmp.ne.s32.totalorder %s206, %s209
    %p215 = scmp.eq.s32.totalorder %s14, 0
    %p216 = por %p214, %p215
    %p217 = scmp.ne.s32.totalorder %s206, %s209
    %p218 = scmp.eq.s32.totalorder %s19, 1
    %p219 = por %p217, %p218
    %p220 = scmp.ne.s32.totalorder %s209, %s210
    %p221 = scmp.eq.s32.totalorder %s19, 0
    %p222 = por %p220, %p221
    %p223 = scmp.ne.s32.totalorder %s209, %s210
    %p224 = scmp.eq.s32.totalorder %s20, 1
    %p225 = por %p223, %p224
    %p227 = scmp.ne.s32.totalorder %s210, %s226
    %p228 = scmp.eq.s32.totalorder %s20, 0
    %p229 = por %p227, %p228
    %p230 = scmp.le.s32.totalorder 1, %s14
    %p231 = scmp.lt.s32.totalorder %s14, 3
    %p232 = pnand %p230, %p231
    %p233 = pneg %p232
    // Predicated region
    $region9: #{uncertainty_encoder_forward.13} parent=5 // pred_check
      _
    $region10: #{uncertainty_encoder_forward.13} parent=5 // pred_check_branch
      %235 = sbr.rel (%p232) target = $region12
    $region11: #{uncertainty_encoder_forward.13} parent=5 // pred_region
      %s236 = ssub.s32 %s14, 1
      // Predicated region
      $region13: #{uncertainty_encoder_forward.13} parent=11 // pred_check
        %p237 = pneg %p75
      $region14: #{uncertainty_encoder_forward.13} parent=11 // pred_check_branch
        %239 = sbr.rel (%p237) target = $region16
      $region15: #{uncertainty_encoder_forward.13} parent=11 // pred_region
        _
      $region16: #{uncertainty_encoder_forward.13} parent=11 // pred_fallthru
        _
      // Predicated region
      $region17: #{uncertainty_encoder_forward.13} parent=11 // pred_check
        %p240 = pneg %p96
      $region18: #{uncertainty_encoder_forward.13} parent=11 // pred_check_branch
        %242 = sbr.rel (%p240) target = $region20
      $region19: #{uncertainty_encoder_forward.13} parent=11 // pred_region
        _
      $region20: #{uncertainty_encoder_forward.13} parent=11 // pred_fallthru
        _
      // Predicated region
      $region21: #{uncertainty_encoder_forward.13} parent=11 // pred_check
        %p243 = pneg %p117
      $region22: #{uncertainty_encoder_forward.13} parent=11 // pred_check_branch
        %245 = sbr.rel (%p243) target = $region24
      $region23: #{uncertainty_encoder_forward.13} parent=11 // pred_region
        _
      $region24: #{uncertainty_encoder_forward.13} parent=11 // pred_fallthru
        _
      // Predicated region
      $region25: #{uncertainty_encoder_forward.13} parent=11 // pred_check
        %p246 = pneg %p138
      $region26: #{uncertainty_encoder_forward.13} parent=11 // pred_check_branch
        %248 = sbr.rel (%p246) target = $region28
      $region27: #{uncertainty_encoder_forward.13} parent=11 // pred_region
        _
      $region28: #{uncertainty_encoder_forward.13} parent=11 // pred_fallthru
        _
    $region12: #{uncertainty_encoder_forward.13} parent=5 // pred_fallthru
      _
    %p249 = scmp.lt.s32.totalorder %s14, 2
    // Predicated region
    $region29: #{uncertainty_encoder_forward.13} parent=5 // pred_check
      %p250 = pneg %p249
    $region30: #{uncertainty_encoder_forward.13} parent=5 // pred_check_branch
      %252 = sbr.rel (%p250) target = $region32
    $region31: #{uncertainty_encoder_forward.13} parent=5 // pred_region
      // Predicated region
      $region33: #{uncertainty_encoder_forward.13} parent=31 // pred_check
        %p253 = pneg %p48
      $region34: #{uncertainty_encoder_forward.13} parent=31 // pred_check_branch
        %255 = sbr.rel (%p253) target = $region36
      $region35: #{uncertainty_encoder_forward.13} parent=31 // pred_region
        %p256 = scmp.lt.s32.totalorder %s21, 1
        %s257 = scalar_select %p256, %s21, 1
        %p258 = scmp.lt.s32.totalorder %s22, 0
        %s259 = scalar_select %p258, %s22, 0
        %s260 = sadd.s32 %s259, %s257
        %s261 = smul.addr %s260, 8
        %s262 = scalar_lea.vmem %s0, %s261
      $region36: #{uncertainty_encoder_forward.13} parent=31 // pred_fallthru
        _
    $region32: #{uncertainty_encoder_forward.13} parent=5 // pred_fallthru
      _
    %p263 = scmp.le.s32.totalorder 1, %s14
    %p264 = scmp.lt.s32.totalorder %s14, 3
    %p265 = pnand %p263, %p264
    %p266 = pneg %p265
    // Predicated region
    $region37: #{uncertainty_encoder_forward.13} parent=5 // pred_check
      _
    $region38: #{uncertainty_encoder_forward.13} parent=5 // pred_check_branch
      %268 = sbr.rel (%p265) target = $region40
    $region39: #{uncertainty_encoder_forward.13} parent=5 // pred_region
      %s269 = ssub.s32 %s14, 1
      %p270 = scmp.lt.s32.totalorder %s23, 1
      %s271 = scalar_select %p270, %s23, 1
      %p272 = scmp.lt.s32.totalorder %s24, 0
      %s273 = scalar_select %p272, %s24, 0
      %s274 = sadd.s32 %s273, %s271
      %s275 = smul.addr %s274, 8
      %s276 = scalar_lea.vmem %s0, %s275
      %p277 = pneg %p54
      %p278 = pneg %p51
      %p279 = pneg %p75
      %p280 = pneg %p72
      %p281 = pneg %p96
      %p282 = pneg %p93
      %p283 = pneg %p117
      %p284 = pneg %p114
      %p285 = pneg %p138
      %p286 = pneg %p135
      %p287 = pneg %p166
      %p288 = pneg %p163
      %p289 = scmp.lt.s32.totalorder %s23, 1
      %s290 = scalar_select %p289, %s23, 1
      %p291 = scmp.lt.s32.totalorder %s24, 0
      %s292 = scalar_select %p291, %s24, 0
      %s293 = smul.addr %s290, 4
      %s294 = sadd.s32 %s292, %s293
      %s295 = smul.addr %s294, 8
      %s296 = scalar_lea.vmem %s5, %s295
      %p297 = pneg %p194
      %p298 = pneg %p191
      %p299 = scmp.lt.s32.totalorder %s23, 1
      %s300 = scalar_select %p299, %s23, 1
      %p301 = scmp.lt.s32.totalorder %s24, 0
      %s302 = scalar_select %p301, %s24, 0
      %s303 = smul.addr %s300, 4
      %s304 = sadd.s32 %s302, %s303
      %s305 = smul.addr %s304, 8
      %s306 = scalar_lea.vmem %s6, %s305
      %p307 = pneg %p222
      %p308 = pneg %p219
      %p309 = scmp.lt.s32.totalorder %s23, 1
      %s310 = scalar_select %p309, %s23, 1
      %p311 = scmp.lt.s32.totalorder %s24, 0
      %s312 = scalar_select %p311, %s24, 0
      %s313 = smul.addr %s310, 4
      %s314 = sadd.s32 %s312, %s313
      %s315 = smul.addr %s314, 8
      %s316 = scalar_lea.vmem %s7, %s315
      %p317 = scmp.lt.s32.totalorder %s23, 1
      %s318 = scalar_select %p317, %s23, 1
      %p319 = scmp.lt.s32.totalorder %s24, 0
      %s320 = scalar_select %p319, %s24, 0
      %s321 = sadd.s32 %s320, %s318
      %s322 = smul.addr %s321, 8
      %s323 = scalar_lea.vmem %s0, %s322
      %p324 = scmp.lt.s32.totalorder %s23, 1
      %s325 = scalar_select %p324, %s23, 1
      %p326 = scmp.lt.s32.totalorder %s24, 0
      %s327 = scalar_select %p326, %s24, 0
      %s328 = smul.addr %s325, 4
      %s329 = sadd.s32 %s327, %s328
      %s330 = smul.addr %s329, 8
      %s331 = scalar_lea.vmem %s5, %s330
      %p332 = scmp.lt.s32.totalorder %s23, 1
      %s333 = scalar_select %p332, %s23, 1
      %p334 = scmp.lt.s32.totalorder %s24, 0
      %s335 = scalar_select %p334, %s24, 0
      %s336 = smul.addr %s333, 4
      %s337 = sadd.s32 %s335, %s336
      %s338 = smul.addr %s337, 8
      %s339 = scalar_lea.vmem %s6, %s338
      %p340 = scmp.lt.s32.totalorder %s23, 1
      %s341 = scalar_select %p340, %s23, 1
      %p342 = scmp.lt.s32.totalorder %s24, 0
      %s343 = scalar_select %p342, %s24, 0
      %s344 = smul.addr %s341, 4
      %s345 = sadd.s32 %s343, %s344
      %s346 = smul.addr %s345, 8
      %s347 = scalar_lea.vmem %s7, %s346
      %v348 = vld [vmem:[%s323] sm:$0xff]
      %v349 = vld [vmem:[%s1] sm:$0x1]
      %v350 = vld [vmem:[%s2] sm:$0x1]
      %vm351 = vcmask 261120
      %v352 = vsel %vm351, %v348, 0.0
      %353 = vadd.xlane.f32.xlu0 %v352
      %v354 = vpop.xlane.xlu0 %353
      %v355 = vrcp.pop 32.0
      %v356 = vmul.f32 32.0, %v355
      %v357 = vsub.f32 1.0, %v356
      %v358 = vmul.f32 %v355, %v357
      %v359 = vadd.f32 %v355, %v358
      %vm360 = vweird.f32 %v355
      %v361 = vsel %vm360, %v355, %v359
      %v362 = vmul.f32 %v354, %v361
      %v363 = vsub.f32 %v348, %v362
      %v364 = vmul.f32 %v363, %v363
      %v365 = vsel %vm351, %v364, 0.0
      %366 = vadd.xlane.f32.xlu0 %v365
      %v367 = vpop.xlane.xlu0 %366
      %v368 = vrcp.pop 31.0
      %v369 = vmul.f32 31.0, %v368
      %v370 = vsub.f32 1.0, %v369
      %v371 = vmul.f32 %v368, %v370
      %v372 = vadd.f32 %v368, %v371
      %vm373 = vweird.f32 %v368
      %v374 = vsel %vm373, %v368, %v372
      %v375 = vmul.f32 %v367, %v374
      %v376 = vrsqrt.pop %v375
      %v377 = vmul.f32 %v376, %v375
      %v378 = vmul.f32 %v377, %v376
      %v379 = vmul.f32 0.5, %v378
      %v380 = vsub.f32 1.5, %v379
      %v381 = vmul.f32 %v376, %v380
      %v382 = vmul.f32 %v375, %v381
      %vm383 = vcmp.eq.f32.partialorder %v375, inf
      %v384 = vsel %vm383, %v375, %v382
      %vm385 = vcmp.eq.f32.partialorder %v375, 0.0
      %v386 = vand.u32 %v375, 2147483648
      %v387 = vsel %vm385, %v386, %v384
      %v388 = vadd.f32 %v387, 1e-06
      %v389 = vrcp.pop %v388
      %v390 = vmul.f32 %v388, %v389
      %v391 = vsub.f32 1.0, %v390
      %v392 = vmul.f32 %v389, %v391
      %v393 = vadd.f32 %v389, %v392
      %vm394 = vweird.f32 %v388
      %vm395 = vweird.f32 %v389
      %vm396 = vmor %vm394, %vm395
      %v397 = vsel %vm396, %v389, %v393
      %v398 = vand.u32 2147483647, %v388
      %vm399 = vcmp.eq.f32.partialorder %v398, 8.507059e+37
      %v400 = vand.u32 %v388, 2147483648
      %v401 = vor.u32 1.1754944e-38, %v400
      %v402 = vsel %vm399, %v401, %v397
      %v403 = vmul.f32 %v363, %v402
      %v405 = vperm.slane %v349, 0
      %v407 = vmul.f32 %v405, %v403
      %v409 = vperm.slane %v350, 0
      %v411 = vadd.f32 %v407, %v409
      %v412 = vld [vmem:[%s3] sm:$0xff]
      %v413 = vld [vmem:[%s3 + $0x8] sm:$0xff]
      %v414 = vld [vmem:[%s3 + $0x10] sm:$0xff]
      %v415 = vld [vmem:[%s3 + $0x18] sm:$0xff]
      %v416 = vld [vmem:[%s4] sm:$0x1]
      %v418 = vperm.slane %v416, 0
      %v421 = vsel %vm351, %v411, 0
      %423 = vmatpush.msra.mxu0 0.0
      %424 = vmatpush.msra.mxu0 0.0
      %425 = vmatpush.msra.mxu0 0.0
      %426 = vmatpush.msra.mxu0 0.0
      %427 = vmatpush.msra.mxu0 0.0
      %428 = vmatpush.msra.mxu0 0.0
      %429 = vmatpush.msra.mxu0 0.0
      %430 = vmatpush.msra.mxu0 0.0
      %431 = vmatpush.msra.mxu0 0.0
      %432 = vmatpush.msra.mxu0 0.0
      %433 = vmatpush.msra.mxu0 0.0
      %434 = vmatpush.msra.mxu0 0.0
      %435 = vmatpush.msra.mxu0 %v415
      %436 = vmatpush.msra.mxu0 %v414
      %437 = vmatpush.msra.mxu0 %v413
      %438 = vmatpush.msra.mxu0 %v412
      %439 = vmatmul.f32.gmra.mxu0 %v421
      %v440 = vpop.f32.mrf.mxu0
      %v441 = vadd.f32 %v418, %v440
      %442 = vdwg.mxu0
      %vm443 = vcmask 64512
      %444 = vst.msk [vmem:[%s331] sm:$0xff] %vm443, %v441
      %446 = vrot.lane.b32.xlu0 %v441, 96
      %v447 = vpop.permute.xlu0 %446
      %449 = vst.msk [vmem:[%s339] sm:$0xff] %vm443, %v447
      %450 = vrot.lane.b32.xlu0 %v441, 64
      %v451 = vpop.permute.xlu0 %450
      %453 = vst.msk [vmem:[%s347] sm:$0xff] %vm443, %v451
      %454 = vrot.lane.b32.xlu0 %v441, 120
      %v455 = vpop.permute.xlu0 %454
      %s457 = scalar_lea.vmem %s331, 8
      %458 = vst.msk [vmem:[%s457] sm:$0xff] %vm443, %v455
      %459 = vrot.lane.b32.xlu0 %v441, 88
      %v460 = vpop.permute.xlu0 %459
      %s462 = scalar_lea.vmem %s339, 8
      %463 = vst.msk [vmem:[%s462] sm:$0xff] %vm443, %v460
      %464 = vrot.lane.b32.xlu0 %v441, 56
      %v465 = vpop.permute.xlu0 %464
      %s467 = scalar_lea.vmem %s347, 8
      %468 = vst.msk [vmem:[%s467] sm:$0xff] %vm443, %v465
      %469 = vrot.lane.b32.xlu0 %v441, 112
      %v470 = vpop.permute.xlu0 %469
      %s472 = scalar_lea.vmem %s331, 16
      %473 = vst.msk [vmem:[%s472] sm:$0xff] %vm443, %v470
      %474 = vrot.lane.b32.xlu0 %v441, 80
      %v475 = vpop.permute.xlu0 %474
      %s477 = scalar_lea.vmem %s339, 16
      %478 = vst.msk [vmem:[%s477] sm:$0xff] %vm443, %v475
      %479 = vrot.lane.b32.xlu0 %v441, 48
      %v480 = vpop.permute.xlu0 %479
      %s482 = scalar_lea.vmem %s347, 16
      %483 = vst.msk [vmem:[%s482] sm:$0xff] %vm443, %v480
      %484 = vrot.lane.b32.xlu0 %v441, 104
      %v485 = vpop.permute.xlu0 %484
      %s487 = scalar_lea.vmem %s331, 24
      %488 = vst.msk [vmem:[%s487] sm:$0xff] %vm443, %v485
      %489 = vrot.lane.b32.xlu0 %v441, 72
      %v490 = vpop.permute.xlu0 %489
      %s492 = scalar_lea.vmem %s339, 24
      %493 = vst.msk [vmem:[%s492] sm:$0xff] %vm443, %v490
      %494 = vrot.lane.b32.xlu0 %v441, 40
      %v495 = vpop.permute.xlu0 %494
      %s497 = scalar_lea.vmem %s347, 24
      %498 = vst.msk [vmem:[%s497] sm:$0xff] %vm443, %v495
      %p499 = scmp.lt.s32.totalorder %s23, 1
      %s500 = scalar_select %p499, %s23, 1
      %p501 = scmp.lt.s32.totalorder %s24, 0
      %s502 = scalar_select %p501, %s24, 0
      %s503 = smul.addr %s500, 4
      %s504 = sadd.s32 %s502, %s503
      %s505 = smul.addr %s504, 8
      %s506 = scalar_lea.vmem %s5, %s505
      %p507 = scmp.lt.s32.totalorder %s23, 1
      %s508 = scalar_select %p507, %s23, 1
      %p509 = scmp.lt.s32.totalorder %s24, 0
      %s510 = scalar_select %p509, %s24, 0
      %s511 = smul.addr %s508, 4
      %s512 = sadd.s32 %s510, %s511
      %s513 = smul.addr %s512, 8
      %s514 = scalar_lea.vmem %s6, %s513
      %p515 = scmp.lt.s32.totalorder %s23, 1
      %s516 = scalar_select %p515, %s23, 1
      %p517 = scmp.lt.s32.totalorder %s24, 0
      %s518 = scalar_select %p517, %s24, 0
      %s519 = smul.addr %s516, 4
      %s520 = sadd.s32 %s518, %s519
      %s521 = smul.addr %s520, 8
      %s522 = scalar_lea.vmem %s7, %s521
      // Predicated region
      $region41: #{uncertainty_encoder_forward.13} parent=39 // pred_check
        %p523 = pneg %p163
      $region42: #{uncertainty_encoder_forward.13} parent=39 // pred_check_branch
        %525 = sbr.rel (%p523) target = $region44
      $region43: #{uncertainty_encoder_forward.13} parent=39 // pred_region
        _
      $region44: #{uncertainty_encoder_forward.13} parent=39 // pred_fallthru
        _
      // Predicated region
      $region45: #{uncertainty_encoder_forward.13} parent=39 // pred_check
        %p526 = pneg %p191
      $region46: #{uncertainty_encoder_forward.13} parent=39 // pred_check_branch
        %528 = sbr.rel (%p526) target = $region48
      $region47: #{uncertainty_encoder_forward.13} parent=39 // pred_region
        _
      $region48: #{uncertainty_encoder_forward.13} parent=39 // pred_fallthru
        _
      // Predicated region
      $region49: #{uncertainty_encoder_forward.13} parent=39 // pred_check
        %p529 = pneg %p219
      $region50: #{uncertainty_encoder_forward.13} parent=39 // pred_check_branch
        %531 = sbr.rel (%p529) target = $region52
      $region51: #{uncertainty_encoder_forward.13} parent=39 // pred_region
        _
      $region52: #{uncertainty_encoder_forward.13} parent=39 // pred_fallthru
        _
    $region40: #{uncertainty_encoder_forward.13} parent=5 // pred_fallthru
      _
    %p532 = scmp.le.s32.totalorder 2, %s14
    // Predicated region
    $region53: #{uncertainty_encoder_forward.13} parent=5 // pred_check
      %p533 = pneg %p532
    $region54: #{uncertainty_encoder_forward.13} parent=5 // pred_check_branch
      %535 = sbr.rel (%p533) target = $region56
    $region55: #{uncertainty_encoder_forward.13} parent=5 // pred_region
      %s536 = ssub.s32 %s14, 2
      // Predicated region
      $region57: #{uncertainty_encoder_forward.13} parent=55 // pred_check
        %p537 = pneg %p169
      $region58: #{uncertainty_encoder_forward.13} parent=55 // pred_check_branch
        %539 = sbr.rel (%p537) target = $region60
      $region59: #{uncertainty_encoder_forward.13} parent=55 // pred_region
        %p540 = scmp.lt.s32.totalorder %s25, 1
        %s541 = scalar_select %p540, %s25, 1
        %p542 = scmp.lt.s32.totalorder %s26, 0
        %s543 = scalar_select %p542, %s26, 0
        %s544 = smul.addr %s541, 4
        %s545 = sadd.s32 %s543, %s544
        %s546 = smul.addr %s545, 8
        %s547 = scalar_lea.vmem %s5, %s546
      $region60: #{uncertainty_encoder_forward.13} parent=55 // pred_fallthru
        _
      // Predicated region
      $region61: #{uncertainty_encoder_forward.13} parent=55 // pred_check
        %p548 = pneg %p197
      $region62: #{uncertainty_encoder_forward.13} parent=55 // pred_check_branch
        %550 = sbr.rel (%p548) target = $region64
      $region63: #{uncertainty_encoder_forward.13} parent=55 // pred_region
        %p551 = scmp.lt.s32.totalorder %s25, 1
        %s552 = scalar_select %p551, %s25, 1
        %p553 = scmp.lt.s32.totalorder %s26, 0
        %s554 = scalar_select %p553, %s26, 0
        %s555 = smul.addr %s552, 4
        %s556 = sadd.s32 %s554, %s555
        %s557 = smul.addr %s556, 8
        %s558 = scalar_lea.vmem %s6, %s557
      $region64: #{uncertainty_encoder_forward.13} parent=55 // pred_fallthru
        _
      // Predicated region
      $region65: #{uncertainty_encoder_forward.13} parent=55 // pred_check
        %p559 = pneg %p225
      $region66: #{uncertainty_encoder_forward.13} parent=55 // pred_check_branch
        %561 = sbr.rel (%p559) target = $region68
      $region67: #{uncertainty_encoder_forward.13} parent=55 // pred_region
        %p562 = scmp.lt.s32.totalorder %s25, 1
        %s563 = scalar_select %p562, %s25, 1
        %p564 = scmp.lt.s32.totalorder %s26, 0
        %s565 = scalar_select %p564, %s26, 0
        %s566 = smul.addr %s563, 4
        %s567 = sadd.s32 %s565, %s566
        %s568 = smul.addr %s567, 8
        %s569 = scalar_lea.vmem %s7, %s568
      $region68: #{uncertainty_encoder_forward.13} parent=55 // pred_fallthru
        _
    $region56: #{uncertainty_encoder_forward.13} parent=5 // pred_fallthru
      _
  $region6: #{uncertainty_encoder_forward.13} parent=0 // loop_footer
    %s18 = sadd.s32 1, %s14
  $region7: #{uncertainty_encoder_forward.13} parent=0 // loop_footer_branch
    %13 = sbr.rel target = $region3
  $region8: #{uncertainty_encoder_forward.13} parent=0 // loop_exit
    _

// kernel: uncertainty_encoder_forward.15
$region0: #{uncertainty_encoder_forward.15}
  #allocation0 [shape = 'u32[]', space=smem, size = 0x4, offset = 0x4, fixed_abs, tag = 'smem constant byte address 0x4 - core index']
  #allocation1 [shape = 'u32[72,128]{1,0:T(1,128)}', space=vmem, size = 0x9000, scoped, tag = 'internal scratch']
  %s0 = inlined_call_operand.vmem [shape: f32[2,4,8,8], index: 0, kind: input, shape index: {}]
  %s1 = inlined_call_operand.vmem [shape: f32[2,8,32], index: 1, kind: input, shape index: {}]
  %s2 = inlined_call_operand.vmem [shape: f32[32,32], index: 2, kind: input, shape index: {}]
  %s3 = inlined_call_operand.vmem [shape: f32[1,32], index: 3, kind: input, shape index: {}]
  %s4 = inlined_call_operand.vmem [shape: f32[2,8,32], index: 4, kind: output, shape index: {}]
  %s5 = sld [smem:[#allocation0]]
  $region49: #{uncertainty_encoder_forward.15} parent=0
    _
  %s7 = ssub.s32 1, %s5
  %s8 = scalar_select 0, %s7, %s5
  loop: start=0, step=1, limit=4
  $region2: #{uncertainty_encoder_forward.15} parent=0 // loop_pre_header
    _
  $region3: #{uncertainty_encoder_forward.15} parent=0 // loop_header
    %s10 = sphi 0, %s14
    %p11 = scmp.ge.s32.totalorder %s10, 4
    %s17 = sphi 0, %s29
    %s18 = sphi 0, %s25
    %s19 = sphi 0, %s17
    %s20 = sphi 0, %s18
    %s21 = sphi 0, %s19
    %s22 = sphi 0, %s20
    %s34 = sphi 0, %s36
    %s37 = sphi 0, %s34
    %s38 = sphi 0, %s37
    %s54 = sphi 0, %s38
    %s62 = sphi 0, %s64
    %s65 = sphi 0, %s62
    %s66 = sphi 0, %s65
    %s82 = sphi 0, %s66
    %s86 = sphi 0, %s86
    %s88 = sphi 0, %s86
    %s89 = sphi 0, %s88
    %s103 = sphi 0, %s89
    %s107 = sphi 0, %s107
    %s109 = sphi 0, %s107
    %s110 = sphi 0, %s109
    %s124 = sphi 0, %s110
    %s132 = sphi 0, %s134
    %s135 = sphi 0, %s132
    %s136 = sphi 0, %s135
    %s152 = sphi 0, %s136
  $region4: #{uncertainty_encoder_forward.15} parent=0 // loop_header_branch
    %13 = sbr.rel (%p11) target = $region8
  $region5: #{uncertainty_encoder_forward.15} parent=0 // loop_body
    %s15 = ssub.s32 %s10, 1
    %s16 = ssub.s32 %s10, 2
    %s23 = sadd.s32 1, %s18
    %p24 = scmp.ge.s32.totalorder %s23, 1
    %s25 = scalar_select %p24, 0, %s23
    %s26 = sadd.s32 1, %s17
    %s27 = scalar_select %p24, %s26, %s17
    %p28 = scmp.ge.s32.totalorder %s27, 2
    %s29 = scalar_select %p28, 0, %s27
    %s30 = ssub.s32 %s17, %s29
    %s31 = ssub.s32 %s18, %s25
    %s32 = sor.u32 %s30, %s31
    %p33 = scmp.eq.s32.totalorder %s32, 0
    %s35 = sadd.s32 %s34, 1
    %s36 = scalar_select %p33, %s34, %s35
    %p39 = pneg %p33
    %p40 = scmp.eq.s32.totalorder %s10, 1
    %p41 = por %p39, %p40
    %p42 = scmp.ne.s32.totalorder %s34, %s37
    %p43 = scmp.eq.s32.totalorder %s10, 0
    %p44 = por %p42, %p43
    %p45 = scmp.ne.s32.totalorder %s34, %s37
    %p46 = scmp.eq.s32.totalorder %s15, 1
    %p47 = por %p45, %p46
    %p48 = scmp.ne.s32.totalorder %s37, %s38
    %p49 = scmp.eq.s32.totalorder %s15, 0
    %p50 = por %p48, %p49
    %p51 = scmp.ne.s32.totalorder %s37, %s38
    %p52 = scmp.eq.s32.totalorder %s16, 1
    %p53 = por %p51, %p52
    %p55 = scmp.ne.s32.totalorder %s38, %s54
    %p56 = scmp.eq.s32.totalorder %s16, 0
    %p57 = por %p55, %p56
    %s58 = ssub.s32 %s17, %s29
    %s59 = ssub.s32 %s18, %s25
    %s60 = sor.u32 %s58, %s59
    %p61 = scmp.eq.s32.totalorder %s60, 0
    %s63 = sadd.s32 %s62, 1
    %s64 = scalar_select %p61, %s62, %s63
    %p67 = pneg %p61
    %p68 = scmp.eq.s32.totalorder %s10, 1
    %p69 = por %p67, %p68
    %p70 = scmp.ne.s32.totalorder %s62, %s65
    %p71 = scmp.eq.s32.totalorder %s10, 0
    %p72 = por %p70, %p71
    %p73 = scmp.ne.s32.totalorder %s62, %s65
    %p74 = scmp.eq.s32.totalorder %s15, 1
    %p75 = por %p73, %p74
    %p76 = scmp.ne.s32.totalorder %s65, %s66
    %p77 = scmp.eq.s32.totalorder %s15, 0
    %p78 = por %p76, %p77
    %p79 = scmp.ne.s32.totalorder %s65, %s66
    %p80 = scmp.eq.s32.totalorder %s16, 1
    %p81 = por %p79, %p80
    %p83 = scmp.ne.s32.totalorder %s66, %s82
    %p84 = scmp.eq.s32.totalorder %s16, 0
    %p85 = por %p83, %p84
    %s87 = sadd.s32 %s86, 1
    %p90 = scmp.eq.s32.totalorder %s10, 1
    %p91 = scmp.ne.s32.totalorder %s86, %s88
    %p92 = scmp.eq.s32.totalorder %s10, 0
    %p93 = por %p91, %p92
    %p94 = scmp.ne.s32.totalorder %s86, %s88
    %p95 = scmp.eq.s32.totalorder %s15, 1
    %p96 = por %p94, %p95
    %p97 = scmp.ne.s32.totalorder %s88, %s89
    %p98 = scmp.eq.s32.totalorder %s15, 0
    %p99 = por %p97, %p98
    %p100 = scmp.ne.s32.totalorder %s88, %s89
    %p101 = scmp.eq.s32.totalorder %s16, 1
    %p102 = por %p100, %p101
    %p104 = scmp.ne.s32.totalorder %s89, %s103
    %p105 = scmp.eq.s32.totalorder %s16, 0
    %p106 = por %p104, %p105
    %s108 = sadd.s32 %s107, 1
    %p111 = scmp.eq.s32.totalorder %s10, 1
    %p112 = scmp.ne.s32.totalorder %s107, %s109
    %p113 = scmp.eq.s32.totalorder %s10, 0
    %p114 = por %p112, %p113
    %p115 = scmp.ne.s32.totalorder %s107, %s109
    %p116 = scmp.eq.s32.totalorder %s15, 1
    %p117 = por %p115, %p116
    %p118 = scmp.ne.s32.totalorder %s109, %s110
    %p119 = scmp.eq.s32.totalorder %s15, 0
    %p120 = por %p118, %p119
    %p121 = scmp.ne.s32.totalorder %s109, %s110
    %p122 = scmp.eq.s32.totalorder %s16, 1
    %p123 = por %p121, %p122
    %p125 = scmp.ne.s32.totalorder %s110, %s124
    %p126 = scmp.eq.s32.totalorder %s16, 0
    %p127 = por %p125, %p126
    %s128 = ssub.s32 %s17, %s29
    %s129 = ssub.s32 %s18, %s25
    %s130 = sor.u32 %s128, %s129
    %p131 = scmp.eq.s32.totalorder %s130, 0
    %s133 = sadd.s32 %s132, 1
    %s134 = scalar_select %p131, %s132, %s133
    %p137 = pneg %p131
    %p138 = scmp.eq.s32.totalorder %s10, 1
    %p139 = por %p137, %p138
    %p140 = scmp.ne.s32.totalorder %s132, %s135
    %p141 = scmp.eq.s32.totalorder %s10, 0
    %p142 = por %p140, %p141
    %p143 = scmp.ne.s32.totalorder %s132, %s135
    %p144 = scmp.eq.s32.totalorder %s15, 1
    %p145 = por %p143, %p144
    %p146 = scmp.ne.s32.totalorder %s135, %s136
    %p147 = scmp.eq.s32.totalorder %s15, 0
    %p148 = por %p146, %p147
    %p149 = scmp.ne.s32.totalorder %s135, %s136
    %p150 = scmp.eq.s32.totalorder %s16, 1
    %p151 = por %p149, %p150
    %p153 = scmp.ne.s32.totalorder %s136, %s152
    %p154 = scmp.eq.s32.totalorder %s16, 0
    %p155 = por %p153, %p154
    %p156 = scmp.le.s32.totalorder 1, %s10
    %p157 = scmp.lt.s32.totalorder %s10, 3
    %p158 = pnand %p156, %p157
    %p159 = pneg %p158
    // Predicated region
    $region9: #{uncertainty_encoder_forward.15} parent=5 // pred_check
      _
    $region10: #{uncertainty_encoder_forward.15} parent=5 // pred_check_branch
      %161 = sbr.rel (%p158) target = $region12
    $region11: #{uncertainty_encoder_forward.15} parent=5 // pred_region
      %s162 = ssub.s32 %s10, 1
      // Predicated region
      $region13: #{uncertainty_encoder_forward.15} parent=11 // pred_check
        %p163 = pneg %p99
      $region14: #{uncertainty_encoder_forward.15} parent=11 // pred_check_branch
        %165 = sbr.rel (%p163) target = $region16
      $region15: #{uncertainty_encoder_forward.15} parent=11 // pred_region
        _
      $region16: #{uncertainty_encoder_forward.15} parent=11 // pred_fallthru
        _
      // Predicated region
      $region17: #{uncertainty_encoder_forward.15} parent=11 // pred_check
        %p166 = pneg %p120
      $region18: #{uncertainty_encoder_forward.15} parent=11 // pred_check_branch
        %168 = sbr.rel (%p166) target = $region20
      $region19: #{uncertainty_encoder_forward.15} parent=11 // pred_region
        _
      $region20: #{uncertainty_encoder_forward.15} parent=11 // pred_fallthru
        _
    $region12: #{uncertainty_encoder_forward.15} parent=5 // pred_fallthru
      _
    %p169 = scmp.lt.s32.totalorder %s10, 2
    // Predicated region
    $region21: #{uncertainty_encoder_forward.15} parent=5 // pred_check
      %p170 = pneg %p169
    $region22: #{uncertainty_encoder_forward.15} parent=5 // pred_check_branch
      %172 = sbr.rel (%p170) target = $region24
    $region23: #{uncertainty_encoder_forward.15} parent=5 // pred_region
      // Predicated region
      $region25: #{uncertainty_encoder_forward.15} parent=23 // pred_check
        %p173 = pneg %p44
      $region26: #{uncertainty_encoder_forward.15} parent=23 // pred_check_branch
        %175 = sbr.rel (%p173) target = $region28
      $region27: #{uncertainty_encoder_forward.15} parent=23 // pred_region
        %p176 = scmp.lt.s32.totalorder %s17, 1
        %s177 = scalar_select %p176, %s17, 1
        %p178 = scmp.lt.s32.totalorder %s18, 0
        %s179 = scalar_select %p178, %s18, 0
        %s180 = smul.addr %s177, 4
        %s181 = sadd.s32 %s179, %s180
        %s182 = smul.addr %s181, 8
        %s183 = scalar_lea.vmem %s0, %s182
      $region28: #{uncertainty_encoder_forward.15} parent=23 // pred_fallthru
        _
      // Predicated region
      $region29: #{uncertainty_encoder_forward.15} parent=23 // pred_check
        %p184 = pneg %p72
      $region30: #{uncertainty_encoder_forward.15} parent=23 // pred_check_branch
        %186 = sbr.rel (%p184) target = $region32
      $region31: #{uncertainty_encoder_forward.15} parent=23 // pred_region
        %p187 = scmp.lt.s32.totalorder %s17, 1
        %s188 = scalar_select %p187, %s17, 1
        %p189 = scmp.lt.s32.totalorder %s18, 0
        %s190 = scalar_select %p189, %s18, 0
        %s191 = sadd.s32 %s190, %s188
        %s192 = smul.addr %s191, 8
        %s193 = scalar_lea.vmem %s1, %s192
      $region32: #{uncertainty_encoder_forward.15} parent=23 // pred_fallthru
        _
    $region24: #{uncertainty_encoder_forward.15} parent=5 // pred_fallthru
      _
    %p194 = scmp.le.s32.totalorder 1, %s10
    %p195 = scmp.lt.s32.totalorder %s10, 3
    %p196 = pnand %p194, %p195
    %p197 = pneg %p196
    // Predicated region
    $region33: #{uncertainty_encoder_forward.15} parent=5 // pred_check
      _
    $region34: #{uncertainty_encoder_forward.15} parent=5 // pred_check_branch
      %199 = sbr.rel (%p196) target = $region36
    $region35: #{uncertainty_encoder_forward.15} parent=5 // pred_region
      %s200 = ssub.s32 %s10, 1
      %p201 = scmp.lt.s32.totalorder %s19, 1
      %s202 = scalar_select %p201, %s19, 1
      %p203 = scmp.lt.s32.totalorder %s20, 0
      %s204 = scalar_select %p203, %s20, 0
      %s205 = smul.addr %s202, 4
      %s206 = sadd.s32 %s204, %s205
      %s207 = smul.addr %s206, 8
      %s208 = scalar_lea.vmem %s0, %s207
      %p209 = pneg %p50
      %p210 = pneg %p47
      %p211 = scmp.lt.s32.totalorder %s19, 1
      %s212 = scalar_select %p211, %s19, 1
      %p213 = scmp.lt.s32.totalorder %s20, 0
      %s214 = scalar_select %p213, %s20, 0
      %s215 = sadd.s32 %s214, %s212
      %s216 = smul.addr %s215, 8
      %s217 = scalar_lea.vmem %s1, %s216
      %p218 = pneg %p78
      %p219 = pneg %p75
      %p220 = pneg %p99
      %p221 = pneg %p96
      %p222 = pneg %p120
      %p223 = pneg %p117
      %p224 = pneg %p148
      %p225 = pneg %p145
      %p226 = scmp.lt.s32.totalorder %s19, 1
      %s227 = scalar_select %p226, %s19, 1
      %p228 = scmp.lt.s32.totalorder %s20, 0
      %s229 = scalar_select %p228, %s20, 0
      %s230 = sadd.s32 %s229, %s227
      %s231 = smul.addr %s230, 8
      %s232 = scalar_lea.vmem %s4, %s231
      %p233 = scmp.lt.s32.totalorder %s19, 1
      %s234 = scalar_select %p233, %s19, 1
      %p235 = scmp.lt.s32.totalorder %s20, 0
      %s236 = scalar_select %p235, %s20, 0
      %s237 = smul.addr %s234, 4
      %s238 = sadd.s32 %s236, %s237
      %s239 = smul.addr %s238, 8
      %s240 = scalar_lea.vmem %s0, %s239
      %p241 = scmp.lt.s32.totalorder %s19, 1
      %s242 = scalar_select %p241, %s19, 1
      %p243 = scmp.lt.s32.totalorder %s20, 0
      %s244 = scalar_select %p243, %s20, 0
      %s245 = sadd.s32 %s244, %s242
      %s246 = smul.addr %s245, 8
      %s247 = scalar_lea.vmem %s1, %s246
      %p248 = scmp.lt.s32.totalorder %s19, 1
      %s249 = scalar_select %p248, %s19, 1
      %p250 = scmp.lt.s32.totalorder %s20, 0
      %s251 = scalar_select %p250, %s20, 0
      %s252 = sadd.s32 %s251, %s249
      %s253 = smul.addr %s252, 8
      %s254 = scalar_lea.vmem %s4, %s253
      %v255 = vld [vmem:[%s240] sm:$0xff]
      %s256 = scalar_lea.vmem %s240, 8
      %v257 = vld [vmem:[%s256] sm:$0xff]
      %s258 = scalar_lea.vmem %s240, 16
      %v259 = vld [vmem:[%s258] sm:$0xff]
      %s260 = scalar_lea.vmem %s240, 24
      %v261 = vld [vmem:[%s260] sm:$0xff]
      %263 = vrot.lane.b32.xlu0 %v257, 8
      %v264 = vpop.permute.xlu0 %263
      %267 = vrot.lane.b32.xlu0 %v259, 16
      %v268 = vpop.permute.xlu0 %267
      %271 = vrot.lane.b32.xlu0 %v261, 24
      %v272 = vpop.permute.xlu0 %271
      %vm274 = vcmask 64512
      %v275 = vsel %vm274, %v255, %v264
      %vm276 = vcmask 130048
      %v277 = vsel %vm276, %v275, %v268
      %vm278 = vcmask 195584
      %v279 = vsel %vm278, %v277, %v272
      %v280 = vld [vmem:[%s2] sm:$0xff]
      %v281 = vld [vmem:[%s2 + $0x8] sm:$0xff]
      %v282 = vld [vmem:[%s2 + $0x10] sm:$0xff]
      %v283 = vld [vmem:[%s2 + $0x18] sm:$0xff]
      %v284 = vld [vmem:[%s3] sm:$0x1]
      %v286 = vperm.slane %v284, 0
      %vm288 = vcmask 261120
      %v290 = vsel %vm288, %v279, 0
      %292 = vmatpush.msra.mxu0 0.0
      %293 = vmatpush.msra.mxu0 0.0
      %294 = vmatpush.msra.mxu0 0.0
      %295 = vmatpush.msra.mxu0 0.0
      %296 = vmatpush.msra.mxu0 0.0
      %297 = vmatpush.msra.mxu0 0.0
      %298 = vmatpush.msra.mxu0 0.0
      %299 = vmatpush.msra.mxu0 0.0
      %300 = vmatpush.msra.mxu0 0.0
      %301 = vmatpush.msra.mxu0 0.0
      %302 = vmatpush.msra.mxu0 0.0
      %303 = vmatpush.msra.mxu0 0.0
      %304 = vmatpush.msra.mxu0 %v283
      %305 = vmatpush.msra.mxu0 %v282
      %306 = vmatpush.msra.mxu0 %v281
      %307 = vmatpush.msra.mxu0 %v280
      %308 = vmatmul.f32.gmra.mxu0 %v290
      %v309 = vpop.f32.mrf.mxu0
      %v310 = vadd.f32 %v286, %v309
      %311 = vdwg.mxu0
      %v312 = vld [vmem:[%s247] sm:$0xff]
      %v313 = vadd.f32 %v312, %v310
      %314 = vst.msk [vmem:[%s254] sm:$0xff] %vm288, %v313
      %p315 = scmp.lt.s32.totalorder %s19, 1
      %s316 = scalar_select %p315, %s19, 1
      %p317 = scmp.lt.s32.totalorder %s20, 0
      %s318 = scalar_select %p317, %s20, 0
      %s319 = sadd.s32 %s318, %s316
      %s320 = smul.addr %s319, 8
      %s321 = scalar_lea.vmem %s4, %s320
      // Predicated region
      $region37: #{uncertainty_encoder_forward.15} parent=35 // pred_check
        %p322 = pneg %p145
      $region38: #{uncertainty_encoder_forward.15} parent=35 // pred_check_branch
        %324 = sbr.rel (%p322) target = $region40
      $region39: #{uncertainty_encoder_forward.15} parent=35 // pred_region
        _
      $region40: #{uncertainty_encoder_forward.15} parent=35 // pred_fallthru
        _
    $region36: #{uncertainty_encoder_forward.15} parent=5 // pred_fallthru
      _
    %p325 = scmp.le.s32.totalorder 2, %s10
    // Predicated region
    $region41: #{uncertainty_encoder_forward.15} parent=5 // pred_check
      %p326 = pneg %p325
    $region42: #{uncertainty_encoder_forward.15} parent=5 // pred_check_branch
      %328 = sbr.rel (%p326) target = $region44
    $region43: #{uncertainty_encoder_forward.15} parent=5 // pred_region
      %s329 = ssub.s32 %s10, 2
      // Predicated region
      $region45: #{uncertainty_encoder_forward.15} parent=43 // pred_check
        %p330 = pneg %p151
      $region46: #{uncertainty_encoder_forward.15} parent=43 // pred_check_branch
        %332 = sbr.rel (%p330) target = $region48
      $region47: #{uncertainty_encoder_forward.15} parent=43 // pred_region
        %p333 = scmp.lt.s32.totalorder %s21, 1
        %s334 = scalar_select %p333, %s21, 1
        %p335 = scmp.lt.s32.totalorder %s22, 0
        %s336 = scalar_select %p335, %s22, 0
        %s337 = sadd.s32 %s336, %s334
        %s338 = smul.addr %s337, 8
        %s339 = scalar_lea.vmem %s4, %s338
      $region48: #{uncertainty_encoder_forward.15} parent=43 // pred_fallthru
        _
    $region44: #{uncertainty_encoder_forward.15} parent=5 // pred_fallthru
      _
  $region6: #{uncertainty_encoder_forward.15} parent=0 // loop_footer
    %s14 = sadd.s32 1, %s10
  $region7: #{uncertainty_encoder_forward.15} parent=0 // loop_footer_branch
    %9 = sbr.rel target = $region3
  $region8: #{uncertainty_encoder_forward.15} parent=0 // loop_exit
    _

// kernel: uncertainty_encoder_forward.16
$region0: #{uncertainty_encoder_forward.16}
  #allocation0 [shape = 'u32[]', space=smem, size = 0x4, offset = 0x4, fixed_abs, tag = 'smem constant byte address 0x4 - core index']
  #allocation1 [shape = 'u32[72,128]{1,0:T(1,128)}', space=vmem, size = 0x9000, scoped, tag = 'internal scratch']
  %s0 = inlined_call_operand.vmem [shape: f32[2,8,32], index: 0, kind: input, shape index: {}]
  %s1 = inlined_call_operand.vmem [shape: f32[1,32], index: 1, kind: input, shape index: {}]
  %s2 = inlined_call_operand.vmem [shape: f32[1,32], index: 2, kind: input, shape index: {}]
  %s3 = inlined_call_operand.hbm [shape: f32[32,2048], index: 3, kind: input, shape index: {}]
  %s4 = inlined_call_operand.hbm [shape: f32[1,2048], index: 4, kind: input, shape index: {}]
  %s5 = inlined_call_operand.vmem [shape: f32[2,8,2048], index: 5, kind: output, shape index: {}]
  %s6 = sld [smem:[#allocation0]]
  $region61: #{uncertainty_encoder_forward.16} parent=0
    _
  %s8 = ssub.s32 1, %s6
  %s9 = scalar_select 0, %s8, %s6
  $region1: #{uncertainty_encoder_forward.16} parent=0
    #allocation2 [shape = 'u8[131072]{0}', space=vmem, size = 0x20000, scoped, tag = 'input window, operand 3']
    #allocation3 [shape = 's32[2]{0}', space=sflag, size = 0x8, scoped, tag = 'scoped memory for uncertainty_encoder_forward.16']
    #allocation4 [shape = 'u8[4096]{0}', space=vmem, size = 0x1000, scoped, tag = 'input window, operand 4']
    #allocation5 [shape = 's32[2]{0}', space=sflag, size = 0x8, scoped, tag = 'scoped memory for uncertainty_encoder_forward.16']
    %10 = vsyncpa [#allocation3], 0
    %s11 = scalar_lea.sflag [#allocation3], 1
    %12 = vsyncpa %s11, 0
    %13 = vsyncpa [#allocation5], 0
    %s14 = scalar_lea.sflag [#allocation5], 1
    %15 = vsyncpa %s14, 0
    loop: start=0, step=1, limit=10
    $region2: #{uncertainty_encoder_forward.16} parent=1 // loop_pre_header
      _
    $region3: #{uncertainty_encoder_forward.16} parent=1 // loop_header
      %s17 = sphi 0, %s21
      %p18 = scmp.ge.s32.totalorder %s17, 10
      %s24 = sphi 0, %s43
      %s25 = sphi 0, %s39
      %s26 = sphi 0, %s35
      %s27 = sphi 0, %s24
      %s28 = sphi 0, %s25
      %s29 = sphi 0, %s26
      %s30 = sphi 0, %s27
      %s31 = sphi 0, %s28
      %s32 = sphi 0, %s29
      %s48 = sphi 0, %s50
      %s51 = sphi 0, %s48
      %s52 = sphi 0, %s51
      %s68 = sphi 0, %s52
      %s72 = sphi 0, %s72
      %s74 = sphi 0, %s72
      %s75 = sphi 0, %s74
      %s89 = sphi 0, %s75
      %s93 = sphi 0, %s93
      %s95 = sphi 0, %s93
      %s96 = sphi 0, %s95
      %s110 = sphi 0, %s96
      %s116 = sphi 0, %s118
      %s119 = sphi 0, %s116
      %s120 = sphi 0, %s119
      %s136 = sphi 0, %s120
      %s142 = sphi 0, %s144
      %s145 = sphi 0, %s142
      %s146 = sphi 0, %s145
      %s162 = sphi 0, %s146
      %s172 = sphi 0, %s174
      %s175 = sphi 0, %s172
      %s176 = sphi 0, %s175
      %s192 = sphi 0, %s176
    $region4: #{uncertainty_encoder_forward.16} parent=1 // loop_header_branch
      %20 = sbr.rel (%p18) target = $region8
    $region5: #{uncertainty_encoder_forward.16} parent=1 // loop_body
      %s22 = ssub.s32 %s17, 1
      %s23 = ssub.s32 %s17, 2
      %s33 = sadd.s32 1, %s26
      %p34 = scmp.ge.s32.totalorder %s33, 4
      %s35 = scalar_select %p34, 0, %s33
      %s36 = sadd.s32 1, %s25
      %s37 = scalar_select %p34, %s36, %s25
      %p38 = scmp.ge.s32.totalorder %s37, 1
      %s39 = scalar_select %p38, 0, %s37
      %s40 = sadd.s32 1, %s24
      %s41 = scalar_select %p38, %s40, %s24
      %p42 = scmp.ge.s32.totalorder %s41, 2
      %s43 = scalar_select %p42, 0, %s41
      %s44 = ssub.s32 %s24, %s43
      %s45 = ssub.s32 %s25, %s39
      %s46 = sor.u32 %s44, %s45
      %p47 = scmp.eq.s32.totalorder %s46, 0
      %s49 = sadd.s32 %s48, 1
      %s50 = scalar_select %p47, %s48, %s49
      %p53 = pneg %p47
      %p54 = scmp.eq.s32.totalorder %s17, 7
      %p55 = por %p53, %p54
      %p56 = scmp.ne.s32.totalorder %s48, %s51
      %p57 = scmp.eq.s32.totalorder %s17, 0
      %p58 = por %p56, %p57
      %p59 = scmp.ne.s32.totalorder %s48, %s51
      %p60 = scmp.eq.s32.totalorder %s22, 7
      %p61 = por %p59, %p60
      %p62 = scmp.ne.s32.totalorder %s51, %s52
      %p63 = scmp.eq.s32.totalorder %s22, 0
      %p64 = por %p62, %p63
      %p65 = scmp.ne.s32.totalorder %s51, %s52
      %p66 = scmp.eq.s32.totalorder %s23, 7
      %p67 = por %p65, %p66
      %p69 = scmp.ne.s32.totalorder %s52, %s68
      %p70 = scmp.eq.s32.totalorder %s23, 0
      %p71 = por %p69, %p70
      %s73 = sadd.s32 %s72, 1
      %p76 = scmp.eq.s32.totalorder %s17, 7
      %p77 = scmp.ne.s32.totalorder %s72, %s74
      %p78 = scmp.eq.s32.totalorder %s17, 0
      %p79 = por %p77, %p78
      %p80 = scmp.ne.s32.totalorder %s72, %s74
      %p81 = scmp.eq.s32.totalorder %s22, 7
      %p82 = por %p80, %p81
      %p83 = scmp.ne.s32.totalorder %s74, %s75
      %p84 = scmp.eq.s32.totalorder %s22, 0
      %p85 = por %p83, %p84
      %p86 = scmp.ne.s32.totalorder %s74, %s75
      %p87 = scmp.eq.s32.totalorder %s23, 7
      %p88 = por %p86, %p87
      %p90 = scmp.ne.s32.totalorder %s75, %s89
      %p91 = scmp.eq.s32.totalorder %s23, 0
      %p92 = por %p90, %p91
      %s94 = sadd.s32 %s93, 1
      %p97 = scmp.eq.s32.totalorder %s17, 7
      %p98 = scmp.ne.s32.totalorder %s93, %s95
      %p99 = scmp.eq.s32.totalorder %s17, 0
      %p100 = por %p98, %p99
      %p101 = scmp.ne.s32.totalorder %s93, %s95
      %p102 = scmp.eq.s32.totalorder %s22, 7
      %p103 = por %p101, %p102
      %p104 = scmp.ne.s32.totalorder %s95, %s96
      %p105 = scmp.eq.s32.totalorder %s22, 0
      %p106 = por %p104, %p105
      %p107 = scmp.ne.s32.totalorder %s95, %s96
      %p108 = scmp.eq.s32.totalorder %s23, 7
      %p109 = por %p107, %p108
      %p111 = scmp.ne.s32.totalorder %s96, %s110
      %p112 = scmp.eq.s32.totalorder %s23, 0
      %p113 = por %p111, %p112
      %s114 = ssub.s32 %s26, %s35
      %p115 = scmp.eq.s32.totalorder %s114, 0
      %s117 = sadd.s32 %s116, 1
      %s118 = scalar_select %p115, %s116, %s117
      %p121 = pneg %p115
      %p122 = scmp.eq.s32.totalorder %s17, 7
      %p123 = por %p121, %p122
      %p124 = scmp.ne.s32.totalorder %s116, %s119
      %p125 = scmp.eq.s32.totalorder %s17, 0
      %p126 = por %p124, %p125
      %p127 = scmp.ne.s32.totalorder %s116, %s119
      %p128 = scmp.eq.s32.totalorder %s22, 7
      %p129 = por %p127, %p128
      %p130 = scmp.ne.s32.totalorder %s119, %s120
      %p131 = scmp.eq.s32.totalorder %s22, 0
      %p132 = por %p130, %p131
      %p133 = scmp.ne.s32.totalorder %s119, %s120
      %p134 = scmp.eq.s32.totalorder %s23, 7
      %p135 = por %p133, %p134
      %p137 = scmp.ne.s32.totalorder %s120, %s136
      %p138 = scmp.eq.s32.totalorder %s23, 0
      %p139 = por %p137, %p138
      %s140 = ssub.s32 %s26, %s35
      %p141 = scmp.eq.s32.totalorder %s140, 0
      %s143 = sadd.s32 %s142, 1
      %s144 = scalar_select %p141, %s142, %s143
      %p147 = pneg %p141
      %p148 = scmp.eq.s32.totalorder %s17, 7
      %p149 = por %p147, %p148
      %p150 = scmp.ne.s32.totalorder %s142, %s145
      %p151 = scmp.eq.s32.totalorder %s17, 0
      %p152 = por %p150, %p151
      %p153 = scmp.ne.s32.totalorder %s142, %s145
      %p154 = scmp.eq.s32.totalorder %s22, 7
      %p155 = por %p153, %p154
      %p156 = scmp.ne.s32.totalorder %s145, %s146
      %p157 = scmp.eq.s32.totalorder %s22, 0
      %p158 = por %p156, %p157
      %p159 = scmp.ne.s32.totalorder %s145, %s146
      %p160 = scmp.eq.s32.totalorder %s23, 7
      %p161 = por %p159, %p160
      %p163 = scmp.ne.s32.totalorder %s146, %s162
      %p164 = scmp.eq.s32.totalorder %s23, 0
      %p165 = por %p163, %p164
      %s166 = ssub.s32 %s24, %s43
      %s167 = ssub.s32 %s25, %s39
      %s168 = sor.u32 %s166, %s167
      %s169 = ssub.s32 %s26, %s35
      %s170 = sor.u32 %s168, %s169
      %p171 = scmp.eq.s32.totalorder %s170, 0
      %s173 = sadd.s32 %s172, 1
      %s174 = scalar_select %p171, %s172, %s173
      %p177 = pneg %p171
      %p178 = scmp.eq.s32.totalorder %s17, 7
      %p179 = por %p177, %p178
      %p180 = scmp.ne.s32.totalorder %s172, %s175
      %p181 = scmp.eq.s32.totalorder %s17, 0
      %p182 = por %p180, %p181
      %p183 = scmp.ne.s32.totalorder %s172, %s175
      %p184 = scmp.eq.s32.totalorder %s22, 7
      %p185 = por %p183, %p184
      %p186 = scmp.ne.s32.totalorder %s175, %s176
      %p187 = scmp.eq.s32.totalorder %s22, 0
      %p188 = por %p186, %p187
      %p189 = scmp.ne.s32.totalorder %s175, %s176
      %p190 = scmp.eq.s32.totalorder %s23, 7
      %p191 = por %p189, %p190
      %p193 = scmp.ne.s32.totalorder %s176, %s192
      %p194 = scmp.eq.s32.totalorder %s23, 0
      %p195 = por %p193, %p194
      %p196 = scmp.le.s32.totalorder 1, %s17
      %p197 = scmp.lt.s32.totalorder %s17, 9
      %p198 = pnand %p196, %p197
      %p199 = pneg %p198
      // Predicated region
      $region9: #{uncertainty_encoder_forward.16} parent=5 // pred_check
        _
      $region10: #{uncertainty_encoder_forward.16} parent=5 // pred_check_branch
        %201 = sbr.rel (%p198) target = $region12
      $region11: #{uncertainty_encoder_forward.16} parent=5 // pred_region
        %s202 = ssub.s32 %s17, 1
        // Predicated region
        $region13: #{uncertainty_encoder_forward.16} parent=11 // pred_check
          %p203 = pneg %p85
        $region14: #{uncertainty_encoder_forward.16} parent=11 // pred_check_branch
          %205 = sbr.rel (%p203) target = $region16
        $region15: #{uncertainty_encoder_forward.16} parent=11 // pred_region
          _
        $region16: #{uncertainty_encoder_forward.16} parent=11 // pred_fallthru
          _
        // Predicated region
        $region17: #{uncertainty_encoder_forward.16} parent=11 // pred_check
          %p206 = pneg %p106
        $region18: #{uncertainty_encoder_forward.16} parent=11 // pred_check_branch
          %208 = sbr.rel (%p206) target = $region20
        $region19: #{uncertainty_encoder_forward.16} parent=11 // pred_region
          _
        $region20: #{uncertainty_encoder_forward.16} parent=11 // pred_fallthru
          _
      $region12: #{uncertainty_encoder_forward.16} parent=5 // pred_fallthru
        _
      %p209 = scmp.lt.s32.totalorder %s17, 8
      // Predicated region
      $region21: #{uncertainty_encoder_forward.16} parent=5 // pred_check
        %p210 = pneg %p209
      $region22: #{uncertainty_encoder_forward.16} parent=5 // pred_check_branch
        %212 = sbr.rel (%p210) target = $region24
      $region23: #{uncertainty_encoder_forward.16} parent=5 // pred_region
        // Predicated region
        $region25: #{uncertainty_encoder_forward.16} parent=23 // pred_check
          %p213 = pneg %p58
        $region26: #{uncertainty_encoder_forward.16} parent=23 // pred_check_branch
          %215 = sbr.rel (%p213) target = $region28
        $region27: #{uncertainty_encoder_forward.16} parent=23 // pred_region
          %p216 = scmp.lt.s32.totalorder %s24, 1
          %s217 = scalar_select %p216, %s24, 1
          %p218 = scmp.lt.s32.totalorder %s25, 0
          %s219 = scalar_select %p218, %s25, 0
          %s220 = sadd.s32 %s219, %s217
          %s221 = smul.addr %s220, 8
          %s222 = scalar_lea.vmem %s0, %s221
        $region28: #{uncertainty_encoder_forward.16} parent=23 // pred_fallthru
          _
        // Predicated region
        $region29: #{uncertainty_encoder_forward.16} parent=23 // pred_check
          %p223 = pneg %p126
        $region30: #{uncertainty_encoder_forward.16} parent=23 // pred_check_branch
          %225 = sbr.rel (%p223) target = $region32
        $region31: #{uncertainty_encoder_forward.16} parent=23 // pred_region
          %s226 = sand.u32 %s116, 1
          %s227 = scalar_lea.sflag [#allocation3], %s226
          %s228 = sand.u32 %s116, 1
          %s229 = smul.addr %s228, 128
          %s230 = scalar_lea.vmem [#allocation2], %s229
          %s231 = smul.u32 4, %s26
          %233 = vsyncadd %s227, 0
          %s234 = smul.addr %s231, 8
          %s235 = scalar_lea.hbm %s3, %s234
          %s236 = sshll.u32 %s235, 4
          %s237 = int_to_ptr.hbm [resolvable:$true] %s236
          %s238 = sshll.u32 %s230, 4
          %s239 = int_to_ptr.vmem [resolvable:$true] %s238
          %244 = dma.hbm_to_vmem [thread:$0]  %s237, 2048, %s239, %s227, 2048, 512, 32
        $region32: #{uncertainty_encoder_forward.16} parent=23 // pred_fallthru
          _
        // Predicated region
        $region33: #{uncertainty_encoder_forward.16} parent=23 // pred_check
          %p245 = pneg %p152
        $region34: #{uncertainty_encoder_forward.16} parent=23 // pred_check_branch
          %247 = sbr.rel (%p245) target = $region36
        $region35: #{uncertainty_encoder_forward.16} parent=23 // pred_region
          %s248 = sand.u32 %s142, 1
          %s249 = scalar_lea.sflag [#allocation5], %s248
          %s250 = sand.u32 %s142, 1
          %s251 = smul.addr %s250, 4
          %s252 = scalar_lea.vmem [#allocation4], %s251
          %s253 = smul.u32 4, %s26
          %255 = vsyncadd %s249, 0
          %s256 = scalar_lea.hbm %s4, %s253
          %s258 = sshll.u32 %s256, 4
          %s259 = int_to_ptr.hbm [resolvable:$true] %s258
          %s260 = sshll.u32 %s252, 4
          %s261 = int_to_ptr.vmem [resolvable:$true] %s260
          %263 = dma.hbm_to_vmem [thread:$0]  %s259, 64, %s261, %s249
        $region36: #{uncertainty_encoder_forward.16} parent=23 // pred_fallthru
          _
      $region24: #{uncertainty_encoder_forward.16} parent=5 // pred_fallthru
        _
      %p264 = scmp.le.s32.totalorder 1, %s17
      %p265 = scmp.lt.s32.totalorder %s17, 9
      %p266 = pnand %p264, %p265
      %p267 = pneg %p266
      // Predicated region
      $region37: #{uncertainty_encoder_forward.16} parent=5 // pred_check
        _
      $region38: #{uncertainty_encoder_forward.16} parent=5 // pred_check_branch
        %269 = sbr.rel (%p266) target = $region40
      $region39: #{uncertainty_encoder_forward.16} parent=5 // pred_region
        %s270 = ssub.s32 %s17, 1
        %s271 = sand.u32 %s119, 1
        %s272 = scalar_lea.sflag [#allocation3], %s271
        %s273 = sand.u32 %s119, 1
        %s274 = smul.addr %s273, 128
        %s275 = scalar_lea.vmem [#allocation2], %s274
        // Predicated region
        $region41: #{uncertainty_encoder_forward.16} parent=39 // pred_check
          %p276 = pneg %p132
        $region42: #{uncertainty_encoder_forward.16} parent=39 // pred_check_branch
          %278 = sbr.rel (%p276) target = $region44
        $region43: #{uncertainty_encoder_forward.16} parent=39 // pred_region
          %280 = dma.done %s272, 2048
        $region44: #{uncertainty_encoder_forward.16} parent=39 // pred_fallthru
          _
        %s281 = sand.u32 %s145, 1
        %s282 = scalar_lea.sflag [#allocation5], %s281
        %s283 = sand.u32 %s145, 1
        %s284 = smul.addr %s283, 4
        %s285 = scalar_lea.vmem [#allocation4], %s284
        // Predicated region
        $region45: #{uncertainty_encoder_forward.16} parent=39 // pred_check
          %p286 = pneg %p158
        $region46: #{uncertainty_encoder_forward.16} parent=39 // pred_check_branch
          %288 = sbr.rel (%p286) target = $region48
        $region47: #{uncertainty_encoder_forward.16} parent=39 // pred_region
          %290 = dma.done %s282, 64
        $region48: #{uncertainty_encoder_forward.16} parent=39 // pred_fallthru
          _
        %p291 = scmp.lt.s32.totalorder %s27, 1
        %s292 = scalar_select %p291, %s27, 1
        %p293 = scmp.lt.s32.totalorder %s28, 0
        %s294 = scalar_select %p293, %s28, 0
        %s295 = sadd.s32 %s294, %s292
        %s296 = smul.addr %s295, 8
        %s297 = scalar_lea.vmem %s0, %s296
        %p298 = pneg %p64
        %p299 = pneg %p61
        %p300 = pneg %p85
        %p301 = pneg %p82
        %p302 = pneg %p106
        %p303 = pneg %p103
        %s304 = sand.u32 %s119, 1
        %s305 = scalar_lea.sflag [#allocation3], %s304
        %s306 = sand.u32 %s119, 1
        %s307 = smul.addr %s306, 128
        %s308 = scalar_lea.vmem [#allocation2], %s307
        %p309 = pneg %p132
        %p310 = pneg %p129
        %s311 = sand.u32 %s145, 1
        %s312 = scalar_lea.sflag [#allocation5], %s311
        %s313 = sand.u32 %s145, 1
        %s314 = smul.addr %s313, 4
        %s315 = scalar_lea.vmem [#allocation4], %s314
        %p316 = pneg %p158
        %p317 = pneg %p155
        %p318 = pneg %p188
        %p319 = pneg %p185
        %s320 = smul.u32 4, %s29
        %p321 = scmp.lt.s32.totalorder %s27, 1
        %s322 = scalar_select %p321, %s27, 1
        %p323 = scmp.lt.s32.totalorder %s28, 0
        %s324 = scalar_select %p323, %s28, 0
        %p325 = scmp.lt.s32.totalorder %s320, 15
        %s326 = scalar_select %p325, %s320, 15
        %s327 = smul.addr %s324, 16
        %s328 = sadd.s32 %s326, %s327
        %s329 = smul.addr %s322, 16
        %s330 = sadd.s32 %s328, %s329
        %s331 = smul.addr %s330, 8
        %s332 = scalar_lea.vmem %s5, %s331
        %p333 = scmp.lt.s32.totalorder %s27, 1
        %s334 = scalar_select %p333, %s27, 1
        %p335 = scmp.lt.s32.totalorder %s28, 0
        %s336 = scalar_select %p335, %s28, 0
        %s337 = sadd.s32 %s336, %s334
        %s338 = smul.addr %s337, 8
        %s339 = scalar_lea.vmem %s0, %s338
        %s340 = smul.u32 4, %s29
        %s341 = smul.u32 4, %s29
        %s342 = smul.u32 4, %s29
        %p343 = scmp.lt.s32.totalorder %s27, 1
        %s344 = scalar_select %p343, %s27, 1
        %p345 = scmp.lt.s32.totalorder %s28, 0
        %s346 = scalar_select %p345, %s28, 0
        %p347 = scmp.lt.s32.totalorder %s342, 15
        %s348 = scalar_select %p347, %s342, 15
        %s349 = smul.addr %s346, 16
        %s350 = sadd.s32 %s348, %s349
        %s351 = smul.addr %s344, 16
        %s352 = sadd.s32 %s350, %s351
        %s353 = smul.addr %s352, 8
        %s354 = scalar_lea.vmem %s5, %s353
        %s355 = smul.u32 4, %s29
        %v356 = vld [vmem:[%s339] sm:$0xff]
        %v357 = vld [vmem:[%s1] sm:$0x1]
        %v358 = vld [vmem:[%s2] sm:$0x1]
        %vm359 = vcmask 261120
        %v360 = vsel %vm359, %v356, 0.0
        %361 = vadd.xlane.f32.xlu0 %v360
        %v362 = vpop.xlane.xlu0 %361
        %v363 = vrcp.pop 32.0
        %v364 = vmul.f32 32.0, %v363
        %v365 = vsub.f32 1.0, %v364
        %v366 = vmul.f32 %v363, %v365
        %v367 = vadd.f32 %v363, %v366
        %vm368 = vweird.f32 %v363
        %v369 = vsel %vm368, %v363, %v367
        %v370 = vmul.f32 %v362, %v369
        %v371 = vsub.f32 %v356, %v370
        %v372 = vmul.f32 %v371, %v371
        %v373 = vsel %vm359, %v372, 0.0
        %374 = vadd.xlane.f32.xlu0 %v373
        %v375 = vpop.xlane.xlu0 %374
        %v376 = vrcp.pop 31.0
        %v377 = vmul.f32 31.0, %v376
        %v378 = vsub.f32 1.0, %v377
        %v379 = vmul.f32 %v376, %v378
        %v380 = vadd.f32 %v376, %v379
        %vm381 = vweird.f32 %v376
        %v382 = vsel %vm381, %v376, %v380
        %v383 = vmul.f32 %v375, %v382
        %v384 = vrsqrt.pop %v383
        %v385 = vmul.f32 %v384, %v383
        %v386 = vmul.f32 %v385, %v384
        %v387 = vmul.f32 0.5, %v386
        %v388 = vsub.f32 1.5, %v387
        %v389 = vmul.f32 %v384, %v388
        %v390 = vmul.f32 %v383, %v389
        %vm391 = vcmp.eq.f32.partialorder %v383, inf
        %v392 = vsel %vm391, %v383, %v390
        %vm393 = vcmp.eq.f32.partialorder %v383, 0.0
        %v394 = vand.u32 %v383, 2147483648
        %v395 = vsel %vm393, %v394, %v392
        %v396 = vadd.f32 %v395, 1e-06
        %v397 = vrcp.pop %v396
        %v398 = vmul.f32 %v396, %v397
        %v399 = vsub.f32 1.0, %v398
        %v400 = vmul.f32 %v397, %v399
        %v401 = vadd.f32 %v397, %v400
        %vm402 = vweird.f32 %v396
        %vm403 = vweird.f32 %v397
        %vm404 = vmor %vm402, %vm403
        %v405 = vsel %vm404, %v397, %v401
        %v406 = vand.u32 2147483647, %v396
        %vm407 = vcmp.eq.f32.partialorder %v406, 8.507059e+37
        %v408 = vand.u32 %v396, 2147483648
        %v409 = vor.u32 1.1754944e-38, %v408
        %v410 = vsel %vm407, %v409, %v405
        %v411 = vmul.f32 %v371, %v410
        %v413 = vperm.slane %v357, 0
        %v415 = vmul.f32 %v413, %v411
        %v417 = vperm.slane %v358, 0
        %v419 = vadd.f32 %v415, %v417
        %v420 = vld [vmem:[%s275] sm:$0xff]
        %v421 = vld [vmem:[%s275 + $0x8] sm:$0xff]
        %v422 = vld [vmem:[%s275 + $0x10] sm:$0xff]
        %v423 = vld [vmem:[%s275 + $0x18] sm:$0xff]
        %v424 = vld [vmem:[%s275 + $0x20] sm:$0xff]
        %v425 = vld [vmem:[%s275 + $0x28] sm:$0xff]
        %v426 = vld [vmem:[%s275 + $0x30] sm:$0xff]
        %v427 = vld [vmem:[%s275 + $0x38] sm:$0xff]
        %v428 = vld [vmem:[%s275 + $0x40] sm:$0xff]
        %v429 = vld [vmem:[%s275 + $0x48] sm:$0xff]
        %v430 = vld [vmem:[%s275 + $0x50] sm:$0xff]
        %v431 = vld [vmem:[%s275 + $0x58] sm:$0xff]
        %v432 = vld [vmem:[%s275 + $0x60] sm:$0xff]
        %v433 = vld [vmem:[%s275 + $0x68] sm:$0xff]
        %v434 = vld [vmem:[%s275 + $0x70] sm:$0xff]
        %v435 = vld [vmem:[%s275 + $0x78] sm:$0xff]
        %v436 = vld [vmem:[%s285] sm:$0xf]
        %v438 = vperm.slane %v436, 0
        %v439 = vperm.slane %v436, 1
        %v440 = vperm.slane %v436, 2
        %v441 = vperm.slane %v436, 3
        %v447 = vsel %vm359, %v419, 0
        %449 = vmatpush.msra.mxu0 0.0
        %450 = vmatpush.msra.mxu0 0.0
        %451 = vmatpush.msra.mxu0 0.0
        %452 = vmatpush.msra.mxu0 0.0
        %453 = vmatpush.msra.mxu0 0.0
        %454 = vmatpush.msra.mxu0 0.0
        %455 = vmatpush.msra.mxu0 0.0
        %456 = vmatpush.msra.mxu0 0.0
        %457 = vmatpush.msra.mxu0 0.0
        %458 = vmatpush.msra.mxu0 0.0
        %459 = vmatpush.msra.mxu0 0.0
        %460 = vmatpush.msra.mxu0 0.0
        %461 = vmatpush.msra.mxu0 %v432
        %462 = vmatpush.msra.mxu0 %v428
        %463 = vmatpush.msra.mxu0 %v424
        %464 = vmatpush.msra.mxu0 %v420
        %465 = vmatmul.f32.gmra.mxu0 %v447
        %v466 = vpop.f32.mrf.mxu0
        %v467 = vadd.f32 %v438, %v466
        %468 = vdwg.mxu0
        %469 = vmatpush.msra.mxu0 0.0
        %470 = vmatpush.msra.mxu0 0.0
        %471 = vmatpush.msra.mxu0 0.0
        %472 = vmatpush.msra.mxu0 0.0
        %473 = vmatpush.msra.mxu0 0.0
        %474 = vmatpush.msra.mxu0 0.0
        %475 = vmatpush.msra.mxu0 0.0
        %476 = vmatpush.msra.mxu0 0.0
        %477 = vmatpush.msra.mxu0 0.0
        %478 = vmatpush.msra.mxu0 0.0
        %479 = vmatpush.msra.mxu0 0.0
        %480 = vmatpush.msra.mxu0 0.0
        %481 = vmatpush.msra.mxu0 %v433
        %482 = vmatpush.msra.mxu0 %v429
        %483 = vmatpush.msra.mxu0 %v425
        %484 = vmatpush.msra.mxu0 %v421
        %485 = vmatmul.f32.gmra.mxu0 %v447
        %v486 = vpop.f32.mrf.mxu0
        %v487 = vadd.f32 %v439, %v486
        %488 = vdwg.mxu0
        %489 = vmatpush.msra.mxu0 0.0
        %490 = vmatpush.msra.mxu0 0.0
        %491 = vmatpush.msra.mxu0 0.0
        %492 = vmatpush.msra.mxu0 0.0
        %493 = vmatpush.msra.mxu0 0.0
        %494 = vmatpush.msra.mxu0 0.0
        %495 = vmatpush.msra.mxu0 0.0
        %496 = vmatpush.msra.mxu0 0.0
        %497 = vmatpush.msra.mxu0 0.0
        %498 = vmatpush.msra.mxu0 0.0
        %499 = vmatpush.msra.mxu0 0.0
        %500 = vmatpush.msra.mxu0 0.0
        %501 = vmatpush.msra.mxu0 %v434
        %502 = vmatpush.msra.mxu0 %v430
        %503 = vmatpush.msra.mxu0 %v426
        %504 = vmatpush.msra.mxu0 %v422
        %505 = vmatmul.f32.gmra.mxu0 %v447
        %v506 = vpop.f32.mrf.mxu0
        %v507 = vadd.f32 %v440, %v506
        %508 = vdwg.mxu0
        %509 = vmatpush.msra.mxu0 0.0
        %510 = vmatpush.msra.mxu0 0.0
        %511 = vmatpush.msra.mxu0 0.0
        %512 = vmatpush.msra.mxu0 0.0
        %513 = vmatpush.msra.mxu0 0.0
        %514 = vmatpush.msra.mxu0 0.0
        %515 = vmatpush.msra.mxu0 0.0
        %516 = vmatpush.msra.mxu0 0.0
        %517 = vmatpush.msra.mxu0 0.0
        %518 = vmatpush.msra.mxu0 0.0
        %519 = vmatpush.msra.mxu0 0.0
        %520 = vmatpush.msra.mxu0 0.0
        %521 = vmatpush.msra.mxu0 %v435
        %522 = vmatpush.msra.mxu0 %v431
        %523 = vmatpush.msra.mxu0 %v427
        %524 = vmatpush.msra.mxu0 %v423
        %525 = vmatmul.f32.gmra.mxu0 %v447
        %v526 = vpop.f32.mrf.mxu0
        %v527 = vadd.f32 %v441, %v526
        %528 = vdwg.mxu0
        %v529 = vmax.f32 %v467, 0.0
        %v530 = vmax.f32 %v487, 0.0
        %v531 = vmax.f32 %v507, 0.0
        %v532 = vmax.f32 %v527, 0.0
        %533 = vst [vmem:[%s354] sm:$0xff] %v529
        %534 = vst [vmem:[%s354 + $0x8] sm:$0xff] %v530
        %535 = vst [vmem:[%s354 + $0x10] sm:$0xff] %v531
        %536 = vst [vmem:[%s354 + $0x18] sm:$0xff] %v532
        %s537 = smul.u32 4, %s29
        %p538 = scmp.lt.s32.totalorder %s27, 1
        %s539 = scalar_select %p538, %s27, 1
        %p540 = scmp.lt.s32.totalorder %s28, 0
        %s541 = scalar_select %p540, %s28, 0
        %p542 = scmp.lt.s32.totalorder %s537, 15
        %s543 = scalar_select %p542, %s537, 15
        %s544 = smul.addr %s541, 16
        %s545 = sadd.s32 %s543, %s544
        %s546 = smul.addr %s539, 16
        %s547 = sadd.s32 %s545, %s546
        %s548 = smul.addr %s547, 8
        %s549 = scalar_lea.vmem %s5, %s548
        // Predicated region
        $region49: #{uncertainty_encoder_forward.16} parent=39 // pred_check
          %p550 = pneg %p185
        $region50: #{uncertainty_encoder_forward.16} parent=39 // pred_check_branch
          %552 = sbr.rel (%p550) target = $region52
        $region51: #{uncertainty_encoder_forward.16} parent=39 // pred_region
          %s553 = smul.u32 4, %s29
        $region52: #{uncertainty_encoder_forward.16} parent=39 // pred_fallthru
          _
      $region40: #{uncertainty_encoder_forward.16} parent=5 // pred_fallthru
        _
      %p554 = scmp.le.s32.totalorder 2, %s17
      // Predicated region
      $region53: #{uncertainty_encoder_forward.16} parent=5 // pred_check
        %p555 = pneg %p554
      $region54: #{uncertainty_encoder_forward.16} parent=5 // pred_check_branch
        %557 = sbr.rel (%p555) target = $region56
      $region55: #{uncertainty_encoder_forward.16} parent=5 // pred_region
        %s558 = ssub.s32 %s17, 2
        // Predicated region
        $region57: #{uncertainty_encoder_forward.16} parent=55 // pred_check
          %p559 = pneg %p191
        $region58: #{uncertainty_encoder_forward.16} parent=55 // pred_check_branch
          %561 = sbr.rel (%p559) target = $region60
        $region59: #{uncertainty_encoder_forward.16} parent=55 // pred_region
          %s562 = smul.u32 4, %s32
          %p563 = scmp.lt.s32.totalorder %s30, 1
          %s564 = scalar_select %p563, %s30, 1
          %p565 = scmp.lt.s32.totalorder %s31, 0
          %s566 = scalar_select %p565, %s31, 0
          %p567 = scmp.lt.s32.totalorder %s562, 15
          %s568 = scalar_select %p567, %s562, 15
          %s569 = smul.addr %s566, 16
          %s570 = sadd.s32 %s568, %s569
          %s571 = smul.addr %s564, 16
          %s572 = sadd.s32 %s570, %s571
          %s573 = smul.addr %s572, 8
          %s574 = scalar_lea.vmem %s5, %s573
        $region60: #{uncertainty_encoder_forward.16} parent=55 // pred_fallthru
          _
      $region56: #{uncertainty_encoder_forward.16} parent=5 // pred_fallthru
        _
    $region6: #{uncertainty_encoder_forward.16} parent=1 // loop_footer
      %s21 = sadd.s32 1, %s17
    $region7: #{uncertainty_encoder_forward.16} parent=1 // loop_footer_branch
      %16 = sbr.rel target = $region3
    $region8: #{uncertainty_encoder_forward.16} parent=1 // loop_exit
      _
    %575 = vsyncpa [#allocation3], 1
    %s576 = scalar_lea.sflag [#allocation3], 1
    %577 = vsyncpa %s576, 1
    %578 = vsyncpa [#allocation5], 1
    %s579 = scalar_lea.sflag [#allocation5], 1
    %580 = vsyncpa %s579, 1

// kernel: uncertainty_encoder_forward.17
$region0: #{uncertainty_encoder_forward.17}
  #allocation0 [shape = 'u32[]', space=smem, size = 0x4, offset = 0x4, fixed_abs, tag = 'smem constant byte address 0x4 - core index']
  #allocation1 [shape = 'u32[72,128]{1,0:T(1,128)}', space=vmem, size = 0x9000, scoped, tag = 'internal scratch']
  #allocation2 [shape = 'f32[8,32]{1,0:T(8,128)}', space=vmem, size = 0x1000, scoped, tag = 'scratch operand']
  %s0 = inlined_call_operand.vmem [shape: f32[2,8,2048], index: 0, kind: input, shape index: {}]
  %s1 = inlined_call_operand.vmem [shape: f32[2048,32], index: 1, kind: input, shape index: {}]
  %s2 = inlined_call_operand.vmem [shape: f32[1,32], index: 2, kind: input, shape index: {}]
  %s3 = inlined_call_operand.vmem [shape: f32[2,8,32], index: 3, kind: input, shape index: {}]
  %s4 = inlined_call_operand.vmem [shape: f32[2,8,32], index: 4, kind: output, shape index: {}]
  %s5 = sld [smem:[#allocation0]]
  $region57: #{uncertainty_encoder_forward.17} parent=0
    _
  %s7 = ssub.s32 1, %s5
  %s8 = scalar_select 0, %s7, %s5
  loop: start=0, step=1, limit=10
  $region2: #{uncertainty_encoder_forward.17} parent=0 // loop_pre_header
    _
  $region3: #{uncertainty_encoder_forward.17} parent=0 // loop_header
    %s10 = sphi 0, %s14
    %p11 = scmp.ge.s32.totalorder %s10, 10
    %s17 = sphi 0, %s36
    %s18 = sphi 0, %s32
    %s19 = sphi 0, %s28
    %s20 = sphi 0, %s17
    %s21 = sphi 0, %s18
    %s22 = sphi 0, %s19
    %s23 = sphi 0, %s20
    %s24 = sphi 0, %s21
    %s25 = sphi 0, %s22
    %s43 = sphi 0, %s45
    %s46 = sphi 0, %s43
    %s47 = sphi 0, %s46
    %s63 = sphi 0, %s47
    %s69 = sphi 0, %s71
    %s72 = sphi 0, %s69
    %s73 = sphi 0, %s72
    %s89 = sphi 0, %s73
    %s93 = sphi 0, %s93
    %s95 = sphi 0, %s93
    %s96 = sphi 0, %s95
    %s110 = sphi 0, %s96
    %s118 = sphi 0, %s120
    %s121 = sphi 0, %s118
    %s122 = sphi 0, %s121
    %s138 = sphi 0, %s122
    %s146 = sphi 0, %s148
    %s149 = sphi 0, %s146
    %s150 = sphi 0, %s149
    %s166 = sphi 0, %s150
  $region4: #{uncertainty_encoder_forward.17} parent=0 // loop_header_branch
    %13 = sbr.rel (%p11) target = $region8
  $region5: #{uncertainty_encoder_forward.17} parent=0 // loop_body
    %s15 = ssub.s32 %s10, 1
    %s16 = ssub.s32 %s10, 2
    %s26 = sadd.s32 1, %s19
    %p27 = scmp.ge.s32.totalorder %s26, 4
    %s28 = scalar_select %p27, 0, %s26
    %s29 = sadd.s32 1, %s18
    %s30 = scalar_select %p27, %s29, %s18
    %p31 = scmp.ge.s32.totalorder %s30, 1
    %s32 = scalar_select %p31, 0, %s30
    %s33 = sadd.s32 1, %s17
    %s34 = scalar_select %p31, %s33, %s17
    %p35 = scmp.ge.s32.totalorder %s34, 2
    %s36 = scalar_select %p35, 0, %s34
    %s37 = ssub.s32 %s17, %s36
    %s38 = ssub.s32 %s18, %s32
    %s39 = sor.u32 %s37, %s38
    %s40 = ssub.s32 %s19, %s28
    %s41 = sor.u32 %s39, %s40
    %p42 = scmp.eq.s32.totalorder %s41, 0
    %s44 = sadd.s32 %s43, 1
    %s45 = scalar_select %p42, %s43, %s44
    %p48 = pneg %p42
    %p49 = scmp.eq.s32.totalorder %s10, 7
    %p50 = por %p48, %p49
    %p51 = scmp.ne.s32.totalorder %s43, %s46
    %p52 = scmp.eq.s32.totalorder %s10, 0
    %p53 = por %p51, %p52
    %p54 = scmp.ne.s32.totalorder %s43, %s46
    %p55 = scmp.eq.s32.totalorder %s15, 7
    %p56 = por %p54, %p55
    %p57 = scmp.ne.s32.totalorder %s46, %s47
    %p58 = scmp.eq.s32.totalorder %s15, 0
    %p59 = por %p57, %p58
    %p60 = scmp.ne.s32.totalorder %s46, %s47
    %p61 = scmp.eq.s32.totalorder %s16, 7
    %p62 = por %p60, %p61
    %p64 = scmp.ne.s32.totalorder %s47, %s63
    %p65 = scmp.eq.s32.totalorder %s16, 0
    %p66 = por %p64, %p65
    %s67 = ssub.s32 %s19, %s28
    %p68 = scmp.eq.s32.totalorder %s67, 0
    %s70 = sadd.s32 %s69, 1
    %s71 = scalar_select %p68, %s69, %s70
    %p74 = pneg %p68
    %p75 = scmp.eq.s32.totalorder %s10, 7
    %p76 = por %p74, %p75
    %p77 = scmp.ne.s32.totalorder %s69, %s72
    %p78 = scmp.eq.s32.totalorder %s10, 0
    %p79 = por %p77, %p78
    %p80 = scmp.ne.s32.totalorder %s69, %s72
    %p81 = scmp.eq.s32.totalorder %s15, 7
    %p82 = por %p80, %p81
    %p83 = scmp.ne.s32.totalorder %s72, %s73
    %p84 = scmp.eq.s32.totalorder %s15, 0
    %p85 = por %p83, %p84
    %p86 = scmp.ne.s32.totalorder %s72, %s73
    %p87 = scmp.eq.s32.totalorder %s16, 7
    %p88 = por %p86, %p87
    %p90 = scmp.ne.s32.totalorder %s73, %s89
    %p91 = scmp.eq.s32.totalorder %s16, 0
    %p92 = por %p90, %p91
    %s94 = sadd.s32 %s93, 1
    %p97 = scmp.eq.s32.totalorder %s10, 7
    %p98 = scmp.ne.s32.totalorder %s93, %s95
    %p99 = scmp.eq.s32.totalorder %s10, 0
    %p100 = por %p98, %p99
    %p101 = scmp.ne.s32.totalorder %s93, %s95
    %p102 = scmp.eq.s32.totalorder %s15, 7
    %p103 = por %p101, %p102
    %p104 = scmp.ne.s32.totalorder %s95, %s96
    %p105 = scmp.eq.s32.totalorder %s15, 0
    %p106 = por %p104, %p105
    %p107 = scmp.ne.s32.totalorder %s95, %s96
    %p108 = scmp.eq.s32.totalorder %s16, 7
    %p109 = por %p107, %p108
    %p111 = scmp.ne.s32.totalorder %s96, %s110
    %p112 = scmp.eq.s32.totalorder %s16, 0
    %p113 = por %p111, %p112
    %s114 = ssub.s32 %s17, %s36
    %s115 = ssub.s32 %s18, %s32
    %s116 = sor.u32 %s114, %s115
    %p117 = scmp.eq.s32.totalorder %s116, 0
    %s119 = sadd.s32 %s118, 1
    %s120 = scalar_select %p117, %s118, %s119
    %p123 = pneg %p117
    %p124 = scmp.eq.s32.totalorder %s10, 7
    %p125 = por %p123, %p124
    %p126 = scmp.ne.s32.totalorder %s118, %s121
    %p127 = scmp.eq.s32.totalorder %s10, 0
    %p128 = por %p126, %p127
    %p129 = scmp.ne.s32.totalorder %s118, %s121
    %p130 = scmp.eq.s32.totalorder %s15, 7
    %p131 = por %p129, %p130
    %p132 = scmp.ne.s32.totalorder %s121, %s122
    %p133 = scmp.eq.s32.totalorder %s15, 0
    %p134 = por %p132, %p133
    %p135 = scmp.ne.s32.totalorder %s121, %s122
    %p136 = scmp.eq.s32.totalorder %s16, 7
    %p137 = por %p135, %p136
    %p139 = scmp.ne.s32.totalorder %s122, %s138
    %p140 = scmp.eq.s32.totalorder %s16, 0
    %p141 = por %p139, %p140
    %s142 = ssub.s32 %s17, %s36
    %s143 = ssub.s32 %s18, %s32
    %s144 = sor.u32 %s142, %s143
    %p145 = scmp.eq.s32.totalorder %s144, 0
    %s147 = sadd.s32 %s146, 1
    %s148 = scalar_select %p145, %s146, %s147
    %p151 = pneg %p145
    %p152 = scmp.eq.s32.totalorder %s10, 7
    %p153 = por %p151, %p152
    %p154 = scmp.ne.s32.totalorder %s146, %s149
    %p155 = scmp.eq.s32.totalorder %s10, 0
    %p156 = por %p154, %p155
    %p157 = scmp.ne.s32.totalorder %s146, %s149
    %p158 = scmp.eq.s32.totalorder %s15, 7
    %p159 = por %p157, %p158
    %p160 = scmp.ne.s32.totalorder %s149, %s150
    %p161 = scmp.eq.s32.totalorder %s15, 0
    %p162 = por %p160, %p161
    %p163 = scmp.ne.s32.totalorder %s149, %s150
    %p164 = scmp.eq.s32.totalorder %s16, 7
    %p165 = por %p163, %p164
    %p167 = scmp.ne.s32.totalorder %s150, %s166
    %p168 = scmp.eq.s32.totalorder %s16, 0
    %p169 = por %p167, %p168
    %p170 = scmp.le.s32.totalorder 1, %s10
    %p171 = scmp.lt.s32.totalorder %s10, 9
    %p172 = pnand %p170, %p171
    %p173 = pneg %p172
    // Predicated region
    $region9: #{uncertainty_encoder_forward.17} parent=5 // pred_check
      _
    $region10: #{uncertainty_encoder_forward.17} parent=5 // pred_check_branch
      %175 = sbr.rel (%p172) target = $region12
    $region11: #{uncertainty_encoder_forward.17} parent=5 // pred_region
      %s176 = ssub.s32 %s10, 1
      // Predicated region
      $region13: #{uncertainty_encoder_forward.17} parent=11 // pred_check
        %p177 = pneg %p106
      $region14: #{uncertainty_encoder_forward.17} parent=11 // pred_check_branch
        %179 = sbr.rel (%p177) target = $region16
      $region15: #{uncertainty_encoder_forward.17} parent=11 // pred_region
        _
      $region16: #{uncertainty_encoder_forward.17} parent=11 // pred_fallthru
        _
    $region12: #{uncertainty_encoder_forward.17} parent=5 // pred_fallthru
      _
    %p180 = scmp.lt.s32.totalorder %s10, 8
    // Predicated region
    $region17: #{uncertainty_encoder_forward.17} parent=5 // pred_check
      %p181 = pneg %p180
    $region18: #{uncertainty_encoder_forward.17} parent=5 // pred_check_branch
      %183 = sbr.rel (%p181) target = $region20
    $region19: #{uncertainty_encoder_forward.17} parent=5 // pred_region
      // Predicated region
      $region21: #{uncertainty_encoder_forward.17} parent=19 // pred_check
        %p184 = pneg %p53
      $region22: #{uncertainty_encoder_forward.17} parent=19 // pred_check_branch
        %186 = sbr.rel (%p184) target = $region24
      $region23: #{uncertainty_encoder_forward.17} parent=19 // pred_region
        %s187 = smul.u32 4, %s19
        %p188 = scmp.lt.s32.totalorder %s17, 1
        %s189 = scalar_select %p188, %s17, 1
        %p190 = scmp.lt.s32.totalorder %s18, 0
        %s191 = scalar_select %p190, %s18, 0
        %p192 = scmp.lt.s32.totalorder %s187, 15
        %s193 = scalar_select %p192, %s187, 15
        %s194 = smul.addr %s191, 16
        %s195 = sadd.s32 %s193, %s194
        %s196 = smul.addr %s189, 16
        %s197 = sadd.s32 %s195, %s196
        %s198 = smul.addr %s197, 8
        %s199 = scalar_lea.vmem %s0, %s198
        %s200 = smul.u32 4, %s19
      $region24: #{uncertainty_encoder_forward.17} parent=19 // pred_fallthru
        _
      // Predicated region
      $region25: #{uncertainty_encoder_forward.17} parent=19 // pred_check
        %p201 = pneg %p79
      $region26: #{uncertainty_encoder_forward.17} parent=19 // pred_check_branch
        %203 = sbr.rel (%p201) target = $region28
      $region27: #{uncertainty_encoder_forward.17} parent=19 // pred_region
        %s204 = smul.u32 64, %s19
        %p205 = scmp.lt.s32.totalorder %s204, 255
        %s206 = scalar_select %p205, %s204, 255
        %s207 = smul.addr %s206, 8
        %s208 = scalar_lea.vmem %s1, %s207
        %s209 = smul.u32 64, %s19
      $region28: #{uncertainty_encoder_forward.17} parent=19 // pred_fallthru
        _
      // Predicated region
      $region29: #{uncertainty_encoder_forward.17} parent=19 // pred_check
        %p210 = pneg %p128
      $region30: #{uncertainty_encoder_forward.17} parent=19 // pred_check_branch
        %212 = sbr.rel (%p210) target = $region32
      $region31: #{uncertainty_encoder_forward.17} parent=19 // pred_region
        %p213 = scmp.lt.s32.totalorder %s17, 1
        %s214 = scalar_select %p213, %s17, 1
        %p215 = scmp.lt.s32.totalorder %s18, 0
        %s216 = scalar_select %p215, %s18, 0
        %s217 = sadd.s32 %s216, %s214
        %s218 = smul.addr %s217, 8
        %s219 = scalar_lea.vmem %s3, %s218
      $region32: #{uncertainty_encoder_forward.17} parent=19 // pred_fallthru
        _
    $region20: #{uncertainty_encoder_forward.17} parent=5 // pred_fallthru
      _
    %p220 = scmp.le.s32.totalorder 1, %s10
    %p221 = scmp.lt.s32.totalorder %s10, 9
    %p222 = pnand %p220, %p221
    %p223 = pneg %p222
    // Predicated region
    $region33: #{uncertainty_encoder_forward.17} parent=5 // pred_check
      _
    $region34: #{uncertainty_encoder_forward.17} parent=5 // pred_check_branch
      %225 = sbr.rel (%p222) target = $region36
    $region35: #{uncertainty_encoder_forward.17} parent=5 // pred_region
      %s226 = ssub.s32 %s10, 1
      %s227 = smul.u32 4, %s22
      %p228 = scmp.lt.s32.totalorder %s20, 1
      %s229 = scalar_select %p228, %s20, 1
      %p230 = scmp.lt.s32.totalorder %s21, 0
      %s231 = scalar_select %p230, %s21, 0
      %p232 = scmp.lt.s32.totalorder %s227, 15
      %s233 = scalar_select %p232, %s227, 15
      %s234 = smul.addr %s231, 16
      %s235 = sadd.s32 %s233, %s234
      %s236 = smul.addr %s229, 16
      %s237 = sadd.s32 %s235, %s236
      %s238 = smul.addr %s237, 8
      %s239 = scalar_lea.vmem %s0, %s238
      %p240 = pneg %p59
      %p241 = pneg %p56
      %s242 = smul.u32 64, %s22
      %p243 = scmp.lt.s32.totalorder %s242, 255
      %s244 = scalar_select %p243, %s242, 255
      %s245 = smul.addr %s244, 8
      %s246 = scalar_lea.vmem %s1, %s245
      %p247 = pneg %p85
      %p248 = pneg %p82
      %p249 = pneg %p106
      %p250 = pneg %p103
      %p251 = scmp.lt.s32.totalorder %s20, 1
      %s252 = scalar_select %p251, %s20, 1
      %p253 = scmp.lt.s32.totalorder %s21, 0
      %s254 = scalar_select %p253, %s21, 0
      %s255 = sadd.s32 %s254, %s252
      %s256 = smul.addr %s255, 8
      %s257 = scalar_lea.vmem %s3, %s256
      %p258 = pneg %p134
      %p259 = pneg %p131
      %p260 = pneg %p162
      %p261 = pneg %p159
      %p262 = scmp.lt.s32.totalorder %s20, 1
      %s263 = scalar_select %p262, %s20, 1
      %p264 = scmp.lt.s32.totalorder %s21, 0
      %s265 = scalar_select %p264, %s21, 0
      %s266 = sadd.s32 %s265, %s263
      %s267 = smul.addr %s266, 8
      %s268 = scalar_lea.vmem %s4, %s267
      %s269 = smul.u32 4, %s22
      %p270 = scmp.lt.s32.totalorder %s20, 1
      %s271 = scalar_select %p270, %s20, 1
      %p272 = scmp.lt.s32.totalorder %s21, 0
      %s273 = scalar_select %p272, %s21, 0
      %p274 = scmp.lt.s32.totalorder %s269, 15
      %s275 = scalar_select %p274, %s269, 15
      %s276 = smul.addr %s273, 16
      %s277 = sadd.s32 %s275, %s276
      %s278 = smul.addr %s271, 16
      %s279 = sadd.s32 %s277, %s278
      %s280 = smul.addr %s279, 8
      %s281 = scalar_lea.vmem %s0, %s280
      %s282 = smul.u32 4, %s22
      %s283 = smul.u32 64, %s22
      %p284 = scmp.lt.s32.totalorder %s283, 255
      %s285 = scalar_select %p284, %s283, 255
      %s286 = smul.addr %s285, 8
      %s287 = scalar_lea.vmem %s1, %s286
      %s288 = smul.u32 64, %s22
      %p289 = scmp.lt.s32.totalorder %s20, 1
      %s290 = scalar_select %p289, %s20, 1
      %p291 = scmp.lt.s32.totalorder %s21, 0
      %s292 = scalar_select %p291, %s21, 0
      %s293 = sadd.s32 %s292, %s290
      %s294 = smul.addr %s293, 8
      %s295 = scalar_lea.vmem %s3, %s294
      %p296 = scmp.lt.s32.totalorder %s20, 1
      %s297 = scalar_select %p296, %s20, 1
      %p298 = scmp.lt.s32.totalorder %s21, 0
      %s299 = scalar_select %p298, %s21, 0
      %s300 = sadd.s32 %s299, %s297
      %s301 = smul.addr %s300, 8
      %s302 = scalar_lea.vmem %s4, %s301
      %p303 = scmp.eq.s32.totalorder %s22, 0
      // Predicated region
      $region37: #{uncertainty_encoder_forward.17} parent=35 // pred_check
        %p304 = pneg %p303
      $region38: #{uncertainty_encoder_forward.17} parent=35 // pred_check_branch
        %306 = sbr.rel (%p304) target = $region40
      $region39: #{uncertainty_encoder_forward.17} parent=35 // pred_region
        %v307 = vld [vmem:[%s295] sm:$0xff]
        %v308 = vld [vmem:[%s2] sm:$0x1]
        %v310 = vperm.slane %v308, 0
        %v312 = vadd.f32 %v307, %v310
        %vm313 = vcmask 261120
        %314 = vst.msk [vmem:[#allocation2] sm:$0xff] %vm313, %v312
      $region40: #{uncertainty_encoder_forward.17} parent=35 // pred_fallthru
        _
      %v315 = vld [vmem:[#allocation2] sm:$0xff]
      %v316 = vld [vmem:[%s281] sm:$0xff]
      %v317 = vld [vmem:[%s281 + $0x8] sm:$0xff]
      %v318 = vld [vmem:[%s281 + $0x10] sm:$0xff]
      %v319 = vld [vmem:[%s281 + $0x18] sm:$0xff]
      %v320 = vld [vmem:[%s287] sm:$0xff]
      %v321 = vld [vmem:[%s287 + $0x8] sm:$0xff]
      %v322 = vld [vmem:[%s287 + $0x10] sm:$0xff]
      %v323 = vld [vmem:[%s287 + $0x18] sm:$0xff]
      %v324 = vld [vmem:[%s287 + $0x20] sm:$0xff]
      %v325 = vld [vmem:[%s287 + $0x28] sm:$0xff]
      %v326 = vld [vmem:[%s287 + $0x30] sm:$0xff]
      %v327 = vld [vmem:[%s287 + $0x38] sm:$0xff]
      %v328 = vld [vmem:[%s287 + $0x40] sm:$0xff]
      %v329 = vld [vmem:[%s287 + $0x48] sm:$0xff]
      %v330 = vld [vmem:[%s287 + $0x50] sm:$0xff]
      %v331 = vld [vmem:[%s287 + $0x58] sm:$0xff]
      %v332 = vld [vmem:[%s287 + $0x60] sm:$0xff]
      %v333 = vld [vmem:[%s287 + $0x68] sm:$0xff]
      %v334 = vld [vmem:[%s287 + $0x70] sm:$0xff]
      %v335 = vld [vmem:[%s287 + $0x78] sm:$0xff]
      %v336 = vld [vmem:[%s287 + $0x80] sm:$0xff]
      %v337 = vld [vmem:[%s287 + $0x88] sm:$0xff]
      %v338 = vld [vmem:[%s287 + $0x90] sm:$0xff]
      %v339 = vld [vmem:[%s287 + $0x98] sm:$0xff]
      %v340 = vld [vmem:[%s287 + $0xa0] sm:$0xff]
      %v341 = vld [vmem:[%s287 + $0xa8] sm:$0xff]
      %v342 = vld [vmem:[%s287 + $0xb0] sm:$0xff]
      %v343 = vld [vmem:[%s287 + $0xb8] sm:$0xff]
      %v344 = vld [vmem:[%s287 + $0xc0] sm:$0xff]
      %v345 = vld [vmem:[%s287 + $0xc8] sm:$0xff]
      %v346 = vld [vmem:[%s287 + $0xd0] sm:$0xff]
      %v347 = vld [vmem:[%s287 + $0xd8] sm:$0xff]
      %v348 = vld [vmem:[%s287 + $0xe0] sm:$0xff]
      %v349 = vld [vmem:[%s287 + $0xe8] sm:$0xff]
      %v350 = vld [vmem:[%s287 + $0xf0] sm:$0xff]
      %v351 = vld [vmem:[%s287 + $0xf8] sm:$0xff]
      %v352 = vld [vmem:[%s287 + $0x100] sm:$0xff]
      %v353 = vld [vmem:[%s287 + $0x108] sm:$0xff]
      %v354 = vld [vmem:[%s287 + $0x110] sm:$0xff]
      %v355 = vld [vmem:[%s287 + $0x118] sm:$0xff]
      %v356 = vld [vmem:[%s287 + $0x120] sm:$0xff]
      %v357 = vld [vmem:[%s287 + $0x128] sm:$0xff]
      %v358 = vld [vmem:[%s287 + $0x130] sm:$0xff]
      %v359 = vld [vmem:[%s287 + $0x138] sm:$0xff]
      %v360 = vld [vmem:[%s287 + $0x140] sm:$0xff]
      %v361 = vld [vmem:[%s287 + $0x148] sm:$0xff]
      %v362 = vld [vmem:[%s287 + $0x150] sm:$0xff]
      %v363 = vld [vmem:[%s287 + $0x158] sm:$0xff]
      %v364 = vld [vmem:[%s287 + $0x160] sm:$0xff]
      %v365 = vld [vmem:[%s287 + $0x168] sm:$0xff]
      %v366 = vld [vmem:[%s287 + $0x170] sm:$0xff]
      %v367 = vld [vmem:[%s287 + $0x178] sm:$0xff]
      %v368 = vld [vmem:[%s287 + $0x180] sm:$0xff]
      %v369 = vld [vmem:[%s287 + $0x188] sm:$0xff]
      %v370 = vld [vmem:[%s287 + $0x190] sm:$0xff]
      %v371 = vld [vmem:[%s287 + $0x198] sm:$0xff]
      %v372 = vld [vmem:[%s287 + $0x1a0] sm:$0xff]
      %v373 = vld [vmem:[%s287 + $0x1a8] sm:$0xff]
      %v374 = vld [vmem:[%s287 + $0x1b0] sm:$0xff]
      %v375 = vld [vmem:[%s287 + $0x1b8] sm:$0xff]
      %v376 = vld [vmem:[%s287 + $0x1c0] sm:$0xff]
      %v377 = vld [vmem:[%s287 + $0x1c8] sm:$0xff]
      %v378 = vld [vmem:[%s287 + $0x1d0] sm:$0xff]
      %v379 = vld [vmem:[%s287 + $0x1d8] sm:$0xff]
      %v380 = vld [vmem:[%s287 + $0x1e0] sm:$0xff]
      %v381 = vld [vmem:[%s287 + $0x1e8] sm:$0xff]
      %v382 = vld [vmem:[%s287 + $0x1f0] sm:$0xff]
      %v383 = vld [vmem:[%s287 + $0x1f8] sm:$0xff]
      %384 = vmatpush.msra.mxu0 %v335
      %385 = vmatpush.msra.mxu0 %v334
      %386 = vmatpush.msra.mxu0 %v333
      %387 = vmatpush.msra.mxu0 %v332
      %388 = vmatpush.msra.mxu0 %v331
      %389 = vmatpush.msra.mxu0 %v330
      %390 = vmatpush.msra.mxu0 %v329
      %391 = vmatpush.msra.mxu0 %v328
      %392 = vmatpush.msra.mxu0 %v327
      %393 = vmatpush.msra.mxu0 %v326
      %394 = vmatpush.msra.mxu0 %v325
      %395 = vmatpush.msra.mxu0 %v324
      %396 = vmatpush.msra.mxu0 %v323
      %397 = vmatpush.msra.mxu0 %v322
      %398 = vmatpush.msra.mxu0 %v321
      %399 = vmatpush.msra.mxu0 %v320
      %400 = vmatmul.f32.gmra.mxu0 %v316
      %v401 = vpop.f32.mrf.mxu0
      %v402 = vadd.f32 0.0, %v401
      %403 = vdwg.mxu0
      %404 = vmatpush.msra.mxu0 %v351
      %405 = vmatpush.msra.mxu0 %v350
      %406 = vmatpush.msra.mxu0 %v349
      %407 = vmatpush.msra.mxu0 %v348
      %408 = vmatpush.msra.mxu0 %v347
      %409 = vmatpush.msra.mxu0 %v346
      %410 = vmatpush.msra.mxu0 %v345
      %411 = vmatpush.msra.mxu0 %v344
      %412 = vmatpush.msra.mxu0 %v343
      %413 = vmatpush.msra.mxu0 %v342
      %414 = vmatpush.msra.mxu0 %v341
      %415 = vmatpush.msra.mxu0 %v340
      %416 = vmatpush.msra.mxu0 %v339
      %417 = vmatpush.msra.mxu0 %v338
      %418 = vmatpush.msra.mxu0 %v337
      %419 = vmatpush.msra.mxu0 %v336
      %420 = vmatmul.f32.gmra.mxu0 %v317
      %v421 = vpop.f32.mrf.mxu0
      %v422 = vadd.f32 %v402, %v421
      %423 = vdwg.mxu0
      %424 = vmatpush.msra.mxu0 %v367
      %425 = vmatpush.msra.mxu0 %v366
      %426 = vmatpush.msra.mxu0 %v365
      %427 = vmatpush.msra.mxu0 %v364
      %428 = vmatpush.msra.mxu0 %v363
      %429 = vmatpush.msra.mxu0 %v362
      %430 = vmatpush.msra.mxu0 %v361
      %431 = vmatpush.msra.mxu0 %v360
      %432 = vmatpush.msra.mxu0 %v359
      %433 = vmatpush.msra.mxu0 %v358
      %434 = vmatpush.msra.mxu0 %v357
      %435 = vmatpush.msra.mxu0 %v356
      %436 = vmatpush.msra.mxu0 %v355
      %437 = vmatpush.msra.mxu0 %v354
      %438 = vmatpush.msra.mxu0 %v353
      %439 = vmatpush.msra.mxu0 %v352
      %440 = vmatmul.f32.gmra.mxu0 %v318
      %v441 = vpop.f32.mrf.mxu0
      %v442 = vadd.f32 %v422, %v441
      %443 = vdwg.mxu0
      %444 = vmatpush.msra.mxu0 %v383
      %445 = vmatpush.msra.mxu0 %v382
      %446 = vmatpush.msra.mxu0 %v381
      %447 = vmatpush.msra.mxu0 %v380
      %448 = vmatpush.msra.mxu0 %v379
      %449 = vmatpush.msra.mxu0 %v378
      %450 = vmatpush.msra.mxu0 %v377
      %451 = vmatpush.msra.mxu0 %v376
      %452 = vmatpush.msra.mxu0 %v375
      %453 = vmatpush.msra.mxu0 %v374
      %454 = vmatpush.msra.mxu0 %v373
      %455 = vmatpush.msra.mxu0 %v372
      %456 = vmatpush.msra.mxu0 %v371
      %457 = vmatpush.msra.mxu0 %v370
      %458 = vmatpush.msra.mxu0 %v369
      %459 = vmatpush.msra.mxu0 %v368
      %460 = vmatmul.f32.gmra.mxu0 %v319
      %v461 = vpop.f32.mrf.mxu0
      %v462 = vadd.f32 %v442, %v461
      %463 = vdwg.mxu0
      %v464 = vadd.f32 %v315, %v462
      %vm465 = vcmask 261120
      %466 = vst.msk [vmem:[#allocation2] sm:$0xff] %vm465, %v464
      %p467 = scmp.eq.s32.totalorder %s22, 3
      // Predicated region
      $region41: #{uncertainty_encoder_forward.17} parent=35 // pred_check
        %p468 = pneg %p467
      $region42: #{uncertainty_encoder_forward.17} parent=35 // pred_check_branch
        %470 = sbr.rel (%p468) target = $region44
      $region43: #{uncertainty_encoder_forward.17} parent=35 // pred_region
        %v471 = vld [vmem:[#allocation2] sm:$0xff]
        %472 = vst.msk [vmem:[%s302] sm:$0xff] %vm465, %v471
      $region44: #{uncertainty_encoder_forward.17} parent=35 // pred_fallthru
        _
      %p473 = scmp.lt.s32.totalorder %s20, 1
      %s474 = scalar_select %p473, %s20, 1
      %p475 = scmp.lt.s32.totalorder %s21, 0
      %s476 = scalar_select %p475, %s21, 0
      %s477 = sadd.s32 %s476, %s474
      %s478 = smul.addr %s477, 8
      %s479 = scalar_lea.vmem %s4, %s478
      // Predicated region
      $region45: #{uncertainty_encoder_forward.17} parent=35 // pred_check
        %p480 = pneg %p159
      $region46: #{uncertainty_encoder_forward.17} parent=35 // pred_check_branch
        %482 = sbr.rel (%p480) target = $region48
      $region47: #{uncertainty_encoder_forward.17} parent=35 // pred_region
        _
      $region48: #{uncertainty_encoder_forward.17} parent=35 // pred_fallthru
        _
    $region36: #{uncertainty_encoder_forward.17} parent=5 // pred_fallthru
      _
    %p483 = scmp.le.s32.totalorder 2, %s10
    // Predicated region
    $region49: #{uncertainty_encoder_forward.17} parent=5 // pred_check
      %p484 = pneg %p483
    $region50: #{uncertainty_encoder_forward.17} parent=5 // pred_check_branch
      %486 = sbr.rel (%p484) target = $region52
    $region51: #{uncertainty_encoder_forward.17} parent=5 // pred_region
      %s487 = ssub.s32 %s10, 2
      // Predicated region
      $region53: #{uncertainty_encoder_forward.17} parent=51 // pred_check
        %p488 = pneg %p165
      $region54: #{uncertainty_encoder_forward.17} parent=51 // pred_check_branch
        %490 = sbr.rel (%p488) target = $region56
      $region55: #{uncertainty_encoder_forward.17} parent=51 // pred_region
        %p491 = scmp.lt.s32.totalorder %s23, 1
        %s492 = scalar_select %p491, %s23, 1
        %p493 = scmp.lt.s32.totalorder %s24, 0
        %s494 = scalar_select %p493, %s24, 0
        %s495 = sadd.s32 %s494, %s492
        %s496 = smul.addr %s495, 8
        %s497 = scalar_lea.vmem %s4, %s496
      $region56: #{uncertainty_encoder_forward.17} parent=51 // pred_fallthru
        _
    $region52: #{uncertainty_encoder_forward.17} parent=5 // pred_fallthru
      _
  $region6: #{uncertainty_encoder_forward.17} parent=0 // loop_footer
    %s14 = sadd.s32 1, %s10
  $region7: #{uncertainty_encoder_forward.17} parent=0 // loop_footer_branch
    %9 = sbr.rel target = $region3
  $region8: #{uncertainty_encoder_forward.17} parent=0 // loop_exit
    _

// kernel: uncertainty_encoder_forward.21
$region0: #{uncertainty_encoder_forward.21}
  #allocation0 [shape = 'u32[]', space=smem, size = 0x4, offset = 0x4, fixed_abs, tag = 'smem constant byte address 0x4 - core index']
  #allocation1 [shape = 'u32[72,128]{1,0:T(1,128)}', space=vmem, size = 0x9000, scoped, tag = 'internal scratch']
  %s0 = inlined_call_operand.vmem [shape: f32[2,8,32], index: 0, kind: input, shape index: {}]
  %s1 = inlined_call_operand.vmem [shape: f32[1,32], index: 1, kind: input, shape index: {}]
  %s2 = inlined_call_operand.vmem [shape: f32[1,32], index: 2, kind: input, shape index: {}]
  %s3 = inlined_call_operand.vmem [shape: f32[32,2048], index: 3, kind: input, shape index: {}]
  %s4 = inlined_call_operand.vmem [shape: f32[1,2048], index: 4, kind: input, shape index: {}]
  %s5 = inlined_call_operand.vmem [shape: f32[2,8,2048], index: 5, kind: output, shape index: {}]
  %s6 = sld [smem:[#allocation0]]
  $region76: #{uncertainty_encoder_forward.21} parent=0
    _
  %s8 = ssub.s32 1, %s6
  %s9 = scalar_select 0, %s8, %s6
  $region1: #{uncertainty_encoder_forward.21} parent=0
    #allocation2 [shape = 'u8[131072]{0}', space=vmem, size = 0x20000, scoped, tag = 'input window, operand 3']
    loop: start=0, step=1, limit=10
    $region2: #{uncertainty_encoder_forward.21} parent=1 // loop_pre_header
      _
    $region3: #{uncertainty_encoder_forward.21} parent=1 // loop_header
      %s11 = sphi 0, %s15
      %p12 = scmp.ge.s32.totalorder %s11, 10
      %s18 = sphi 0, %s37
      %s19 = sphi 0, %s33
      %s20 = sphi 0, %s29
      %s21 = sphi 0, %s18
      %s22 = sphi 0, %s19
      %s23 = sphi 0, %s20
      %s24 = sphi 0, %s21
      %s25 = sphi 0, %s22
      %s26 = sphi 0, %s23
      %s42 = sphi 0, %s44
      %s45 = sphi 0, %s42
      %s46 = sphi 0, %s45
      %s62 = sphi 0, %s46
      %s66 = sphi 0, %s66
      %s68 = sphi 0, %s66
      %s69 = sphi 0, %s68
      %s83 = sphi 0, %s69
      %s87 = sphi 0, %s87
      %s89 = sphi 0, %s87
      %s90 = sphi 0, %s89
      %s104 = sphi 0, %s90
      %s110 = sphi 0, %s112
      %s113 = sphi 0, %s110
      %s114 = sphi 0, %s113
      %s130 = sphi 0, %s114
      %s136 = sphi 0, %s138
      %s139 = sphi 0, %s136
      %s140 = sphi 0, %s139
      %s156 = sphi 0, %s140
      %s166 = sphi 0, %s168
      %s169 = sphi 0, %s166
      %s170 = sphi 0, %s169
      %s186 = sphi 0, %s170
    $region4: #{uncertainty_encoder_forward.21} parent=1 // loop_header_branch
      %14 = sbr.rel (%p12) target = $region8
    $region5: #{uncertainty_encoder_forward.21} parent=1 // loop_body
      %s16 = ssub.s32 %s11, 1
      %s17 = ssub.s32 %s11, 2
      %s27 = sadd.s32 1, %s20
      %p28 = scmp.ge.s32.totalorder %s27, 4
      %s29 = scalar_select %p28, 0, %s27
      %s30 = sadd.s32 1, %s19
      %s31 = scalar_select %p28, %s30, %s19
      %p32 = scmp.ge.s32.totalorder %s31, 1
      %s33 = scalar_select %p32, 0, %s31
      %s34 = sadd.s32 1, %s18
      %s35 = scalar_select %p32, %s34, %s18
      %p36 = scmp.ge.s32.totalorder %s35, 2
      %s37 = scalar_select %p36, 0, %s35
      %s38 = ssub.s32 %s18, %s37
      %s39 = ssub.s32 %s19, %s33
      %s40 = sor.u32 %s38, %s39
      %p41 = scmp.eq.s32.totalorder %s40, 0
      %s43 = sadd.s32 %s42, 1
      %s44 = scalar_select %p41, %s42, %s43
      %p47 = pneg %p41
      %p48 = scmp.eq.s32.totalorder %s11, 7
      %p49 = por %p47, %p48
      %p50 = scmp.ne.s32.totalorder %s42, %s45
      %p51 = scmp.eq.s32.totalorder %s11, 0
      %p52 = por %p50, %p51
      %p53 = scmp.ne.s32.totalorder %s42, %s45
      %p54 = scmp.eq.s32.totalorder %s16, 7
      %p55 = por %p53, %p54
      %p56 = scmp.ne.s32.totalorder %s45, %s46
      %p57 = scmp.eq.s32.totalorder %s16, 0
      %p58 = por %p56, %p57
      %p59 = scmp.ne.s32.totalorder %s45, %s46
      %p60 = scmp.eq.s32.totalorder %s17, 7
      %p61 = por %p59, %p60
      %p63 = scmp.ne.s32.totalorder %s46, %s62
      %p64 = scmp.eq.s32.totalorder %s17, 0
      %p65 = por %p63, %p64
      %s67 = sadd.s32 %s66, 1
      %p70 = scmp.eq.s32.totalorder %s11, 7
      %p71 = scmp.ne.s32.totalorder %s66, %s68
      %p72 = scmp.eq.s32.totalorder %s11, 0
      %p73 = por %p71, %p72
      %p74 = scmp.ne.s32.totalorder %s66, %s68
      %p75 = scmp.eq.s32.totalorder %s16, 7
      %p76 = por %p74, %p75
      %p77 = scmp.ne.s32.totalorder %s68, %s69
      %p78 = scmp.eq.s32.totalorder %s16, 0
      %p79 = por %p77, %p78
      %p80 = scmp.ne.s32.totalorder %s68, %s69
      %p81 = scmp.eq.s32.totalorder %s17, 7
      %p82 = por %p80, %p81
      %p84 = scmp.ne.s32.totalorder %s69, %s83
      %p85 = scmp.eq.s32.totalorder %s17, 0
      %p86 = por %p84, %p85
      %s88 = sadd.s32 %s87, 1
      %p91 = scmp.eq.s32.totalorder %s11, 7
      %p92 = scmp.ne.s32.totalorder %s87, %s89
      %p93 = scmp.eq.s32.totalorder %s11, 0
      %p94 = por %p92, %p93
      %p95 = scmp.ne.s32.totalorder %s87, %s89
      %p96 = scmp.eq.s32.totalorder %s16, 7
      %p97 = por %p95, %p96
      %p98 = scmp.ne.s32.totalorder %s89, %s90
      %p99 = scmp.eq.s32.totalorder %s16, 0
      %p100 = por %p98, %p99
      %p101 = scmp.ne.s32.totalorder %s89, %s90
      %p102 = scmp.eq.s32.totalorder %s17, 7
      %p103 = por %p101, %p102
      %p105 = scmp.ne.s32.totalorder %s90, %s104
      %p106 = scmp.eq.s32.totalorder %s17, 0
      %p107 = por %p105, %p106
      %s108 = ssub.s32 %s20, %s29
      %p109 = scmp.eq.s32.totalorder %s108, 0
      %s111 = sadd.s32 %s110, 1
      %s112 = scalar_select %p109, %s110, %s111
      %p115 = pneg %p109
      %p116 = scmp.eq.s32.totalorder %s11, 7
      %p117 = por %p115, %p116
      %p118 = scmp.ne.s32.totalorder %s110, %s113
      %p119 = scmp.eq.s32.totalorder %s11, 0
      %p120 = por %p118, %p119
      %p121 = scmp.ne.s32.totalorder %s110, %s113
      %p122 = scmp.eq.s32.totalorder %s16, 7
      %p123 = por %p121, %p122
      %p124 = scmp.ne.s32.totalorder %s113, %s114
      %p125 = scmp.eq.s32.totalorder %s16, 0
      %p126 = por %p124, %p125
      %p127 = scmp.ne.s32.totalorder %s113, %s114
      %p128 = scmp.eq.s32.totalorder %s17, 7
      %p129 = por %p127, %p128
      %p131 = scmp.ne.s32.totalorder %s114, %s130
      %p132 = scmp.eq.s32.totalorder %s17, 0
      %p133 = por %p131, %p132
      %s134 = ssub.s32 %s20, %s29
      %p135 = scmp.eq.s32.totalorder %s134, 0
      %s137 = sadd.s32 %s136, 1
      %s138 = scalar_select %p135, %s136, %s137
      %p141 = pneg %p135
      %p142 = scmp.eq.s32.totalorder %s11, 7
      %p143 = por %p141, %p142
      %p144 = scmp.ne.s32.totalorder %s136, %s139
      %p145 = scmp.eq.s32.totalorder %s11, 0
      %p146 = por %p144, %p145
      %p147 = scmp.ne.s32.totalorder %s136, %s139
      %p148 = scmp.eq.s32.totalorder %s16, 7
      %p149 = por %p147, %p148
      %p150 = scmp.ne.s32.totalorder %s139, %s140
      %p151 = scmp.eq.s32.totalorder %s16, 0
      %p152 = por %p150, %p151
      %p153 = scmp.ne.s32.totalorder %s139, %s140
      %p154 = scmp.eq.s32.totalorder %s17, 7
      %p155 = por %p153, %p154
      %p157 = scmp.ne.s32.totalorder %s140, %s156
      %p158 = scmp.eq.s32.totalorder %s17, 0
      %p159 = por %p157, %p158
      %s160 = ssub.s32 %s18, %s37
      %s161 = ssub.s32 %s19, %s33
      %s162 = sor.u32 %s160, %s161
      %s163 = ssub.s32 %s20, %s29
      %s164 = sor.u32 %s162, %s163
      %p165 = scmp.eq.s32.totalorder %s164, 0
      %s167 = sadd.s32 %s166, 1
      %s168 = scalar_select %p165, %s166, %s167
      %p171 = pneg %p165
      %p172 = scmp.eq.s32.totalorder %s11, 7
      %p173 = por %p171, %p172
      %p174 = scmp.ne.s32.totalorder %s166, %s169
      %p175 = scmp.eq.s32.totalorder %s11, 0
      %p176 = por %p174, %p175
      %p177 = scmp.ne.s32.totalorder %s166, %s169
      %p178 = scmp.eq.s32.totalorder %s16, 7
      %p179 = por %p177, %p178
      %p180 = scmp.ne.s32.totalorder %s169, %s170
      %p181 = scmp.eq.s32.totalorder %s16, 0
      %p182 = por %p180, %p181
      %p183 = scmp.ne.s32.totalorder %s169, %s170
      %p184 = scmp.eq.s32.totalorder %s17, 7
      %p185 = por %p183, %p184
      %p187 = scmp.ne.s32.totalorder %s170, %s186
      %p188 = scmp.eq.s32.totalorder %s17, 0
      %p189 = por %p187, %p188
      %p190 = scmp.le.s32.totalorder 1, %s11
      %p191 = scmp.lt.s32.totalorder %s11, 9
      %p192 = pnand %p190, %p191
      %p193 = pneg %p192
      // Predicated region
      $region9: #{uncertainty_encoder_forward.21} parent=5 // pred_check
        _
      $region10: #{uncertainty_encoder_forward.21} parent=5 // pred_check_branch
        %195 = sbr.rel (%p192) target = $region12
      $region11: #{uncertainty_encoder_forward.21} parent=5 // pred_region
        %s196 = ssub.s32 %s11, 1
        // Predicated region
        $region13: #{uncertainty_encoder_forward.21} parent=11 // pred_check
          %p197 = pneg %p79
        $region14: #{uncertainty_encoder_forward.21} parent=11 // pred_check_branch
          %199 = sbr.rel (%p197) target = $region16
        $region15: #{uncertainty_encoder_forward.21} parent=11 // pred_region
          _
        $region16: #{uncertainty_encoder_forward.21} parent=11 // pred_fallthru
          _
        // Predicated region
        $region17: #{uncertainty_encoder_forward.21} parent=11 // pred_check
          %p200 = pneg %p100
        $region18: #{uncertainty_encoder_forward.21} parent=11 // pred_check_branch
          %202 = sbr.rel (%p200) target = $region20
        $region19: #{uncertainty_encoder_forward.21} parent=11 // pred_region
          _
        $region20: #{uncertainty_encoder_forward.21} parent=11 // pred_fallthru
          _
      $region12: #{uncertainty_encoder_forward.21} parent=5 // pred_fallthru
        _
      %p203 = scmp.lt.s32.totalorder %s11, 8
      // Predicated region
      $region21: #{uncertainty_encoder_forward.21} parent=5 // pred_check
        %p204 = pneg %p203
      $region22: #{uncertainty_encoder_forward.21} parent=5 // pred_check_branch
        %206 = sbr.rel (%p204) target = $region24
      $region23: #{uncertainty_encoder_forward.21} parent=5 // pred_region
        // Predicated region
        $region25: #{uncertainty_encoder_forward.21} parent=23 // pred_check
          %p207 = pneg %p52
        $region26: #{uncertainty_encoder_forward.21} parent=23 // pred_check_branch
          %209 = sbr.rel (%p207) target = $region28
        $region27: #{uncertainty_encoder_forward.21} parent=23 // pred_region
          %p210 = scmp.lt.s32.totalorder %s18, 1
          %s211 = scalar_select %p210, %s18, 1
          %p212 = scmp.lt.s32.totalorder %s19, 0
          %s213 = scalar_select %p212, %s19, 0
          %s214 = sadd.s32 %s213, %s211
          %s215 = smul.addr %s214, 8
          %s216 = scalar_lea.vmem %s0, %s215
        $region28: #{uncertainty_encoder_forward.21} parent=23 // pred_fallthru
          _
        // Predicated region
        $region29: #{uncertainty_encoder_forward.21} parent=23 // pred_check
          %p217 = pneg %p120
        $region30: #{uncertainty_encoder_forward.21} parent=23 // pred_check_branch
          %219 = sbr.rel (%p217) target = $region32
        $region31: #{uncertainty_encoder_forward.21} parent=23 // pred_region
          %s220 = sand.u32 %s110, 1
          %s221 = sand.u32 %s110, 1
          %s222 = smul.addr %s221, 128
          %s223 = scalar_lea.vmem [#allocation2], %s222
          %s224 = smul.u32 4, %s20
          %s225 = smul.addr %s224, 8
          %s226 = scalar_lea.vmem %s3, %s225
          // Predicated region
          $region33: #{uncertainty_encoder_forward.21} parent=31 // pred_check
            _
          $region34: #{uncertainty_encoder_forward.21} parent=31 // pred_check_branch
            %228 = sbr.rel (0) target = $region36
          $region35: #{uncertainty_encoder_forward.21} parent=31 // pred_region
            // Predicated region
            $region37: #{uncertainty_encoder_forward.21} parent=35 // pred_check
              _
            $region38: #{uncertainty_encoder_forward.21} parent=35 // pred_check_branch
              %230 = sbr.rel (0) target = $region40
            $region39: #{uncertainty_encoder_forward.21} parent=35 // pred_region
              loop: start=0, step=1, limit=1
              $region41: #{uncertainty_encoder_forward.21} parent=39 // loop_pre_header
                _
              $region42: #{uncertainty_encoder_forward.21} parent=39 // loop_header
                %s232 = sphi 0, %s236
                %p233 = scmp.ge.s32.totalorder %s232, 1
                %s237 = sphi %s226, %s226
                %s238 = sphi %s223, %s223
              $region43: #{uncertainty_encoder_forward.21} parent=39 // loop_header_branch
                %235 = sbr.rel (%p233) target = $region47
              $region44: #{uncertainty_encoder_forward.21} parent=39 // loop_body
                %v239 = vld [vmem:[%s237] sm:$0xff]
                %240 = vst [vmem:[%s238] sm:$0xff] %v239
                %v241 = vld [vmem:[%s237 + $0x8] sm:$0xff]
                %242 = vst [vmem:[%s238 + $0x8] sm:$0xff] %v241
                %v243 = vld [vmem:[%s237 + $0x10] sm:$0xff]
                %244 = vst [vmem:[%s238 + $0x10] sm:$0xff] %v243
                %v245 = vld [vmem:[%s237 + $0x18] sm:$0xff]
                %246 = vst [vmem:[%s238 + $0x18] sm:$0xff] %v245
                %v247 = vld [vmem:[%s237 + $0x80] sm:$0xff]
                %248 = vst [vmem:[%s238 + $0x20] sm:$0xff] %v247
                %v249 = vld [vmem:[%s237 + $0x88] sm:$0xff]
                %250 = vst [vmem:[%s238 + $0x28] sm:$0xff] %v249
                %v251 = vld [vmem:[%s237 + $0x90] sm:$0xff]
                %252 = vst [vmem:[%s238 + $0x30] sm:$0xff] %v251
                %v253 = vld [vmem:[%s237 + $0x98] sm:$0xff]
                %254 = vst [vmem:[%s238 + $0x38] sm:$0xff] %v253
                %v255 = vld [vmem:[%s237 + $0x100] sm:$0xff]
                %256 = vst [vmem:[%s238 + $0x40] sm:$0xff] %v255
                %v257 = vld [vmem:[%s237 + $0x108] sm:$0xff]
                %258 = vst [vmem:[%s238 + $0x48] sm:$0xff] %v257
                %v259 = vld [vmem:[%s237 + $0x110] sm:$0xff]
                %260 = vst [vmem:[%s238 + $0x50] sm:$0xff] %v259
                %v261 = vld [vmem:[%s237 + $0x118] sm:$0xff]
                %262 = vst [vmem:[%s238 + $0x58] sm:$0xff] %v261
                %v263 = vld [vmem:[%s237 + $0x180] sm:$0xff]
                %264 = vst [vmem:[%s238 + $0x60] sm:$0xff] %v263
                %v265 = vld [vmem:[%s237 + $0x188] sm:$0xff]
                %266 = vst [vmem:[%s238 + $0x68] sm:$0xff] %v265
                %v267 = vld [vmem:[%s237 + $0x190] sm:$0xff]
                %268 = vst [vmem:[%s238 + $0x70] sm:$0xff] %v267
                %v269 = vld [vmem:[%s237 + $0x198] sm:$0xff]
                %270 = vst [vmem:[%s238 + $0x78] sm:$0xff] %v269
              $region45: #{uncertainty_encoder_forward.21} parent=39 // loop_footer
                %s236 = sadd.s32 1, %s232
              $region46: #{uncertainty_encoder_forward.21} parent=39 // loop_footer_branch
                %231 = sbr.rel target = $region42
              $region47: #{uncertainty_encoder_forward.21} parent=39 // loop_exit
                _
            $region40: #{uncertainty_encoder_forward.21} parent=35 // pred_fallthru
              _
            // Predicated region
            $region48: #{uncertainty_encoder_forward.21} parent=35 // pred_check
              _
            $region49: #{uncertainty_encoder_forward.21} parent=35 // pred_check_branch
              %272 = sbr.rel target = $region51
            $region50: #{uncertainty_encoder_forward.21} parent=35 // pred_region
              _
            $region51: #{uncertainty_encoder_forward.21} parent=35 // pred_fallthru
              _
          $region36: #{uncertainty_encoder_forward.21} parent=31 // pred_fallthru
            _
          %273 = vnop
        $region32: #{uncertainty_encoder_forward.21} parent=23 // pred_fallthru
          _
        // Predicated region
        $region52: #{uncertainty_encoder_forward.21} parent=23 // pred_check
          %p274 = pneg %p146
        $region53: #{uncertainty_encoder_forward.21} parent=23 // pred_check_branch
          %276 = sbr.rel (%p274) target = $region55
        $region54: #{uncertainty_encoder_forward.21} parent=23 // pred_region
          %s277 = smul.u32 4, %s20
          %p278 = scmp.lt.s32.totalorder %s277, 15
          %s279 = scalar_select %p278, %s277, 15
          %s280 = scalar_lea.vmem %s4, %s279
          %s281 = smul.u32 4, %s20
        $region55: #{uncertainty_encoder_forward.21} parent=23 // pred_fallthru
          _
      $region24: #{uncertainty_encoder_forward.21} parent=5 // pred_fallthru
        _
      %p282 = scmp.le.s32.totalorder 1, %s11
      %p283 = scmp.lt.s32.totalorder %s11, 9
      %p284 = pnand %p282, %p283
      %p285 = pneg %p284
      // Predicated region
      $region56: #{uncertainty_encoder_forward.21} parent=5 // pred_check
        _
      $region57: #{uncertainty_encoder_forward.21} parent=5 // pred_check_branch
        %287 = sbr.rel (%p284) target = $region59
      $region58: #{uncertainty_encoder_forward.21} parent=5 // pred_region
        %s288 = ssub.s32 %s11, 1
        %s289 = sand.u32 %s113, 1
        %s290 = sand.u32 %s113, 1
        %s291 = smul.addr %s290, 128
        %s292 = scalar_lea.vmem [#allocation2], %s291
        // Predicated region
        $region60: #{uncertainty_encoder_forward.21} parent=58 // pred_check
          %p293 = pneg %p126
        $region61: #{uncertainty_encoder_forward.21} parent=58 // pred_check_branch
          %295 = sbr.rel (%p293) target = $region63
        $region62: #{uncertainty_encoder_forward.21} parent=58 // pred_region
          _
        $region63: #{uncertainty_encoder_forward.21} parent=58 // pred_fallthru
          _
        %p296 = scmp.lt.s32.totalorder %s21, 1
        %s297 = scalar_select %p296, %s21, 1
        %p298 = scmp.lt.s32.totalorder %s22, 0
        %s299 = scalar_select %p298, %s22, 0
        %s300 = sadd.s32 %s299, %s297
        %s301 = smul.addr %s300, 8
        %s302 = scalar_lea.vmem %s0, %s301
        %p303 = pneg %p58
        %p304 = pneg %p55
        %p305 = pneg %p79
        %p306 = pneg %p76
        %p307 = pneg %p100
        %p308 = pneg %p97
        %s309 = sand.u32 %s113, 1
        %s310 = sand.u32 %s113, 1
        %s311 = smul.addr %s310, 128
        %s312 = scalar_lea.vmem [#allocation2], %s311
        %p313 = pneg %p126
        %p314 = pneg %p123
        %s315 = smul.u32 4, %s23
        %p316 = scmp.lt.s32.totalorder %s315, 15
        %s317 = scalar_select %p316, %s315, 15
        %s318 = scalar_lea.vmem %s4, %s317
        %p319 = pneg %p152
        %p320 = pneg %p149
        %p321 = pneg %p182
        %p322 = pneg %p179
        %s323 = smul.u32 4, %s23
        %p324 = scmp.lt.s32.totalorder %s21, 1
        %s325 = scalar_select %p324, %s21, 1
        %p326 = scmp.lt.s32.totalorder %s22, 0
        %s327 = scalar_select %p326, %s22, 0
        %p328 = scmp.lt.s32.totalorder %s323, 15
        %s329 = scalar_select %p328, %s323, 15
        %s330 = smul.addr %s327, 16
        %s331 = sadd.s32 %s329, %s330
        %s332 = smul.addr %s325, 16
        %s333 = sadd.s32 %s331, %s332
        %s334 = smul.addr %s333, 8
        %s335 = scalar_lea.vmem %s5, %s334
        %p336 = scmp.lt.s32.totalorder %s21, 1
        %s337 = scalar_select %p336, %s21, 1
        %p338 = scmp.lt.s32.totalorder %s22, 0
        %s339 = scalar_select %p338, %s22, 0
        %s340 = sadd.s32 %s339, %s337
        %s341 = smul.addr %s340, 8
        %s342 = scalar_lea.vmem %s0, %s341
        %s343 = smul.u32 4, %s23
        %s344 = smul.u32 4, %s23
        %p345 = scmp.lt.s32.totalorder %s344, 15
        %s346 = scalar_select %p345, %s344, 15
        %s347 = scalar_lea.vmem %s4, %s346
        %s348 = smul.u32 4, %s23
        %s349 = smul.u32 4, %s23
        %p350 = scmp.lt.s32.totalorder %s21, 1
        %s351 = scalar_select %p350, %s21, 1
        %p352 = scmp.lt.s32.totalorder %s22, 0
        %s353 = scalar_select %p352, %s22, 0
        %p354 = scmp.lt.s32.totalorder %s349, 15
        %s355 = scalar_select %p354, %s349, 15
        %s356 = smul.addr %s353, 16
        %s357 = sadd.s32 %s355, %s356
        %s358 = smul.addr %s351, 16
        %s359 = sadd.s32 %s357, %s358
        %s360 = smul.addr %s359, 8
        %s361 = scalar_lea.vmem %s5, %s360
        %s362 = smul.u32 4, %s23
        %v363 = vld [vmem:[%s342] sm:$0xff]
        %v364 = vld [vmem:[%s1] sm:$0x1]
        %v365 = vld [vmem:[%s2] sm:$0x1]
        %vm366 = vcmask 261120
        %v367 = vsel %vm366, %v363, 0.0
        %368 = vadd.xlane.f32.xlu0 %v367
        %v369 = vpop.xlane.xlu0 %368
        %v370 = vrcp.pop 32.0
        %v371 = vmul.f32 32.0, %v370
        %v372 = vsub.f32 1.0, %v371
        %v373 = vmul.f32 %v370, %v372
        %v374 = vadd.f32 %v370, %v373
        %vm375 = vweird.f32 %v370
        %v376 = vsel %vm375, %v370, %v374
        %v377 = vmul.f32 %v369, %v376
        %v378 = vsub.f32 %v363, %v377
        %v379 = vmul.f32 %v378, %v378
        %v380 = vsel %vm366, %v379, 0.0
        %381 = vadd.xlane.f32.xlu0 %v380
        %v382 = vpop.xlane.xlu0 %381
        %v383 = vrcp.pop 31.0
        %v384 = vmul.f32 31.0, %v383
        %v385 = vsub.f32 1.0, %v384
        %v386 = vmul.f32 %v383, %v385
        %v387 = vadd.f32 %v383, %v386
        %vm388 = vweird.f32 %v383
        %v389 = vsel %vm388, %v383, %v387
        %v390 = vmul.f32 %v382, %v389
        %v391 = vrsqrt.pop %v390
        %v392 = vmul.f32 %v391, %v390
        %v393 = vmul.f32 %v392, %v391
        %v394 = vmul.f32 0.5, %v393
        %v395 = vsub.f32 1.5, %v394
        %v396 = vmul.f32 %v391, %v395
        %v397 = vmul.f32 %v390, %v396
        %vm398 = vcmp.eq.f32.partialorder %v390, inf
        %v399 = vsel %vm398, %v390, %v397
        %vm400 = vcmp.eq.f32.partialorder %v390, 0.0
        %v401 = vand.u32 %v390, 2147483648
        %v402 = vsel %vm400, %v401, %v399
        %v403 = vadd.f32 %v402, 1e-06
        %v404 = vrcp.pop %v403
        %v405 = vmul.f32 %v403, %v404
        %v406 = vsub.f32 1.0, %v405
        %v407 = vmul.f32 %v404, %v406
        %v408 = vadd.f32 %v404, %v407
        %vm409 = vweird.f32 %v403
        %vm410 = vweird.f32 %v404
        %vm411 = vmor %vm409, %vm410
        %v412 = vsel %vm411, %v404, %v408
        %v413 = vand.u32 2147483647, %v403
        %vm414 = vcmp.eq.f32.partialorder %v413, 8.507059e+37
        %v415 = vand.u32 %v403, 2147483648
        %v416 = vor.u32 1.1754944e-38, %v415
        %v417 = vsel %vm414, %v416, %v412
        %v418 = vmul.f32 %v378, %v417
        %v420 = vperm.slane %v364, 0
        %v422 = vmul.f32 %v420, %v418
        %v424 = vperm.slane %v365, 0
        %v426 = vadd.f32 %v422, %v424
        %v427 = vld [vmem:[%s292] sm:$0xff]
        %v428 = vld [vmem:[%s292 + $0x8] sm:$0xff]
        %v429 = vld [vmem:[%s292 + $0x10] sm:$0xff]
        %v430 = vld [vmem:[%s292 + $0x18] sm:$0xff]
        %v431 = vld [vmem:[%s292 + $0x20] sm:$0xff]
        %v432 = vld [vmem:[%s292 + $0x28] sm:$0xff]
        %v433 = vld [vmem:[%s292 + $0x30] sm:$0xff]
        %v434 = vld [vmem:[%s292 + $0x38] sm:$0xff]
        %v435 = vld [vmem:[%s292 + $0x40] sm:$0xff]
        %v436 = vld [vmem:[%s292 + $0x48] sm:$0xff]
        %v437 = vld [vmem:[%s292 + $0x50] sm:$0xff]
        %v438 = vld [vmem:[%s292 + $0x58] sm:$0xff]
        %v439 = vld [vmem:[%s292 + $0x60] sm:$0xff]
        %v440 = vld [vmem:[%s292 + $0x68] sm:$0xff]
        %v441 = vld [vmem:[%s292 + $0x70] sm:$0xff]
        %v442 = vld [vmem:[%s292 + $0x78] sm:$0xff]
        %v443 = vld [vmem:[%s347] sm:$0xf]
        %v445 = vperm.slane %v443, 0
        %v446 = vperm.slane %v443, 1
        %v447 = vperm.slane %v443, 2
        %v448 = vperm.slane %v443, 3
        %v454 = vsel %vm366, %v426, 0
        %456 = vmatpush.msra.mxu0 0.0
        %457 = vmatpush.msra.mxu0 0.0
        %458 = vmatpush.msra.mxu0 0.0
        %459 = vmatpush.msra.mxu0 0.0
        %460 = vmatpush.msra.mxu0 0.0
        %461 = vmatpush.msra.mxu0 0.0
        %462 = vmatpush.msra.mxu0 0.0
        %463 = vmatpush.msra.mxu0 0.0
        %464 = vmatpush.msra.mxu0 0.0
        %465 = vmatpush.msra.mxu0 0.0
        %466 = vmatpush.msra.mxu0 0.0
        %467 = vmatpush.msra.mxu0 0.0
        %468 = vmatpush.msra.mxu0 %v439
        %469 = vmatpush.msra.mxu0 %v435
        %470 = vmatpush.msra.mxu0 %v431
        %471 = vmatpush.msra.mxu0 %v427
        %472 = vmatmul.f32.gmra.mxu0 %v454
        %v473 = vpop.f32.mrf.mxu0
        %v474 = vadd.f32 %v445, %v473
        %475 = vdwg.mxu0
        %476 = vmatpush.msra.mxu0 0.0
        %477 = vmatpush.msra.mxu0 0.0
        %478 = vmatpush.msra.mxu0 0.0
        %479 = vmatpush.msra.mxu0 0.0
        %480 = vmatpush.msra.mxu0 0.0
        %481 = vmatpush.msra.mxu0 0.0
        %482 = vmatpush.msra.mxu0 0.0
        %483 = vmatpush.msra.mxu0 0.0
        %484 = vmatpush.msra.mxu0 0.0
        %485 = vmatpush.msra.mxu0 0.0
        %486 = vmatpush.msra.mxu0 0.0
        %487 = vmatpush.msra.mxu0 0.0
        %488 = vmatpush.msra.mxu0 %v440
        %489 = vmatpush.msra.mxu0 %v436
        %490 = vmatpush.msra.mxu0 %v432
        %491 = vmatpush.msra.mxu0 %v428
        %492 = vmatmul.f32.gmra.mxu0 %v454
        %v493 = vpop.f32.mrf.mxu0
        %v494 = vadd.f32 %v446, %v493
        %495 = vdwg.mxu0
        %496 = vmatpush.msra.mxu0 0.0
        %497 = vmatpush.msra.mxu0 0.0
        %498 = vmatpush.msra.mxu0 0.0
        %499 = vmatpush.msra.mxu0 0.0
        %500 = vmatpush.msra.mxu0 0.0
        %501 = vmatpush.msra.mxu0 0.0
        %502 = vmatpush.msra.mxu0 0.0
        %503 = vmatpush.msra.mxu0 0.0
        %504 = vmatpush.msra.mxu0 0.0
        %505 = vmatpush.msra.mxu0 0.0
        %506 = vmatpush.msra.mxu0 0.0
        %507 = vmatpush.msra.mxu0 0.0
        %508 = vmatpush.msra.mxu0 %v441
        %509 = vmatpush.msra.mxu0 %v437
        %510 = vmatpush.msra.mxu0 %v433
        %511 = vmatpush.msra.mxu0 %v429
        %512 = vmatmul.f32.gmra.mxu0 %v454
        %v513 = vpop.f32.mrf.mxu0
        %v514 = vadd.f32 %v447, %v513
        %515 = vdwg.mxu0
        %516 = vmatpush.msra.mxu0 0.0
        %517 = vmatpush.msra.mxu0 0.0
        %518 = vmatpush.msra.mxu0 0.0
        %519 = vmatpush.msra.mxu0 0.0
        %520 = vmatpush.msra.mxu0 0.0
        %521 = vmatpush.msra.mxu0 0.0
        %522 = vmatpush.msra.mxu0 0.0
        %523 = vmatpush.msra.mxu0 0.0
        %524 = vmatpush.msra.mxu0 0.0
        %525 = vmatpush.msra.mxu0 0.0
        %526 = vmatpush.msra.mxu0 0.0
        %527 = vmatpush.msra.mxu0 0.0
        %528 = vmatpush.msra.mxu0 %v442
        %529 = vmatpush.msra.mxu0 %v438
        %530 = vmatpush.msra.mxu0 %v434
        %531 = vmatpush.msra.mxu0 %v430
        %532 = vmatmul.f32.gmra.mxu0 %v454
        %v533 = vpop.f32.mrf.mxu0
        %v534 = vadd.f32 %v448, %v533
        %535 = vdwg.mxu0
        %v536 = vmax.f32 %v474, 0.0
        %v537 = vmax.f32 %v494, 0.0
        %v538 = vmax.f32 %v514, 0.0
        %v539 = vmax.f32 %v534, 0.0
        %540 = vst [vmem:[%s361] sm:$0xff] %v536
        %541 = vst [vmem:[%s361 + $0x8] sm:$0xff] %v537
        %542 = vst [vmem:[%s361 + $0x10] sm:$0xff] %v538
        %543 = vst [vmem:[%s361 + $0x18] sm:$0xff] %v539
        %s544 = smul.u32 4, %s23
        %p545 = scmp.lt.s32.totalorder %s21, 1
        %s546 = scalar_select %p545, %s21, 1
        %p547 = scmp.lt.s32.totalorder %s22, 0
        %s548 = scalar_select %p547, %s22, 0
        %p549 = scmp.lt.s32.totalorder %s544, 15
        %s550 = scalar_select %p549, %s544, 15
        %s551 = smul.addr %s548, 16
        %s552 = sadd.s32 %s550, %s551
        %s553 = smul.addr %s546, 16
        %s554 = sadd.s32 %s552, %s553
        %s555 = smul.addr %s554, 8
        %s556 = scalar_lea.vmem %s5, %s555
        // Predicated region
        $region64: #{uncertainty_encoder_forward.21} parent=58 // pred_check
          %p557 = pneg %p179
        $region65: #{uncertainty_encoder_forward.21} parent=58 // pred_check_branch
          %559 = sbr.rel (%p557) target = $region67
        $region66: #{uncertainty_encoder_forward.21} parent=58 // pred_region
          %s560 = smul.u32 4, %s23
        $region67: #{uncertainty_encoder_forward.21} parent=58 // pred_fallthru
          _
      $region59: #{uncertainty_encoder_forward.21} parent=5 // pred_fallthru
        _
      %p561 = scmp.le.s32.totalorder 2, %s11
      // Predicated region
      $region68: #{uncertainty_encoder_forward.21} parent=5 // pred_check
        %p562 = pneg %p561
      $region69: #{uncertainty_encoder_forward.21} parent=5 // pred_check_branch
        %564 = sbr.rel (%p562) target = $region71
      $region70: #{uncertainty_encoder_forward.21} parent=5 // pred_region
        %s565 = ssub.s32 %s11, 2
        // Predicated region
        $region72: #{uncertainty_encoder_forward.21} parent=70 // pred_check
          %p566 = pneg %p185
        $region73: #{uncertainty_encoder_forward.21} parent=70 // pred_check_branch
          %568 = sbr.rel (%p566) target = $region75
        $region74: #{uncertainty_encoder_forward.21} parent=70 // pred_region
          %s569 = smul.u32 4, %s26
          %p570 = scmp.lt.s32.totalorder %s24, 1
          %s571 = scalar_select %p570, %s24, 1
          %p572 = scmp.lt.s32.totalorder %s25, 0
          %s573 = scalar_select %p572, %s25, 0
          %p574 = scmp.lt.s32.totalorder %s569, 15
          %s575 = scalar_select %p574, %s569, 15
          %s576 = smul.addr %s573, 16
          %s577 = sadd.s32 %s575, %s576
          %s578 = smul.addr %s571, 16
          %s579 = sadd.s32 %s577, %s578
          %s580 = smul.addr %s579, 8
          %s581 = scalar_lea.vmem %s5, %s580
        $region75: #{uncertainty_encoder_forward.21} parent=70 // pred_fallthru
          _
      $region71: #{uncertainty_encoder_forward.21} parent=5 // pred_fallthru
        _
    $region6: #{uncertainty_encoder_forward.21} parent=1 // loop_footer
      %s15 = sadd.s32 1, %s11
    $region7: #{uncertainty_encoder_forward.21} parent=1 // loop_footer_branch
      %10 = sbr.rel target = $region3
    $region8: #{uncertainty_encoder_forward.21} parent=1 // loop_exit
      _

// kernel: uncertainty_encoder_forward.23
$region0: #{uncertainty_encoder_forward.23}
  #allocation0 [shape = 'u32[]', space=smem, size = 0x4, offset = 0x4, fixed_abs, tag = 'smem constant byte address 0x4 - core index']
  #allocation1 [shape = 'u32[72,128]{1,0:T(1,128)}', space=vmem, size = 0x9000, scoped, tag = 'internal scratch']
  %s0 = inlined_call_operand.vmem [shape: f32[2,8,32], index: 0, kind: input, shape index: {}]
  %s1 = inlined_call_operand.vmem [shape: f32[1,32], index: 1, kind: input, shape index: {}]
  %s2 = inlined_call_operand.vmem [shape: f32[1,32], index: 2, kind: input, shape index: {}]
  %s3 = inlined_call_operand.vmem [shape: f32[32,2], index: 3, kind: input, shape index: {}]
  %s4 = inlined_call_operand.vmem [shape: f32[1,2], index: 4, kind: input, shape index: {}]
  %s5 = inlined_call_operand.vmem [shape: f32[2,8,2], index: 5, kind: output, shape index: {}]
  %s6 = sld [smem:[#allocation0]]
  $region53: #{uncertainty_encoder_forward.23} parent=0
    _
  %s8 = ssub.s32 1, %s6
  %s9 = scalar_select 0, %s8, %s6
  loop: start=0, step=1, limit=4
  $region2: #{uncertainty_encoder_forward.23} parent=0 // loop_pre_header
    _
  $region3: #{uncertainty_encoder_forward.23} parent=0 // loop_header
    %s11 = sphi 0, %s15
    %p12 = scmp.ge.s32.totalorder %s11, 4
    %s18 = sphi 0, %s30
    %s19 = sphi 0, %s26
    %s20 = sphi 0, %s18
    %s21 = sphi 0, %s19
    %s22 = sphi 0, %s20
    %s23 = sphi 0, %s21
    %s35 = sphi 0, %s37
    %s38 = sphi 0, %s35
    %s39 = sphi 0, %s38
    %s55 = sphi 0, %s39
    %s59 = sphi 0, %s59
    %s61 = sphi 0, %s59
    %s62 = sphi 0, %s61
    %s76 = sphi 0, %s62
    %s80 = sphi 0, %s80
    %s82 = sphi 0, %s80
    %s83 = sphi 0, %s82
    %s97 = sphi 0, %s83
    %s101 = sphi 0, %s101
    %s103 = sphi 0, %s101
    %s104 = sphi 0, %s103
    %s118 = sphi 0, %s104
    %s122 = sphi 0, %s122
    %s124 = sphi 0, %s122
    %s125 = sphi 0, %s124
    %s139 = sphi 0, %s125
    %s147 = sphi 0, %s149
    %s150 = sphi 0, %s147
    %s151 = sphi 0, %s150
    %s167 = sphi 0, %s151
  $region4: #{uncertainty_encoder_forward.23} parent=0 // loop_header_branch
    %14 = sbr.rel (%p12) target = $region8
  $region5: #{uncertainty_encoder_forward.23} parent=0 // loop_body
    %s16 = ssub.s32 %s11, 1
    %s17 = ssub.s32 %s11, 2
    %s24 = sadd.s32 1, %s19
    %p25 = scmp.ge.s32.totalorder %s24, 1
    %s26 = scalar_select %p25, 0, %s24
    %s27 = sadd.s32 1, %s18
    %s28 = scalar_select %p25, %s27, %s18
    %p29 = scmp.ge.s32.totalorder %s28, 2
    %s30 = scalar_select %p29, 0, %s28
    %s31 = ssub.s32 %s18, %s30
    %s32 = ssub.s32 %s19, %s26
    %s33 = sor.u32 %s31, %s32
    %p34 = scmp.eq.s32.totalorder %s33, 0
    %s36 = sadd.s32 %s35, 1
    %s37 = scalar_select %p34, %s35, %s36
    %p40 = pneg %p34
    %p41 = scmp.eq.s32.totalorder %s11, 1
    %p42 = por %p40, %p41
    %p43 = scmp.ne.s32.totalorder %s35, %s38
    %p44 = scmp.eq.s32.totalorder %s11, 0
    %p45 = por %p43, %p44
    %p46 = scmp.ne.s32.totalorder %s35, %s38
    %p47 = scmp.eq.s32.totalorder %s16, 1
    %p48 = por %p46, %p47
    %p49 = scmp.ne.s32.totalorder %s38, %s39
    %p50 = scmp.eq.s32.totalorder %s16, 0
    %p51 = por %p49, %p50
    %p52 = scmp.ne.s32.totalorder %s38, %s39
    %p53 = scmp.eq.s32.totalorder %s17, 1
    %p54 = por %p52, %p53
    %p56 = scmp.ne.s32.totalorder %s39, %s55
    %p57 = scmp.eq.s32.totalorder %s17, 0
    %p58 = por %p56, %p57
    %s60 = sadd.s32 %s59, 1
    %p63 = scmp.eq.s32.totalorder %s11, 1
    %p64 = scmp.ne.s32.totalorder %s59, %s61
    %p65 = scmp.eq.s32.totalorder %s11, 0
    %p66 = por %p64, %p65
    %p67 = scmp.ne.s32.totalorder %s59, %s61
    %p68 = scmp.eq.s32.totalorder %s16, 1
    %p69 = por %p67, %p68
    %p70 = scmp.ne.s32.totalorder %s61, %s62
    %p71 = scmp.eq.s32.totalorder %s16, 0
    %p72 = por %p70, %p71
    %p73 = scmp.ne.s32.totalorder %s61, %s62
    %p74 = scmp.eq.s32.totalorder %s17, 1
    %p75 = por %p73, %p74
    %p77 = scmp.ne.s32.totalorder %s62, %s76
    %p78 = scmp.eq.s32.totalorder %s17, 0
    %p79 = por %p77, %p78
    %s81 = sadd.s32 %s80, 1
    %p84 = scmp.eq.s32.totalorder %s11, 1
    %p85 = scmp.ne.s32.totalorder %s80, %s82
    %p86 = scmp.eq.s32.totalorder %s11, 0
    %p87 = por %p85, %p86
    %p88 = scmp.ne.s32.totalorder %s80, %s82
    %p89 = scmp.eq.s32.totalorder %s16, 1
    %p90 = por %p88, %p89
    %p91 = scmp.ne.s32.totalorder %s82, %s83
    %p92 = scmp.eq.s32.totalorder %s16, 0
    %p93 = por %p91, %p92
    %p94 = scmp.ne.s32.totalorder %s82, %s83
    %p95 = scmp.eq.s32.totalorder %s17, 1
    %p96 = por %p94, %p95
    %p98 = scmp.ne.s32.totalorder %s83, %s97
    %p99 = scmp.eq.s32.totalorder %s17, 0
    %p100 = por %p98, %p99
    %s102 = sadd.s32 %s101, 1
    %p105 = scmp.eq.s32.totalorder %s11, 1
    %p106 = scmp.ne.s32.totalorder %s101, %s103
    %p107 = scmp.eq.s32.totalorder %s11, 0
    %p108 = por %p106, %p107
    %p109 = scmp.ne.s32.totalorder %s101, %s103
    %p110 = scmp.eq.s32.totalorder %s16, 1
    %p111 = por %p109, %p110
    %p112 = scmp.ne.s32.totalorder %s103, %s104
    %p113 = scmp.eq.s32.totalorder %s16, 0
    %p114 = por %p112, %p113
    %p115 = scmp.ne.s32.totalorder %s103, %s104
    %p116 = scmp.eq.s32.totalorder %s17, 1
    %p117 = por %p115, %p116
    %p119 = scmp.ne.s32.totalorder %s104, %s118
    %p120 = scmp.eq.s32.totalorder %s17, 0
    %p121 = por %p119, %p120
    %s123 = sadd.s32 %s122, 1
    %p126 = scmp.eq.s32.totalorder %s11, 1
    %p127 = scmp.ne.s32.totalorder %s122, %s124
    %p128 = scmp.eq.s32.totalorder %s11, 0
    %p129 = por %p127, %p128
    %p130 = scmp.ne.s32.totalorder %s122, %s124
    %p131 = scmp.eq.s32.totalorder %s16, 1
    %p132 = por %p130, %p131
    %p133 = scmp.ne.s32.totalorder %s124, %s125
    %p134 = scmp.eq.s32.totalorder %s16, 0
    %p135 = por %p133, %p134
    %p136 = scmp.ne.s32.totalorder %s124, %s125
    %p137 = scmp.eq.s32.totalorder %s17, 1
    %p138 = por %p136, %p137
    %p140 = scmp.ne.s32.totalorder %s125, %s139
    %p141 = scmp.eq.s32.totalorder %s17, 0
    %p142 = por %p140, %p141
    %s143 = ssub.s32 %s18, %s30
    %s144 = ssub.s32 %s19, %s26
    %s145 = sor.u32 %s143, %s144
    %p146 = scmp.eq.s32.totalorder %s145, 0
    %s148 = sadd.s32 %s147, 1
    %s149 = scalar_select %p146, %s147, %s148
    %p152 = pneg %p146
    %p153 = scmp.eq.s32.totalorder %s11, 1
    %p154 = por %p152, %p153
    %p155 = scmp.ne.s32.totalorder %s147, %s150
    %p156 = scmp.eq.s32.totalorder %s11, 0
    %p157 = por %p155, %p156
    %p158 = scmp.ne.s32.totalorder %s147, %s150
    %p159 = scmp.eq.s32.totalorder %s16, 1
    %p160 = por %p158, %p159
    %p161 = scmp.ne.s32.totalorder %s150, %s151
    %p162 = scmp.eq.s32.totalorder %s16, 0
    %p163 = por %p161, %p162
    %p164 = scmp.ne.s32.totalorder %s150, %s151
    %p165 = scmp.eq.s32.totalorder %s17, 1
    %p166 = por %p164, %p165
    %p168 = scmp.ne.s32.totalorder %s151, %s167
    %p169 = scmp.eq.s32.totalorder %s17, 0
    %p170 = por %p168, %p169
    %p171 = scmp.le.s32.totalorder 1, %s11
    %p172 = scmp.lt.s32.totalorder %s11, 3
    %p173 = pnand %p171, %p172
    %p174 = pneg %p173
    // Predicated region
    $region9: #{uncertainty_encoder_forward.23} parent=5 // pred_check
      _
    $region10: #{uncertainty_encoder_forward.23} parent=5 // pred_check_branch
      %176 = sbr.rel (%p173) target = $region12
    $region11: #{uncertainty_encoder_forward.23} parent=5 // pred_region
      %s177 = ssub.s32 %s11, 1
      // Predicated region
      $region13: #{uncertainty_encoder_forward.23} parent=11 // pred_check
        %p178 = pneg %p72
      $region14: #{uncertainty_encoder_forward.23} parent=11 // pred_check_branch
        %180 = sbr.rel (%p178) target = $region16
      $region15: #{uncertainty_encoder_forward.23} parent=11 // pred_region
        _
      $region16: #{uncertainty_encoder_forward.23} parent=11 // pred_fallthru
        _
      // Predicated region
      $region17: #{uncertainty_encoder_forward.23} parent=11 // pred_check
        %p181 = pneg %p93
      $region18: #{uncertainty_encoder_forward.23} parent=11 // pred_check_branch
        %183 = sbr.rel (%p181) target = $region20
      $region19: #{uncertainty_encoder_forward.23} parent=11 // pred_region
        _
      $region20: #{uncertainty_encoder_forward.23} parent=11 // pred_fallthru
        _
      // Predicated region
      $region21: #{uncertainty_encoder_forward.23} parent=11 // pred_check
        %p184 = pneg %p114
      $region22: #{uncertainty_encoder_forward.23} parent=11 // pred_check_branch
        %186 = sbr.rel (%p184) target = $region24
      $region23: #{uncertainty_encoder_forward.23} parent=11 // pred_region
        _
      $region24: #{uncertainty_encoder_forward.23} parent=11 // pred_fallthru
        _
      // Predicated region
      $region25: #{uncertainty_encoder_forward.23} parent=11 // pred_check
        %p187 = pneg %p135
      $region26: #{uncertainty_encoder_forward.23} parent=11 // pred_check_branch
        %189 = sbr.rel (%p187) target = $region28
      $region27: #{uncertainty_encoder_forward.23} parent=11 // pred_region
        _
      $region28: #{uncertainty_encoder_forward.23} parent=11 // pred_fallthru
        _
    $region12: #{uncertainty_encoder_forward.23} parent=5 // pred_fallthru
      _
    %p190 = scmp.lt.s32.totalorder %s11, 2
    // Predicated region
    $region29: #{uncertainty_encoder_forward.23} parent=5 // pred_check
      %p191 = pneg %p190
    $region30: #{uncertainty_encoder_forward.23} parent=5 // pred_check_branch
      %193 = sbr.rel (%p191) target = $region32
    $region31: #{uncertainty_encoder_forward.23} parent=5 // pred_region
      // Predicated region
      $region33: #{uncertainty_encoder_forward.23} parent=31 // pred_check
        %p194 = pneg %p45
      $region34: #{uncertainty_encoder_forward.23} parent=31 // pred_check_branch
        %196 = sbr.rel (%p194) target = $region36
      $region35: #{uncertainty_encoder_forward.23} parent=31 // pred_region
        %p197 = scmp.lt.s32.totalorder %s18, 1
        %s198 = scalar_select %p197, %s18, 1
        %p199 = scmp.lt.s32.totalorder %s19, 0
        %s200 = scalar_select %p199, %s19, 0
        %s201 = sadd.s32 %s200, %s198
        %s202 = smul.addr %s201, 8
        %s203 = scalar_lea.vmem %s0, %s202
      $region36: #{uncertainty_encoder_forward.23} parent=31 // pred_fallthru
        _
    $region32: #{uncertainty_encoder_forward.23} parent=5 // pred_fallthru
      _
    %p204 = scmp.le.s32.totalorder 1, %s11
    %p205 = scmp.lt.s32.totalorder %s11, 3
    %p206 = pnand %p204, %p205
    %p207 = pneg %p206
    // Predicated region
    $region37: #{uncertainty_encoder_forward.23} parent=5 // pred_check
      _
    $region38: #{uncertainty_encoder_forward.23} parent=5 // pred_check_branch
      %209 = sbr.rel (%p206) target = $region40
    $region39: #{uncertainty_encoder_forward.23} parent=5 // pred_region
      %s210 = ssub.s32 %s11, 1
      %p211 = scmp.lt.s32.totalorder %s20, 1
      %s212 = scalar_select %p211, %s20, 1
      %p213 = scmp.lt.s32.totalorder %s21, 0
      %s214 = scalar_select %p213, %s21, 0
      %s215 = sadd.s32 %s214, %s212
      %s216 = smul.addr %s215, 8
      %s217 = scalar_lea.vmem %s0, %s216
      %p218 = pneg %p51
      %p219 = pneg %p48
      %p220 = pneg %p72
      %p221 = pneg %p69
      %p222 = pneg %p93
      %p223 = pneg %p90
      %p224 = pneg %p114
      %p225 = pneg %p111
      %p226 = pneg %p135
      %p227 = pneg %p132
      %p228 = pneg %p163
      %p229 = pneg %p160
      %p230 = scmp.lt.s32.totalorder %s20, 1
      %s231 = scalar_select %p230, %s20, 1
      %p232 = scmp.lt.s32.totalorder %s21, 0
      %s233 = scalar_select %p232, %s21, 0
      %s234 = sadd.s32 %s233, %s231
      %s235 = smul.addr %s234, 8
      %s236 = scalar_lea.vmem %s5, %s235
      %p237 = scmp.lt.s32.totalorder %s20, 1
      %s238 = scalar_select %p237, %s20, 1
      %p239 = scmp.lt.s32.totalorder %s21, 0
      %s240 = scalar_select %p239, %s21, 0
      %s241 = sadd.s32 %s240, %s238
      %s242 = smul.addr %s241, 8
      %s243 = scalar_lea.vmem %s0, %s242
      %p244 = scmp.lt.s32.totalorder %s20, 1
      %s245 = scalar_select %p244, %s20, 1
      %p246 = scmp.lt.s32.totalorder %s21, 0
      %s247 = scalar_select %p246, %s21, 0
      %s248 = sadd.s32 %s247, %s245
      %s249 = smul.addr %s248, 8
      %s250 = scalar_lea.vmem %s5, %s249
      %v251 = vld [vmem:[%s243] sm:$0xff]
      %v252 = vld [vmem:[%s1] sm:$0x1]
      %v253 = vld [vmem:[%s2] sm:$0x1]
      %vm254 = vcmask 261120
      %v255 = vsel %vm254, %v251, 0.0
      %256 = vadd.xlane.f32.xlu0 %v255
      %v257 = vpop.xlane.xlu0 %256
      %v258 = vrcp.pop 32.0
      %v259 = vmul.f32 32.0, %v258
      %v260 = vsub.f32 1.0, %v259
      %v261 = vmul.f32 %v258, %v260
      %v262 = vadd.f32 %v258, %v261
      %vm263 = vweird.f32 %v258
      %v264 = vsel %vm263, %v258, %v262
      %v265 = vmul.f32 %v257, %v264
      %v266 = vsub.f32 %v251, %v265
      %v267 = vmul.f32 %v266, %v266
      %v268 = vsel %vm254, %v267, 0.0
      %269 = vadd.xlane.f32.xlu0 %v268
      %v270 = vpop.xlane.xlu0 %269
      %v271 = vrcp.pop 31.0
      %v272 = vmul.f32 31.0, %v271
      %v273 = vsub.f32 1.0, %v272
      %v274 = vmul.f32 %v271, %v273
      %v275 = vadd.f32 %v271, %v274
      %vm276 = vweird.f32 %v271
      %v277 = vsel %vm276, %v271, %v275
      %v278 = vmul.f32 %v270, %v277
      %v279 = vrsqrt.pop %v278
      %v280 = vmul.f32 %v279, %v278
      %v281 = vmul.f32 %v280, %v279
      %v282 = vmul.f32 0.5, %v281
      %v283 = vsub.f32 1.5, %v282
      %v284 = vmul.f32 %v279, %v283
      %v285 = vmul.f32 %v278, %v284
      %vm286 = vcmp.eq.f32.partialorder %v278, inf
      %v287 = vsel %vm286, %v278, %v285
      %vm288 = vcmp.eq.f32.partialorder %v278, 0.0
      %v289 = vand.u32 %v278, 2147483648
      %v290 = vsel %vm288, %v289, %v287
      %v291 = vadd.f32 %v290, 1e-06
      %v292 = vrcp.pop %v291
      %v293 = vmul.f32 %v291, %v292
      %v294 = vsub.f32 1.0, %v293
      %v295 = vmul.f32 %v292, %v294
      %v296 = vadd.f32 %v292, %v295
      %vm297 = vweird.f32 %v291
      %vm298 = vweird.f32 %v292
      %vm299 = vmor %vm297, %vm298
      %v300 = vsel %vm299, %v292, %v296
      %v301 = vand.u32 2147483647, %v291
      %vm302 = vcmp.eq.f32.partialorder %v301, 8.507059e+37
      %v303 = vand.u32 %v291, 2147483648
      %v304 = vor.u32 1.1754944e-38, %v303
      %v305 = vsel %vm302, %v304, %v300
      %v306 = vmul.f32 %v266, %v305
      %v308 = vperm.slane %v252, 0
      %v310 = vmul.f32 %v308, %v306
      %v312 = vperm.slane %v253, 0
      %v314 = vadd.f32 %v310, %v312
      %v315 = vld [vmem:[%s3] sm:$0xff]
      %v316 = vld [vmem:[%s3 + $0x8] sm:$0xff]
      %v317 = vld [vmem:[%s3 + $0x10] sm:$0xff]
      %v318 = vld [vmem:[%s3 + $0x18] sm:$0xff]
      %v319 = vld [vmem:[%s4] sm:$0x1]
      %v321 = vperm.slane %v319, 0
      %v324 = vsel %vm254, %v314, 0
      %326 = vmatpush.msra.mxu0 0.0
      %327 = vmatpush.msra.mxu0 0.0
      %328 = vmatpush.msra.mxu0 0.0
      %329 = vmatpush.msra.mxu0 0.0
      %330 = vmatpush.msra.mxu0 0.0
      %331 = vmatpush.msra.mxu0 0.0
      %332 = vmatpush.msra.mxu0 0.0
      %333 = vmatpush.msra.mxu0 0.0
      %334 = vmatpush.msra.mxu0 0.0
      %335 = vmatpush.msra.mxu0 0.0
      %336 = vmatpush.msra.mxu0 0.0
      %337 = vmatpush.msra.mxu0 0.0
      %338 = vmatpush.msra.mxu0 %v318
      %339 = vmatpush.msra.mxu0 %v317
      %340 = vmatpush.msra.mxu0 %v316
      %341 = vmatpush.msra.mxu0 %v315
      %342 = vmatmul.f32.gmra.mxu0 %v324
      %v343 = vpop.f32.mrf.mxu0
      %v344 = vadd.f32 %v321, %v343
      %345 = vdwg.mxu0
      %vm346 = vcmask 15360
      %347 = vst.msk [vmem:[%s250] sm:$0xff] %vm346, %v344
      %p348 = scmp.lt.s32.totalorder %s20, 1
      %s349 = scalar_select %p348, %s20, 1
      %p350 = scmp.lt.s32.totalorder %s21, 0
      %s351 = scalar_select %p350, %s21, 0
      %s352 = sadd.s32 %s351, %s349
      %s353 = smul.addr %s352, 8
      %s354 = scalar_lea.vmem %s5, %s353
      // Predicated region
      $region41: #{uncertainty_encoder_forward.23} parent=39 // pred_check
        %p355 = pneg %p160
      $region42: #{uncertainty_encoder_forward.23} parent=39 // pred_check_branch
        %357 = sbr.rel (%p355) target = $region44
      $region43: #{uncertainty_encoder_forward.23} parent=39 // pred_region
        _
      $region44: #{uncertainty_encoder_forward.23} parent=39 // pred_fallthru
        _
    $region40: #{uncertainty_encoder_forward.23} parent=5 // pred_fallthru
      _
    %p358 = scmp.le.s32.totalorder 2, %s11
    // Predicated region
    $region45: #{uncertainty_encoder_forward.23} parent=5 // pred_check
      %p359 = pneg %p358
    $region46: #{uncertainty_encoder_forward.23} parent=5 // pred_check_branch
      %361 = sbr.rel (%p359) target = $region48
    $region47: #{uncertainty_encoder_forward.23} parent=5 // pred_region
      %s362 = ssub.s32 %s11, 2
      // Predicated region
      $region49: #{uncertainty_encoder_forward.23} parent=47 // pred_check
        %p363 = pneg %p166
      $region50: #{uncertainty_encoder_forward.23} parent=47 // pred_check_branch
        %365 = sbr.rel (%p363) target = $region52
      $region51: #{uncertainty_encoder_forward.23} parent=47 // pred_region
        %p366 = scmp.lt.s32.totalorder %s22, 1
        %s367 = scalar_select %p366, %s22, 1
        %p368 = scmp.lt.s32.totalorder %s23, 0
        %s369 = scalar_select %p368, %s23, 0
        %s370 = sadd.s32 %s369, %s367
        %s371 = smul.addr %s370, 8
        %s372 = scalar_lea.vmem %s5, %s371
      $region52: #{uncertainty_encoder_forward.23} parent=47 // pred_fallthru
        _
    $region48: #{uncertainty_encoder_forward.23} parent=5 // pred_fallthru
      _
  $region6: #{uncertainty_encoder_forward.23} parent=0 // loop_footer
    %s15 = sadd.s32 1, %s11
  $region7: #{uncertainty_encoder_forward.23} parent=0 // loop_footer_branch
    %10 = sbr.rel target = $region3
  $region8: #{uncertainty_encoder_forward.23} parent=0 // loop_exit
    _

</llo_original>
